<compile_context>
chip_gen: v5e
topology: v5e:2x2
jax: 0.10.0
libtpu: 0.0.40
codegen_flags: <defaults>
</compile_context>

<pallas_src>
import math
import numpy as np
import jax
import jax.numpy as jnp
from jax import lax
from jax.experimental import pallas as pl
from jax.experimental.pallas import tpu as pltpu

HIDDEN = 128      # 2 ** 7 in the torch module
HIDDEN_V = 128    # 2 ** 7 in the torch module
PAD = 128         # lane padding of the packed parameter slabs
NGATES = 4        # LSTM gates [i, f, g, o]


# ------------------------------ kernel -------------------------------------

def _make_kernel(B, h_dim, d, in_size, out_size, time_steps, M, permute,
                 widx, bidx):
    def kernel(act_ref, w_ref, b_ref, lstm_w_ref, lstm_b_ref, out_ref):
        sigmoid = jax.nn.sigmoid

        def lin(xv, name):
            # xv: (R, k) with k == true fan_in of layer `name`.
            k = xv.shape[-1]
            w = w_ref[widx[name], :k, :]                     # (k, 128)
            b = b_ref[bidx[name]]                            # (1, 128)
            return jnp.dot(xv, w, preferred_element_type=jnp.float32) + b

        x1 = act_ref[0]                                      # (B,128) valid [:in_size], pad 0
        x2 = act_ref[1]                                      # (B,128) valid [:out_size], pad 0
        vts = act_ref[2, :, :time_steps]                     # (B, time_steps)

        # ---- p_hat = tanh(p(vt.T)) ----
        h = sigmoid(lin(vts, 'p1'))
        h = sigmoid(lin(h, 'p2'))
        p_hat = jnp.tanh(lin(h, 'p3'))                       # (B,128), pad 0
        z1 = x1 + p_hat                                      # (B,128), pad 0
        z1s = z1[:, :in_size]                                # (B,in_size)

        # ---- LSTM over the B rows of z1 (unbatched sequence), fully unrolled ----
        # Wide, lane-aligned gate weights: gate g occupies lanes [g*128, g*128+in_size).
        Wih_w = lstm_w_ref[0]                                # (128, 512)
        Whh_w = lstm_w_ref[1]                                # (128, 512)
        b_w = lstm_b_ref[...]                                # (1, 512)  (bih + bhh)

        # Hoisted input projection for all rows / all gates (one matmul).
        G = jnp.dot(z1, Wih_w, preferred_element_type=jnp.float32) + b_w   # (B, 512)

        h_t = jnp.zeros((1, PAD), jnp.float32)
        c_t = jnp.zeros((1, PAD), jnp.float32)
        outs = []
        for t in range(B):
            gates = G[t:t + 1] + jnp.dot(h_t, Whh_w,
                                         preferred_element_type=jnp.float32)  # (1,512)
            i_g = sigmoid(gates[:, 0 * PAD:1 * PAD])
            f_g = sigmoid(gates[:, 1 * PAD:2 * PAD])
            g_g = jnp.tanh(gates[:, 2 * PAD:3 * PAD])
            o_g = sigmoid(gates[:, 3 * PAD:4 * PAD])
            c_t = f_g * c_t + i_g * g_g                      # pad stays 0
            h_t = o_g * jnp.tanh(c_t)                        # pad stays 0
            outs.append(h_t)
        lstm_out = jnp.concatenate(outs, axis=0)             # (B,128), pad 0

        # ---- fc_sig tail ----
        s = sigmoid(lstm_out)[:, :in_size]
        s = sigmoid(lin(s, 's1'))
        s = sigmoid(lin(s, 's2'))
        sig = lin(s, 's3')                                   # (B,128), pad 0

        # ---- fc_mu(z1) ----
        m = sigmoid(lin(z1s, 'mu1'))
        m = sigmoid(lin(m, 'mu2'))
        mu = lin(m, 'mu3')                                   # (B,128), pad 0

        # ---- f(nu(z1.T).T) ----   (requires B == M, as in the torch code)
        n = sigmoid(lin(z1s.T, 'nu1'))                       # (in_size,128)
        n = sigmoid(lin(n, 'nu2'))
        nuo = lin(n, 'nu3')                                  # (in_size,128), cols[M:) = 0
        nuoT = nuo[:, :M].T                                  # (B, in_size)
        ff = sigmoid(lin(nuoT, 'f1'))                        # (B,128)
        f_out = lin(ff, 'f2')                                # (B,128), pad 0

        # ---- affine coupling ----
        z2 = mu * f_out + x2 * jnp.exp(sig)                  # (B,128), pad 0

        z_left, z_right = (z2, z1) if permute else (z1, z2)  # left width d, right h_dim-d
        out_ref[0, :, :] = z_left
        out_ref[1, :, :] = z_right

        # ---- standard-normal log-prob and log|Jacobian| (pads are exact zeros) ----
        sumsq = jnp.sum(z_left * z_left + z_right * z_right, axis=1, keepdims=True)
        log_pz = -0.5 * sumsq - 0.5 * h_dim * math.log(2.0 * math.pi)
        log_jac = jnp.sum(sig, axis=1, keepdims=True)
        lane = lax.broadcasted_iota(jnp.int32, (B, PAD), 1)
        stats = jnp.where(lane == 0, log_pz, jnp.where(lane == 1, log_jac, 0.0))
        out_ref[2, :, :] = stats

    return kernel


# ------------------------------ wrapper ------------------------------------

def diffmap_forward(x, vt, packed, *, h_dim, time_steps, M, permute=False):
    """x: (B, h_dim), vt: (time_steps, M) with B == M.  `packed` from pack_params."""
    w_slab, b_slab, lstm_w, lstm_b, widx, bidx = packed
    B = x.shape[0]
    d = h_dim // 2
    in_size, out_size = d, h_dim - d
    if permute:
        in_size, out_size = out_size, in_size
    assert B == M, "the torch forward implicitly requires batch == M"
    assert max(in_size, out_size, time_steps, M) <= PAD

    x1 = x[:, :d]
    x2 = x[:, d:]
    if permute:
        x1, x2 = x2, x1

    # Pack the two activations into one zero-padded (3, B, 128) slab (one input DMA).
    act = jnp.zeros((3, B, PAD), jnp.float32)
    act = act.at[0, :, :in_size].set(x1)
    act = act.at[1, :, :out_size].set(x2)
    act = act.at[2, :, :time_steps].set(vt.T)          # mirrors torch `vt.T`

    kernel = _make_kernel(B, h_dim, d, in_size, out_size, time_steps, M,
                          permute, widx, bidx)
    vmem = pl.BlockSpec(memory_space=pltpu.MemorySpace.VMEM)
    out = pl.pallas_call(
        kernel,
        out_shape=jax.ShapeDtypeStruct((3, B, PAD), jnp.float32),
        in_specs=[vmem, vmem, vmem, vmem, vmem],
        out_specs=vmem,
    )(act, w_slab, b_slab, lstm_w, lstm_b)

    z = jnp.concatenate([out[0, :, :d], out[1, :, :h_dim - d]], axis=1)
    log_pz = out[2, :, 0]
    log_jacob = out[2, :, 1]
    return z, log_pz, log_jacob


# --------------------------- parameter packing ------------------------------

def pack_params(params):
    """Pack raw params into padded slabs + static index maps (done once)."""
    (pW1, pb1, pW2, pb2, pW3, pb3,
     muW1, mub1, muW2, mub2, muW3, mub3,
     nuW1, nub1, nuW2, nub2, nuW3, nub3,
     fW1, fb1, fW2, fb2,
     Wih, Whh, bih, bhh,
     sW1, sb1, sW2, sb2, sW3, sb3) = params
    in_size = int(Wih.shape[0])

    weights, biases, widx, bidx = [], [], {}, {}

    def pad_w(w):
        w = np.asarray(w, np.float32)
        out = np.zeros((PAD, PAD), np.float32)
        out[:w.shape[0], :w.shape[1]] = w
        return out

    def pad_b(b):
        b = np.asarray(b, np.float32).reshape(-1)
        out = np.zeros((1, PAD), np.float32)
        out[0, :b.shape[0]] = b
        return out

    def add(name, w, b):
        widx[name] = len(weights); weights.append(pad_w(w))
        bidx[name] = len(biases);  biases.append(pad_b(b))

    add('p1', pW1, pb1);   add('p2', pW2, pb2);   add('p3', pW3, pb3)
    add('mu1', muW1, mub1); add('mu2', muW2, mub2); add('mu3', muW3, mub3)
    add('nu1', nuW1, nub1); add('nu2', nuW2, nub2); add('nu3', nuW3, nub3)
    add('f1', fW1, fb1);   add('f2', fW2, fb2)
    add('s1', sW1, sb1);   add('s2', sW2, sb2);   add('s3', sW3, sb3)

    # LSTM: wide lane-aligned gate layout (PyTorch order [i, f, g, o]).
    # Gate g lives at lanes [g*128, g*128+in_size); rows >= in_size are zero.
    Wih_n = np.asarray(Wih, np.float32)
    Whh_n = np.asarray(Whh, np.float32)
    bih_n = np.asarray(bih, np.float32).reshape(-1)
    bhh_n = np.asarray(bhh, np.float32).reshape(-1)
    Wih_wide = np.zeros((PAD, NGATES * PAD), np.float32)
    Whh_wide = np.zeros((PAD, NGATES * PAD), np.float32)
    b_wide = np.zeros((1, NGATES * PAD), np.float32)
    for g in range(NGATES):
        src = slice(g * in_size, (g + 1) * in_size)
        dst = slice(g * PAD, g * PAD + in_size)
        Wih_wide[:in_size, dst] = Wih_n[:, src]
        Whh_wide[:in_size, dst] = Whh_n[:, src]
        b_wide[0, dst] = bih_n[src] + bhh_n[src]

    w_slab = jnp.asarray(np.stack(weights, axis=0))            # (NW, 128, 128)
    b_slab = jnp.asarray(np.stack(biases, axis=0))             # (NB, 1, 128)
    lstm_w = jnp.asarray(np.stack([Wih_wide, Whh_wide], 0))    # (2, 128, 512)
    lstm_b = jnp.asarray(b_wide)                               # (1, 512)
    return w_slab, b_slab, lstm_w, lstm_b, widx, bidx


# ----------------------------- parameter init -------------------------------

def _init_linear(key, fan_in, fan_out):
    k1, k2 = jax.random.split(key)
    bound = 1.0 / np.sqrt(fan_in)
    W = jax.random.uniform(k1, (fan_in, fan_out), jnp.float32, -bound, bound)
    b = jax.random.uniform(k2, (1, fan_out), jnp.float32, -bound, bound)
    return W, b


def make_params(key, *, h_dim, time_steps, M, permute=False):
    d = h_dim // 2
    in_size, out_size = d, h_dim - d
    if permute:
        in_size, out_size = out_size, in_size
    keys = jax.random.split(key, 20)
    ki = iter(keys)

    pW1, pb1 = _init_linear(next(ki), time_steps, HIDDEN)
    pW2, pb2 = _init_linear(next(ki), HIDDEN, HIDDEN)
    pW3, pb3 = _init_linear(next(ki), HIDDEN, in_size)
    muW1, mub1 = _init_linear(next(ki), in_size, HIDDEN)
    muW2, mub2 = _init_linear(next(ki), HIDDEN, HIDDEN)
    muW3, mub3 = _init_linear(next(ki), HIDDEN, out_size)
    nuW1, nub1 = _init_linear(next(ki), M, HIDDEN_V)
    nuW2, nub2 = _init_linear(next(ki), HIDDEN_V, HIDDEN_V)
    nuW3, nub3 = _init_linear(next(ki), HIDDEN_V, M)
    fW1, fb1 = _init_linear(next(ki), in_size, HIDDEN_V)
    fW2, fb2 = _init_linear(next(ki), HIDDEN_V, out_size)
    bound = 1.0 / np.sqrt(in_size)
    k1, k2, k3, k4 = jax.random.split(next(ki), 4)
    Wih = jax.random.uniform(k1, (in_size, 4 * in_size), jnp.float32, -bound, bound)
    Whh = jax.random.uniform(k2, (in_size, 4 * in_size), jnp.float32, -bound, bound)
    bih = jax.random.uniform(k3, (1, 4 * in_size), jnp.float32, -bound, bound)
    bhh = jax.random.uniform(k4, (1, 4 * in_size), jnp.float32, -bound, bound)
    sW1, sb1 = _init_linear(next(ki), in_size, HIDDEN)
    sW2, sb2 = _init_linear(next(ki), HIDDEN, HIDDEN)
    sW3, sb3 = _init_linear(next(ki), HIDDEN, out_size)

    return [pW1, pb1, pW2, pb2, pW3, pb3,
            muW1, mub1, muW2, mub2, muW3, mub3,
            nuW1, nub1, nuW2, nub2, nuW3, nub3,
            fW1, fb1, fW2, fb2,
            Wih, Whh, bih, bhh,
            sW1, sb1, sW2, sb2, sW3, sb3]


# ------------------------- pure-JAX reference (check) ----------------------

def reference_forward(x, vt, params, *, h_dim, permute=False):
    (pW1, pb1, pW2, pb2, pW3, pb3,
     muW1, mub1, muW2, mub2, muW3, mub3,
     nuW1, nub1, nuW2, nub2, nuW3, nub3,
     fW1, fb1, fW2, fb2,
     Wih, Whh, bih, bhh,
     sW1, sb1, sW2, sb2, sW3, sb3) = params
    d = h_dim // 2
    in_size = Wih.shape[0]
    x1, x2 = x[:, :d], x[:, d:]
    if permute:
        x1, x2 = x2, x1
    vtT = vt.T
    h = jax.nn.sigmoid(vtT @ pW1 + pb1)
    h = jax.nn.sigmoid(h @ pW2 + pb2)
    p_hat = jnp.tanh(h @ pW3 + pb3)
    z1 = x1 + p_hat

    def lstm_step(carry, xt):
        h_t, c_t = carry
        g = xt @ Wih + bih[0] + h_t @ Whh + bhh[0]
        i_g = jax.nn.sigmoid(g[0 * in_size:1 * in_size])
        f_g = jax.nn.sigmoid(g[1 * in_size:2 * in_size])
        g_g = jnp.tanh(g[2 * in_size:3 * in_size])
        o_g = jax.nn.sigmoid(g[3 * in_size:4 * in_size])
        c_new = f_g * c_t + i_g * g_g
        h_new = o_g * jnp.tanh(c_new)
        return (h_new, c_new), h_new

    init = (jnp.zeros((in_size,), jnp.float32), jnp.zeros((in_size,), jnp.float32))
    _, lstm_out = lax.scan(lstm_step, init, z1)

    s = jax.nn.sigmoid(lstm_out)
    s = jax.nn.sigmoid(s @ sW1 + sb1)
    s = jax.nn.sigmoid(s @ sW2 + sb2)
    sig = s @ sW3 + sb3

    m = jax.nn.sigmoid(z1 @ muW1 + mub1)
    m = jax.nn.sigmoid(m @ muW2 + mub2)
    mu = m @ muW3 + mub3

    n = jax.nn.sigmoid(z1.T @ nuW1 + nub1)
    n = jax.nn.sigmoid(n @ nuW2 + nub2)
    nuo = (n @ nuW3 + nub3).T
    ff = jax.nn.sigmoid(nuo @ fW1 + fb1)
    f_out = ff @ fW2 + fb2

    z2 = mu * f_out + x2 * jnp.exp(sig)
    if permute:
        z2, z1 = z1, z2
    z = jnp.concatenate([z1, z2], axis=1)
    log_pz = -0.5 * jnp.sum(z * z, axis=1) - 0.5 * h_dim * jnp.log(2.0 * jnp.pi)
    log_jacob = jnp.sum(sig, axis=1)
    return z, log_pz, log_jacob


if __name__ == "__main__":
    # Small shapes consistent with the module: batch == M (latent dim).
    h_dim = 16
    M = 8            # latent dim == batch size (forced by z1.T feeding nu)
    B = M
    time_steps = 8
    dt = 0.1         # unused in forward

    key = jax.random.PRNGKey(0)
    kx, kv, kp = jax.random.split(key, 3)
    x = jax.random.normal(kx, (B, h_dim), jnp.float32)
    vt = jax.random.normal(kv, (time_steps, M), jnp.float32)

    for permute in (False, True):
        params = make_params(kp, h_dim=h_dim, time_steps=time_steps, M=M,
                             permute=permute)
        packed = pack_params(params)

        z, log_pz, log_jacob = diffmap_forward(
            x, vt, packed, h_dim=h_dim, time_steps=time_steps, M=M,
            permute=permute)
        jax.block_until_ready((z, log_pz, log_jacob))

        z_r, log_pz_r, log_jacob_r = reference_forward(
            x, vt, params, h_dim=h_dim, permute=permute)

        np.testing.assert_allclose(np.asarray(z), np.asarray(z_r),
                                   rtol=1e-3, atol=1e-3)
        np.testing.assert_allclose(np.asarray(log_pz), np.asarray(log_pz_r),
                                   rtol=1e-3, atol=1e-3)
        np.testing.assert_allclose(np.asarray(log_jacob), np.asarray(log_jacob_r),
                                   rtol=1e-3, atol=1e-3)

    print("KERNEL_OK")
</pallas_src>

<mosaic_0001>
module attributes {stable_mosaic.version = 11 : i64} {
  func.func @kernel(%arg0: memref<3x8x128xf32, #tpu.memory_space<vmem>>, %arg1: memref<14x128x128xf32, #tpu.memory_space<vmem>>, %arg2: memref<14x1x128xf32, #tpu.memory_space<vmem>>, %arg3: memref<2x128x512xf32, #tpu.memory_space<vmem>>, %arg4: memref<1x512xf32, #tpu.memory_space<vmem>>, %arg5: memref<3x8x128xf32, #tpu.memory_space<vmem>>) attributes {dimension_semantics = [], scalar_prefetch = 0 : i64, scratch_operands = 0 : i64, tpu.core_type = #tpu.core_type<tc>} {
    %c0 = arith.constant 0 : index
    %c0_0 = arith.constant 0 : index
    %c0_1 = arith.constant 0 : index
    %0 = vector.load %arg0[%c0, %c0_0, %c0_1] : memref<3x8x128xf32, #tpu.memory_space<vmem>>, vector<1x8x128xf32>
    %1 = vector.shape_cast %0 : vector<1x8x128xf32> to vector<8x128xf32>
    %c1 = arith.constant 1 : index
    %c0_2 = arith.constant 0 : index
    %c0_3 = arith.constant 0 : index
    %2 = vector.load %arg0[%c1, %c0_2, %c0_3] : memref<3x8x128xf32, #tpu.memory_space<vmem>>, vector<1x8x128xf32>
    %3 = vector.shape_cast %2 : vector<1x8x128xf32> to vector<8x128xf32>
    %c2 = arith.constant 2 : index
    %c0_4 = arith.constant 0 : index
    %c0_5 = arith.constant 0 : index
    %4 = vector.load %arg0[%c2, %c0_4, %c0_5] : memref<3x8x128xf32, #tpu.memory_space<vmem>>, vector<1x8x8xf32>
    %5 = vector.shape_cast %4 : vector<1x8x8xf32> to vector<8x8xf32>
    %c0_6 = arith.constant 0 : index
    %c0_7 = arith.constant 0 : index
    %c0_8 = arith.constant 0 : index
    %6 = vector.load %arg1[%c0_6, %c0_7, %c0_8] : memref<14x128x128xf32, #tpu.memory_space<vmem>>, vector<1x8x128xf32>
    %7 = vector.shape_cast %6 : vector<1x8x128xf32> to vector<8x128xf32>
    %c0_9 = arith.constant 0 : index
    %c0_10 = arith.constant 0 : index
    %c0_11 = arith.constant 0 : index
    %8 = vector.load %arg2[%c0_9, %c0_10, %c0_11] : memref<14x1x128xf32, #tpu.memory_space<vmem>>, vector<1x1x128xf32>
    %9 = vector.shape_cast %8 : vector<1x1x128xf32> to vector<1x128xf32>
    %cst = arith.constant dense<0.000000e+00> : vector<8x128xf32>
    %10 = tpu.matmul %5, %7, %cst {dimension_numbers = #tpu.dot_dimension_numbers<[1], [0], [0], [1], [0, 0, 1, 1], [], []>} : vector<8x8xf32>, vector<8x128xf32>, vector<8x128xf32> -> vector<8x128xf32>
    %11 = vector.broadcast %9 : vector<1x128xf32> to vector<8x128xf32>
    %12 = arith.addf %10, %11 : vector<8x128xf32>
    %13 = arith.negf %12 : vector<8x128xf32>
    %14 = math.exp %13 : vector<8x128xf32>
    %cst_12 = arith.constant 1.000000e+00 : f32
    %15 = vector.broadcast %cst_12 : f32 to vector<8x128xf32>
    %16 = arith.addf %15, %14 : vector<8x128xf32>
    %17 = arith.divf %15, %16 : vector<8x128xf32>
    %c1_13 = arith.constant 1 : index
    %c0_14 = arith.constant 0 : index
    %c0_15 = arith.constant 0 : index
    %18 = vector.load %arg1[%c1_13, %c0_14, %c0_15] : memref<14x128x128xf32, #tpu.memory_space<vmem>>, vector<1x128x128xf32>
    %19 = vector.shape_cast %18 : vector<1x128x128xf32> to vector<128x128xf32>
    %c1_16 = arith.constant 1 : index
    %c0_17 = arith.constant 0 : index
    %c0_18 = arith.constant 0 : index
    %20 = vector.load %arg2[%c1_16, %c0_17, %c0_18] : memref<14x1x128xf32, #tpu.memory_space<vmem>>, vector<1x1x128xf32>
    %21 = vector.shape_cast %20 : vector<1x1x128xf32> to vector<1x128xf32>
    %cst_19 = arith.constant dense<0.000000e+00> : vector<8x128xf32>
    %22 = tpu.matmul %17, %19, %cst_19 {dimension_numbers = #tpu.dot_dimension_numbers<[1], [0], [0], [1], [0, 0, 1, 1], [], []>} : vector<8x128xf32>, vector<128x128xf32>, vector<8x128xf32> -> vector<8x128xf32>
    %23 = vector.broadcast %21 : vector<1x128xf32> to vector<8x128xf32>
    %24 = arith.addf %22, %23 : vector<8x128xf32>
    %25 = arith.negf %24 : vector<8x128xf32>
    %26 = math.exp %25 : vector<8x128xf32>
    %cst_20 = arith.constant 1.000000e+00 : f32
    %27 = vector.broadcast %cst_20 : f32 to vector<8x128xf32>
    %28 = arith.addf %27, %26 : vector<8x128xf32>
    %29 = arith.divf %27, %28 : vector<8x128xf32>
    %c2_21 = arith.constant 2 : index
    %c0_22 = arith.constant 0 : index
    %c0_23 = arith.constant 0 : index
    %30 = vector.load %arg1[%c2_21, %c0_22, %c0_23] : memref<14x128x128xf32, #tpu.memory_space<vmem>>, vector<1x128x128xf32>
    %31 = vector.shape_cast %30 : vector<1x128x128xf32> to vector<128x128xf32>
    %c2_24 = arith.constant 2 : index
    %c0_25 = arith.constant 0 : index
    %c0_26 = arith.constant 0 : index
    %32 = vector.load %arg2[%c2_24, %c0_25, %c0_26] : memref<14x1x128xf32, #tpu.memory_space<vmem>>, vector<1x1x128xf32>
    %33 = vector.shape_cast %32 : vector<1x1x128xf32> to vector<1x128xf32>
    %cst_27 = arith.constant dense<0.000000e+00> : vector<8x128xf32>
    %34 = tpu.matmul %29, %31, %cst_27 {dimension_numbers = #tpu.dot_dimension_numbers<[1], [0], [0], [1], [0, 0, 1, 1], [], []>} : vector<8x128xf32>, vector<128x128xf32>, vector<8x128xf32> -> vector<8x128xf32>
    %35 = vector.broadcast %33 : vector<1x128xf32> to vector<8x128xf32>
    %36 = arith.addf %34, %35 : vector<8x128xf32>
    %37 = math.tanh %36 : vector<8x128xf32>
    %38 = arith.addf %1, %37 : vector<8x128xf32>
    %39 = vector.extract_strided_slice %38 {offsets = [0, 0], sizes = [8, 8], strides = [1, 1]} : vector<8x128xf32> to vector<8x8xf32>
    %c0_28 = arith.constant 0 : index
    %c0_29 = arith.constant 0 : index
    %c0_30 = arith.constant 0 : index
    %40 = vector.load %arg3[%c0_28, %c0_29, %c0_30] : memref<2x128x512xf32, #tpu.memory_space<vmem>>, vector<1x128x512xf32>
    %41 = vector.shape_cast %40 : vector<1x128x512xf32> to vector<128x512xf32>
    %c1_31 = arith.constant 1 : index
    %c0_32 = arith.constant 0 : index
    %c0_33 = arith.constant 0 : index
    %42 = vector.load %arg3[%c1_31, %c0_32, %c0_33] : memref<2x128x512xf32, #tpu.memory_space<vmem>>, vector<1x128x512xf32>
    %43 = vector.shape_cast %42 : vector<1x128x512xf32> to vector<128x512xf32>
    %c0_34 = arith.constant 0 : index
    %c0_35 = arith.constant 0 : index
    %44 = vector.load %arg4[%c0_34, %c0_35] : memref<1x512xf32, #tpu.memory_space<vmem>>, vector<1x512xf32>
    %cst_36 = arith.constant dense<0.000000e+00> : vector<8x512xf32>
    %45 = tpu.matmul %38, %41, %cst_36 {dimension_numbers = #tpu.dot_dimension_numbers<[1], [0], [0], [1], [0, 0, 1, 1], [], []>} : vector<8x128xf32>, vector<128x512xf32>, vector<8x512xf32> -> vector<8x512xf32>
    %46 = vector.broadcast %44 : vector<1x512xf32> to vector<8x512xf32>
    %47 = arith.addf %45, %46 : vector<8x512xf32>
    %cst_37 = arith.constant 0.000000e+00 : f32
    %48 = vector.broadcast %cst_37 : f32 to vector<1x128xf32>
    %cst_38 = arith.constant 0.000000e+00 : f32
    %49 = vector.broadcast %cst_38 : f32 to vector<1x128xf32>
    %50 = vector.extract_strided_slice %47 {offsets = [0, 0], sizes = [1, 512], strides = [1, 1]} : vector<8x512xf32> to vector<1x512xf32>
    %cst_39 = arith.constant dense<0.000000e+00> : vector<1x512xf32>
    %51 = tpu.matmul %48, %43, %cst_39 {dimension_numbers = #tpu.dot_dimension_numbers<[1], [0], [0], [1], [0, 0, 1, 1], [], []>} : vector<1x128xf32>, vector<128x512xf32>, vector<1x512xf32> -> vector<1x512xf32>
    %52 = arith.addf %50, %51 : vector<1x512xf32>
    %53 = vector.extract_strided_slice %52 {offsets = [0, 0], sizes = [1, 128], strides = [1, 1]} : vector<1x512xf32> to vector<1x128xf32>
    %54 = arith.negf %53 : vector<1x128xf32>
    %55 = math.exp %54 : vector<1x128xf32>
    %cst_40 = arith.constant 1.000000e+00 : f32
    %56 = vector.broadcast %cst_40 : f32 to vector<1x128xf32>
    %57 = arith.addf %56, %55 : vector<1x128xf32>
    %58 = arith.divf %56, %57 : vector<1x128xf32>
    %59 = vector.extract_strided_slice %52 {offsets = [0, 128], sizes = [1, 128], strides = [1, 1]} : vector<1x512xf32> to vector<1x128xf32>
    %60 = arith.negf %59 : vector<1x128xf32>
    %61 = math.exp %60 : vector<1x128xf32>
    %cst_41 = arith.constant 1.000000e+00 : f32
    %62 = vector.broadcast %cst_41 : f32 to vector<1x128xf32>
    %63 = arith.addf %62, %61 : vector<1x128xf32>
    %64 = arith.divf %62, %63 : vector<1x128xf32>
    %65 = vector.extract_strided_slice %52 {offsets = [0, 256], sizes = [1, 128], strides = [1, 1]} : vector<1x512xf32> to vector<1x128xf32>
    %66 = math.tanh %65 : vector<1x128xf32>
    %67 = vector.extract_strided_slice %52 {offsets = [0, 384], sizes = [1, 128], strides = [1, 1]} : vector<1x512xf32> to vector<1x128xf32>
    %68 = arith.negf %67 : vector<1x128xf32>
    %69 = math.exp %68 : vector<1x128xf32>
    %cst_42 = arith.constant 1.000000e+00 : f32
    %70 = vector.broadcast %cst_42 : f32 to vector<1x128xf32>
    %71 = arith.addf %70, %69 : vector<1x128xf32>
    %72 = arith.divf %70, %71 : vector<1x128xf32>
    %73 = arith.mulf %64, %49 : vector<1x128xf32>
    %74 = arith.mulf %58, %66 : vector<1x128xf32>
    %75 = arith.addf %73, %74 : vector<1x128xf32>
    %76 = math.tanh %75 : vector<1x128xf32>
    %77 = arith.mulf %72, %76 : vector<1x128xf32>
    %78 = vector.extract_strided_slice %47 {offsets = [1, 0], sizes = [1, 512], strides = [1, 1]} : vector<8x512xf32> to vector<1x512xf32>
    %cst_43 = arith.constant dense<0.000000e+00> : vector<1x512xf32>
    %79 = tpu.matmul %77, %43, %cst_43 {dimension_numbers = #tpu.dot_dimension_numbers<[1], [0], [0], [1], [0, 0, 1, 1], [], []>} : vector<1x128xf32>, vector<128x512xf32>, vector<1x512xf32> -> vector<1x512xf32>
    %80 = arith.addf %78, %79 : vector<1x512xf32>
    %81 = vector.extract_strided_slice %80 {offsets = [0, 0], sizes = [1, 128], strides = [1, 1]} : vector<1x512xf32> to vector<1x128xf32>
    %82 = arith.negf %81 : vector<1x128xf32>
    %83 = math.exp %82 : vector<1x128xf32>
    %cst_44 = arith.constant 1.000000e+00 : f32
    %84 = vector.broadcast %cst_44 : f32 to vector<1x128xf32>
    %85 = arith.addf %84, %83 : vector<1x128xf32>
    %86 = arith.divf %84, %85 : vector<1x128xf32>
    %87 = vector.extract_strided_slice %80 {offsets = [0, 128], sizes = [1, 128], strides = [1, 1]} : vector<1x512xf32> to vector<1x128xf32>
    %88 = arith.negf %87 : vector<1x128xf32>
    %89 = math.exp %88 : vector<1x128xf32>
    %cst_45 = arith.constant 1.000000e+00 : f32
    %90 = vector.broadcast %cst_45 : f32 to vector<1x128xf32>
    %91 = arith.addf %90, %89 : vector<1x128xf32>
    %92 = arith.divf %90, %91 : vector<1x128xf32>
    %93 = vector.extract_strided_slice %80 {offsets = [0, 256], sizes = [1, 128], strides = [1, 1]} : vector<1x512xf32> to vector<1x128xf32>
    %94 = math.tanh %93 : vector<1x128xf32>
    %95 = vector.extract_strided_slice %80 {offsets = [0, 384], sizes = [1, 128], strides = [1, 1]} : vector<1x512xf32> to vector<1x128xf32>
    %96 = arith.negf %95 : vector<1x128xf32>
    %97 = math.exp %96 : vector<1x128xf32>
    %cst_46 = arith.constant 1.000000e+00 : f32
    %98 = vector.broadcast %cst_46 : f32 to vector<1x128xf32>
    %99 = arith.addf %98, %97 : vector<1x128xf32>
    %100 = arith.divf %98, %99 : vector<1x128xf32>
    %101 = arith.mulf %92, %75 : vector<1x128xf32>
    %102 = arith.mulf %86, %94 : vector<1x128xf32>
    %103 = arith.addf %101, %102 : vector<1x128xf32>
    %104 = math.tanh %103 : vector<1x128xf32>
    %105 = arith.mulf %100, %104 : vector<1x128xf32>
    %106 = vector.extract_strided_slice %47 {offsets = [2, 0], sizes = [1, 512], strides = [1, 1]} : vector<8x512xf32> to vector<1x512xf32>
    %cst_47 = arith.constant dense<0.000000e+00> : vector<1x512xf32>
    %107 = tpu.matmul %105, %43, %cst_47 {dimension_numbers = #tpu.dot_dimension_numbers<[1], [0], [0], [1], [0, 0, 1, 1], [], []>} : vector<1x128xf32>, vector<128x512xf32>, vector<1x512xf32> -> vector<1x512xf32>
    %108 = arith.addf %106, %107 : vector<1x512xf32>
    %109 = vector.extract_strided_slice %108 {offsets = [0, 0], sizes = [1, 128], strides = [1, 1]} : vector<1x512xf32> to vector<1x128xf32>
    %110 = arith.negf %109 : vector<1x128xf32>
    %111 = math.exp %110 : vector<1x128xf32>
    %cst_48 = arith.constant 1.000000e+00 : f32
    %112 = vector.broadcast %cst_48 : f32 to vector<1x128xf32>
    %113 = arith.addf %112, %111 : vector<1x128xf32>
    %114 = arith.divf %112, %113 : vector<1x128xf32>
    %115 = vector.extract_strided_slice %108 {offsets = [0, 128], sizes = [1, 128], strides = [1, 1]} : vector<1x512xf32> to vector<1x128xf32>
    %116 = arith.negf %115 : vector<1x128xf32>
    %117 = math.exp %116 : vector<1x128xf32>
    %cst_49 = arith.constant 1.000000e+00 : f32
    %118 = vector.broadcast %cst_49 : f32 to vector<1x128xf32>
    %119 = arith.addf %118, %117 : vector<1x128xf32>
    %120 = arith.divf %118, %119 : vector<1x128xf32>
    %121 = vector.extract_strided_slice %108 {offsets = [0, 256], sizes = [1, 128], strides = [1, 1]} : vector<1x512xf32> to vector<1x128xf32>
    %122 = math.tanh %121 : vector<1x128xf32>
    %123 = vector.extract_strided_slice %108 {offsets = [0, 384], sizes = [1, 128], strides = [1, 1]} : vector<1x512xf32> to vector<1x128xf32>
    %124 = arith.negf %123 : vector<1x128xf32>
    %125 = math.exp %124 : vector<1x128xf32>
    %cst_50 = arith.constant 1.000000e+00 : f32
    %126 = vector.broadcast %cst_50 : f32 to vector<1x128xf32>
    %127 = arith.addf %126, %125 : vector<1x128xf32>
    %128 = arith.divf %126, %127 : vector<1x128xf32>
    %129 = arith.mulf %120, %103 : vector<1x128xf32>
    %130 = arith.mulf %114, %122 : vector<1x128xf32>
    %131 = arith.addf %129, %130 : vector<1x128xf32>
    %132 = math.tanh %131 : vector<1x128xf32>
    %133 = arith.mulf %128, %132 : vector<1x128xf32>
    %134 = vector.extract_strided_slice %47 {offsets = [3, 0], sizes = [1, 512], strides = [1, 1]} : vector<8x512xf32> to vector<1x512xf32>
    %cst_51 = arith.constant dense<0.000000e+00> : vector<1x512xf32>
    %135 = tpu.matmul %133, %43, %cst_51 {dimension_numbers = #tpu.dot_dimension_numbers<[1], [0], [0], [1], [0, 0, 1, 1], [], []>} : vector<1x128xf32>, vector<128x512xf32>, vector<1x512xf32> -> vector<1x512xf32>
    %136 = arith.addf %134, %135 : vector<1x512xf32>
    %137 = vector.extract_strided_slice %136 {offsets = [0, 0], sizes = [1, 128], strides = [1, 1]} : vector<1x512xf32> to vector<1x128xf32>
    %138 = arith.negf %137 : vector<1x128xf32>
    %139 = math.exp %138 : vector<1x128xf32>
    %cst_52 = arith.constant 1.000000e+00 : f32
    %140 = vector.broadcast %cst_52 : f32 to vector<1x128xf32>
    %141 = arith.addf %140, %139 : vector<1x128xf32>
    %142 = arith.divf %140, %141 : vector<1x128xf32>
    %143 = vector.extract_strided_slice %136 {offsets = [0, 128], sizes = [1, 128], strides = [1, 1]} : vector<1x512xf32> to vector<1x128xf32>
    %144 = arith.negf %143 : vector<1x128xf32>
    %145 = math.exp %144 : vector<1x128xf32>
    %cst_53 = arith.constant 1.000000e+00 : f32
    %146 = vector.broadcast %cst_53 : f32 to vector<1x128xf32>
    %147 = arith.addf %146, %145 : vector<1x128xf32>
    %148 = arith.divf %146, %147 : vector<1x128xf32>
    %149 = vector.extract_strided_slice %136 {offsets = [0, 256], sizes = [1, 128], strides = [1, 1]} : vector<1x512xf32> to vector<1x128xf32>
    %150 = math.tanh %149 : vector<1x128xf32>
    %151 = vector.extract_strided_slice %136 {offsets = [0, 384], sizes = [1, 128], strides = [1, 1]} : vector<1x512xf32> to vector<1x128xf32>
    %152 = arith.negf %151 : vector<1x128xf32>
    %153 = math.exp %152 : vector<1x128xf32>
    %cst_54 = arith.constant 1.000000e+00 : f32
    %154 = vector.broadcast %cst_54 : f32 to vector<1x128xf32>
    %155 = arith.addf %154, %153 : vector<1x128xf32>
    %156 = arith.divf %154, %155 : vector<1x128xf32>
    %157 = arith.mulf %148, %131 : vector<1x128xf32>
    %158 = arith.mulf %142, %150 : vector<1x128xf32>
    %159 = arith.addf %157, %158 : vector<1x128xf32>
    %160 = math.tanh %159 : vector<1x128xf32>
    %161 = arith.mulf %156, %160 : vector<1x128xf32>
    %162 = vector.extract_strided_slice %47 {offsets = [4, 0], sizes = [1, 512], strides = [1, 1]} : vector<8x512xf32> to vector<1x512xf32>
    %cst_55 = arith.constant dense<0.000000e+00> : vector<1x512xf32>
    %163 = tpu.matmul %161, %43, %cst_55 {dimension_numbers = #tpu.dot_dimension_numbers<[1], [0], [0], [1], [0, 0, 1, 1], [], []>} : vector<1x128xf32>, vector<128x512xf32>, vector<1x512xf32> -> vector<1x512xf32>
    %164 = arith.addf %162, %163 : vector<1x512xf32>
    %165 = vector.extract_strided_slice %164 {offsets = [0, 0], sizes = [1, 128], strides = [1, 1]} : vector<1x512xf32> to vector<1x128xf32>
    %166 = arith.negf %165 : vector<1x128xf32>
    %167 = math.exp %166 : vector<1x128xf32>
    %cst_56 = arith.constant 1.000000e+00 : f32
    %168 = vector.broadcast %cst_56 : f32 to vector<1x128xf32>
    %169 = arith.addf %168, %167 : vector<1x128xf32>
    %170 = arith.divf %168, %169 : vector<1x128xf32>
    %171 = vector.extract_strided_slice %164 {offsets = [0, 128], sizes = [1, 128], strides = [1, 1]} : vector<1x512xf32> to vector<1x128xf32>
    %172 = arith.negf %171 : vector<1x128xf32>
    %173 = math.exp %172 : vector<1x128xf32>
    %cst_57 = arith.constant 1.000000e+00 : f32
    %174 = vector.broadcast %cst_57 : f32 to vector<1x128xf32>
    %175 = arith.addf %174, %173 : vector<1x128xf32>
    %176 = arith.divf %174, %175 : vector<1x128xf32>
    %177 = vector.extract_strided_slice %164 {offsets = [0, 256], sizes = [1, 128], strides = [1, 1]} : vector<1x512xf32> to vector<1x128xf32>
    %178 = math.tanh %177 : vector<1x128xf32>
    %179 = vector.extract_strided_slice %164 {offsets = [0, 384], sizes = [1, 128], strides = [1, 1]} : vector<1x512xf32> to vector<1x128xf32>
    %180 = arith.negf %179 : vector<1x128xf32>
    %181 = math.exp %180 : vector<1x128xf32>
    %cst_58 = arith.constant 1.000000e+00 : f32
    %182 = vector.broadcast %cst_58 : f32 to vector<1x128xf32>
    %183 = arith.addf %182, %181 : vector<1x128xf32>
    %184 = arith.divf %182, %183 : vector<1x128xf32>
    %185 = arith.mulf %176, %159 : vector<1x128xf32>
    %186 = arith.mulf %170, %178 : vector<1x128xf32>
    %187 = arith.addf %185, %186 : vector<1x128xf32>
    %188 = math.tanh %187 : vector<1x128xf32>
    %189 = arith.mulf %184, %188 : vector<1x128xf32>
    %190 = vector.extract_strided_slice %47 {offsets = [5, 0], sizes = [1, 512], strides = [1, 1]} : vector<8x512xf32> to vector<1x512xf32>
    %cst_59 = arith.constant dense<0.000000e+00> : vector<1x512xf32>
    %191 = tpu.matmul %189, %43, %cst_59 {dimension_numbers = #tpu.dot_dimension_numbers<[1], [0], [0], [1], [0, 0, 1, 1], [], []>} : vector<1x128xf32>, vector<128x512xf32>, vector<1x512xf32> -> vector<1x512xf32>
    %192 = arith.addf %190, %191 : vector<1x512xf32>
    %193 = vector.extract_strided_slice %192 {offsets = [0, 0], sizes = [1, 128], strides = [1, 1]} : vector<1x512xf32> to vector<1x128xf32>
    %194 = arith.negf %193 : vector<1x128xf32>
    %195 = math.exp %194 : vector<1x128xf32>
    %cst_60 = arith.constant 1.000000e+00 : f32
    %196 = vector.broadcast %cst_60 : f32 to vector<1x128xf32>
    %197 = arith.addf %196, %195 : vector<1x128xf32>
    %198 = arith.divf %196, %197 : vector<1x128xf32>
    %199 = vector.extract_strided_slice %192 {offsets = [0, 128], sizes = [1, 128], strides = [1, 1]} : vector<1x512xf32> to vector<1x128xf32>
    %200 = arith.negf %199 : vector<1x128xf32>
    %201 = math.exp %200 : vector<1x128xf32>
    %cst_61 = arith.constant 1.000000e+00 : f32
    %202 = vector.broadcast %cst_61 : f32 to vector<1x128xf32>
    %203 = arith.addf %202, %201 : vector<1x128xf32>
    %204 = arith.divf %202, %203 : vector<1x128xf32>
    %205 = vector.extract_strided_slice %192 {offsets = [0, 256], sizes = [1, 128], strides = [1, 1]} : vector<1x512xf32> to vector<1x128xf32>
    %206 = math.tanh %205 : vector<1x128xf32>
    %207 = vector.extract_strided_slice %192 {offsets = [0, 384], sizes = [1, 128], strides = [1, 1]} : vector<1x512xf32> to vector<1x128xf32>
    %208 = arith.negf %207 : vector<1x128xf32>
    %209 = math.exp %208 : vector<1x128xf32>
    %cst_62 = arith.constant 1.000000e+00 : f32
    %210 = vector.broadcast %cst_62 : f32 to vector<1x128xf32>
    %211 = arith.addf %210, %209 : vector<1x128xf32>
    %212 = arith.divf %210, %211 : vector<1x128xf32>
    %213 = arith.mulf %204, %187 : vector<1x128xf32>
    %214 = arith.mulf %198, %206 : vector<1x128xf32>
    %215 = arith.addf %213, %214 : vector<1x128xf32>
    %216 = math.tanh %215 : vector<1x128xf32>
    %217 = arith.mulf %212, %216 : vector<1x128xf32>
    %218 = vector.extract_strided_slice %47 {offsets = [6, 0], sizes = [1, 512], strides = [1, 1]} : vector<8x512xf32> to vector<1x512xf32>
    %cst_63 = arith.constant dense<0.000000e+00> : vector<1x512xf32>
    %219 = tpu.matmul %217, %43, %cst_63 {dimension_numbers = #tpu.dot_dimension_numbers<[1], [0], [0], [1], [0, 0, 1, 1], [], []>} : vector<1x128xf32>, vector<128x512xf32>, vector<1x512xf32> -> vector<1x512xf32>
    %220 = arith.addf %218, %219 : vector<1x512xf32>
    %221 = vector.extract_strided_slice %220 {offsets = [0, 0], sizes = [1, 128], strides = [1, 1]} : vector<1x512xf32> to vector<1x128xf32>
    %222 = arith.negf %221 : vector<1x128xf32>
    %223 = math.exp %222 : vector<1x128xf32>
    %cst_64 = arith.constant 1.000000e+00 : f32
    %224 = vector.broadcast %cst_64 : f32 to vector<1x128xf32>
    %225 = arith.addf %224, %223 : vector<1x128xf32>
    %226 = arith.divf %224, %225 : vector<1x128xf32>
    %227 = vector.extract_strided_slice %220 {offsets = [0, 128], sizes = [1, 128], strides = [1, 1]} : vector<1x512xf32> to vector<1x128xf32>
    %228 = arith.negf %227 : vector<1x128xf32>
    %229 = math.exp %228 : vector<1x128xf32>
    %cst_65 = arith.constant 1.000000e+00 : f32
    %230 = vector.broadcast %cst_65 : f32 to vector<1x128xf32>
    %231 = arith.addf %230, %229 : vector<1x128xf32>
    %232 = arith.divf %230, %231 : vector<1x128xf32>
    %233 = vector.extract_strided_slice %220 {offsets = [0, 256], sizes = [1, 128], strides = [1, 1]} : vector<1x512xf32> to vector<1x128xf32>
    %234 = math.tanh %233 : vector<1x128xf32>
    %235 = vector.extract_strided_slice %220 {offsets = [0, 384], sizes = [1, 128], strides = [1, 1]} : vector<1x512xf32> to vector<1x128xf32>
    %236 = arith.negf %235 : vector<1x128xf32>
    %237 = math.exp %236 : vector<1x128xf32>
    %cst_66 = arith.constant 1.000000e+00 : f32
    %238 = vector.broadcast %cst_66 : f32 to vector<1x128xf32>
    %239 = arith.addf %238, %237 : vector<1x128xf32>
    %240 = arith.divf %238, %239 : vector<1x128xf32>
    %241 = arith.mulf %232, %215 : vector<1x128xf32>
    %242 = arith.mulf %226, %234 : vector<1x128xf32>
    %243 = arith.addf %241, %242 : vector<1x128xf32>
    %244 = math.tanh %243 : vector<1x128xf32>
    %245 = arith.mulf %240, %244 : vector<1x128xf32>
    %246 = vector.extract_strided_slice %47 {offsets = [7, 0], sizes = [1, 512], strides = [1, 1]} : vector<8x512xf32> to vector<1x512xf32>
    %cst_67 = arith.constant dense<0.000000e+00> : vector<1x512xf32>
    %247 = tpu.matmul %245, %43, %cst_67 {dimension_numbers = #tpu.dot_dimension_numbers<[1], [0], [0], [1], [0, 0, 1, 1], [], []>} : vector<1x128xf32>, vector<128x512xf32>, vector<1x512xf32> -> vector<1x512xf32>
    %248 = arith.addf %246, %247 : vector<1x512xf32>
    %249 = vector.extract_strided_slice %248 {offsets = [0, 0], sizes = [1, 128], strides = [1, 1]} : vector<1x512xf32> to vector<1x128xf32>
    %250 = arith.negf %249 : vector<1x128xf32>
    %251 = math.exp %250 : vector<1x128xf32>
    %cst_68 = arith.constant 1.000000e+00 : f32
    %252 = vector.broadcast %cst_68 : f32 to vector<1x128xf32>
    %253 = arith.addf %252, %251 : vector<1x128xf32>
    %254 = arith.divf %252, %253 : vector<1x128xf32>
    %255 = vector.extract_strided_slice %248 {offsets = [0, 128], sizes = [1, 128], strides = [1, 1]} : vector<1x512xf32> to vector<1x128xf32>
    %256 = arith.negf %255 : vector<1x128xf32>
    %257 = math.exp %256 : vector<1x128xf32>
    %cst_69 = arith.constant 1.000000e+00 : f32
    %258 = vector.broadcast %cst_69 : f32 to vector<1x128xf32>
    %259 = arith.addf %258, %257 : vector<1x128xf32>
    %260 = arith.divf %258, %259 : vector<1x128xf32>
    %261 = vector.extract_strided_slice %248 {offsets = [0, 256], sizes = [1, 128], strides = [1, 1]} : vector<1x512xf32> to vector<1x128xf32>
    %262 = math.tanh %261 : vector<1x128xf32>
    %263 = vector.extract_strided_slice %248 {offsets = [0, 384], sizes = [1, 128], strides = [1, 1]} : vector<1x512xf32> to vector<1x128xf32>
    %264 = arith.negf %263 : vector<1x128xf32>
    %265 = math.exp %264 : vector<1x128xf32>
    %cst_70 = arith.constant 1.000000e+00 : f32
    %266 = vector.broadcast %cst_70 : f32 to vector<1x128xf32>
    %267 = arith.addf %266, %265 : vector<1x128xf32>
    %268 = arith.divf %266, %267 : vector<1x128xf32>
    %269 = arith.mulf %260, %243 : vector<1x128xf32>
    %270 = arith.mulf %254, %262 : vector<1x128xf32>
    %271 = arith.addf %269, %270 : vector<1x128xf32>
    %272 = math.tanh %271 : vector<1x128xf32>
    %273 = arith.mulf %268, %272 : vector<1x128xf32>
    %274 = tpu.concatenate %77, %105, %133, %161, %189, %217, %245, %273 in 0 : vector<1x128xf32>, vector<1x128xf32>, vector<1x128xf32>, vector<1x128xf32>, vector<1x128xf32>, vector<1x128xf32>, vector<1x128xf32>, vector<1x128xf32> -> vector<8x128xf32>
    %275 = arith.negf %274 : vector<8x128xf32>
    %276 = math.exp %275 : vector<8x128xf32>
    %cst_71 = arith.constant 1.000000e+00 : f32
    %277 = vector.broadcast %cst_71 : f32 to vector<8x128xf32>
    %278 = arith.addf %277, %276 : vector<8x128xf32>
    %279 = arith.divf %277, %278 : vector<8x128xf32>
    %280 = vector.extract_strided_slice %279 {offsets = [0, 0], sizes = [8, 8], strides = [1, 1]} : vector<8x128xf32> to vector<8x8xf32>
    %c11 = arith.constant 11 : index
    %c0_72 = arith.constant 0 : index
    %c0_73 = arith.constant 0 : index
    %281 = vector.load %arg1[%c11, %c0_72, %c0_73] : memref<14x128x128xf32, #tpu.memory_space<vmem>>, vector<1x8x128xf32>
    %282 = vector.shape_cast %281 : vector<1x8x128xf32> to vector<8x128xf32>
    %c11_74 = arith.constant 11 : index
    %c0_75 = arith.constant 0 : index
    %c0_76 = arith.constant 0 : index
    %283 = vector.load %arg2[%c11_74, %c0_75, %c0_76] : memref<14x1x128xf32, #tpu.memory_space<vmem>>, vector<1x1x128xf32>
    %284 = vector.shape_cast %283 : vector<1x1x128xf32> to vector<1x128xf32>
    %cst_77 = arith.constant dense<0.000000e+00> : vector<8x128xf32>
    %285 = tpu.matmul %280, %282, %cst_77 {dimension_numbers = #tpu.dot_dimension_numbers<[1], [0], [0], [1], [0, 0, 1, 1], [], []>} : vector<8x8xf32>, vector<8x128xf32>, vector<8x128xf32> -> vector<8x128xf32>
    %286 = vector.broadcast %284 : vector<1x128xf32> to vector<8x128xf32>
    %287 = arith.addf %285, %286 : vector<8x128xf32>
    %288 = arith.negf %287 : vector<8x128xf32>
    %289 = math.exp %288 : vector<8x128xf32>
    %cst_78 = arith.constant 1.000000e+00 : f32
    %290 = vector.broadcast %cst_78 : f32 to vector<8x128xf32>
    %291 = arith.addf %290, %289 : vector<8x128xf32>
    %292 = arith.divf %290, %291 : vector<8x128xf32>
    %c12 = arith.constant 12 : index
    %c0_79 = arith.constant 0 : index
    %c0_80 = arith.constant 0 : index
    %293 = vector.load %arg1[%c12, %c0_79, %c0_80] : memref<14x128x128xf32, #tpu.memory_space<vmem>>, vector<1x128x128xf32>
    %294 = vector.shape_cast %293 : vector<1x128x128xf32> to vector<128x128xf32>
    %c12_81 = arith.constant 12 : index
    %c0_82 = arith.constant 0 : index
    %c0_83 = arith.constant 0 : index
    %295 = vector.load %arg2[%c12_81, %c0_82, %c0_83] : memref<14x1x128xf32, #tpu.memory_space<vmem>>, vector<1x1x128xf32>
    %296 = vector.shape_cast %295 : vector<1x1x128xf32> to vector<1x128xf32>
    %cst_84 = arith.constant dense<0.000000e+00> : vector<8x128xf32>
    %297 = tpu.matmul %292, %294, %cst_84 {dimension_numbers = #tpu.dot_dimension_numbers<[1], [0], [0], [1], [0, 0, 1, 1], [], []>} : vector<8x128xf32>, vector<128x128xf32>, vector<8x128xf32> -> vector<8x128xf32>
    %298 = vector.broadcast %296 : vector<1x128xf32> to vector<8x128xf32>
    %299 = arith.addf %297, %298 : vector<8x128xf32>
    %300 = arith.negf %299 : vector<8x128xf32>
    %301 = math.exp %300 : vector<8x128xf32>
    %cst_85 = arith.constant 1.000000e+00 : f32
    %302 = vector.broadcast %cst_85 : f32 to vector<8x128xf32>
    %303 = arith.addf %302, %301 : vector<8x128xf32>
    %304 = arith.divf %302, %303 : vector<8x128xf32>
    %c13 = arith.constant 13 : index
    %c0_86 = arith.constant 0 : index
    %c0_87 = arith.constant 0 : index
    %305 = vector.load %arg1[%c13, %c0_86, %c0_87] : memref<14x128x128xf32, #tpu.memory_space<vmem>>, vector<1x128x128xf32>
    %306 = vector.shape_cast %305 : vector<1x128x128xf32> to vector<128x128xf32>
    %c13_88 = arith.constant 13 : index
    %c0_89 = arith.constant 0 : index
    %c0_90 = arith.constant 0 : index
    %307 = vector.load %arg2[%c13_88, %c0_89, %c0_90] : memref<14x1x128xf32, #tpu.memory_space<vmem>>, vector<1x1x128xf32>
    %308 = vector.shape_cast %307 : vector<1x1x128xf32> to vector<1x128xf32>
    %cst_91 = arith.constant dense<0.000000e+00> : vector<8x128xf32>
    %309 = tpu.matmul %304, %306, %cst_91 {dimension_numbers = #tpu.dot_dimension_numbers<[1], [0], [0], [1], [0, 0, 1, 1], [], []>} : vector<8x128xf32>, vector<128x128xf32>, vector<8x128xf32> -> vector<8x128xf32>
    %310 = vector.broadcast %308 : vector<1x128xf32> to vector<8x128xf32>
    %311 = arith.addf %309, %310 : vector<8x128xf32>
    %c3 = arith.constant 3 : index
    %c0_92 = arith.constant 0 : index
    %c0_93 = arith.constant 0 : index
    %312 = vector.load %arg1[%c3, %c0_92, %c0_93] : memref<14x128x128xf32, #tpu.memory_space<vmem>>, vector<1x8x128xf32>
    %313 = vector.shape_cast %312 : vector<1x8x128xf32> to vector<8x128xf32>
    %c3_94 = arith.constant 3 : index
    %c0_95 = arith.constant 0 : index
    %c0_96 = arith.constant 0 : index
    %314 = vector.load %arg2[%c3_94, %c0_95, %c0_96] : memref<14x1x128xf32, #tpu.memory_space<vmem>>, vector<1x1x128xf32>
    %315 = vector.shape_cast %314 : vector<1x1x128xf32> to vector<1x128xf32>
    %cst_97 = arith.constant dense<0.000000e+00> : vector<8x128xf32>
    %316 = tpu.matmul %39, %313, %cst_97 {dimension_numbers = #tpu.dot_dimension_numbers<[1], [0], [0], [1], [0, 0, 1, 1], [], []>} : vector<8x8xf32>, vector<8x128xf32>, vector<8x128xf32> -> vector<8x128xf32>
    %317 = vector.broadcast %315 : vector<1x128xf32> to vector<8x128xf32>
    %318 = arith.addf %316, %317 : vector<8x128xf32>
    %319 = arith.negf %318 : vector<8x128xf32>
    %320 = math.exp %319 : vector<8x128xf32>
    %cst_98 = arith.constant 1.000000e+00 : f32
    %321 = vector.broadcast %cst_98 : f32 to vector<8x128xf32>
    %322 = arith.addf %321, %320 : vector<8x128xf32>
    %323 = arith.divf %321, %322 : vector<8x128xf32>
    %c4 = arith.constant 4 : index
    %c0_99 = arith.constant 0 : index
    %c0_100 = arith.constant 0 : index
    %324 = vector.load %arg1[%c4, %c0_99, %c0_100] : memref<14x128x128xf32, #tpu.memory_space<vmem>>, vector<1x128x128xf32>
    %325 = vector.shape_cast %324 : vector<1x128x128xf32> to vector<128x128xf32>
    %c4_101 = arith.constant 4 : index
    %c0_102 = arith.constant 0 : index
    %c0_103 = arith.constant 0 : index
    %326 = vector.load %arg2[%c4_101, %c0_102, %c0_103] : memref<14x1x128xf32, #tpu.memory_space<vmem>>, vector<1x1x128xf32>
    %327 = vector.shape_cast %326 : vector<1x1x128xf32> to vector<1x128xf32>
    %cst_104 = arith.constant dense<0.000000e+00> : vector<8x128xf32>
    %328 = tpu.matmul %323, %325, %cst_104 {dimension_numbers = #tpu.dot_dimension_numbers<[1], [0], [0], [1], [0, 0, 1, 1], [], []>} : vector<8x128xf32>, vector<128x128xf32>, vector<8x128xf32> -> vector<8x128xf32>
    %329 = vector.broadcast %327 : vector<1x128xf32> to vector<8x128xf32>
    %330 = arith.addf %328, %329 : vector<8x128xf32>
    %331 = arith.negf %330 : vector<8x128xf32>
    %332 = math.exp %331 : vector<8x128xf32>
    %cst_105 = arith.constant 1.000000e+00 : f32
    %333 = vector.broadcast %cst_105 : f32 to vector<8x128xf32>
    %334 = arith.addf %333, %332 : vector<8x128xf32>
    %335 = arith.divf %333, %334 : vector<8x128xf32>
    %c5 = arith.constant 5 : index
    %c0_106 = arith.constant 0 : index
    %c0_107 = arith.constant 0 : index
    %336 = vector.load %arg1[%c5, %c0_106, %c0_107] : memref<14x128x128xf32, #tpu.memory_space<vmem>>, vector<1x128x128xf32>
    %337 = vector.shape_cast %336 : vector<1x128x128xf32> to vector<128x128xf32>
    %c5_108 = arith.constant 5 : index
    %c0_109 = arith.constant 0 : index
    %c0_110 = arith.constant 0 : index
    %338 = vector.load %arg2[%c5_108, %c0_109, %c0_110] : memref<14x1x128xf32, #tpu.memory_space<vmem>>, vector<1x1x128xf32>
    %339 = vector.shape_cast %338 : vector<1x1x128xf32> to vector<1x128xf32>
    %cst_111 = arith.constant dense<0.000000e+00> : vector<8x128xf32>
    %340 = tpu.matmul %335, %337, %cst_111 {dimension_numbers = #tpu.dot_dimension_numbers<[1], [0], [0], [1], [0, 0, 1, 1], [], []>} : vector<8x128xf32>, vector<128x128xf32>, vector<8x128xf32> -> vector<8x128xf32>
    %341 = vector.broadcast %339 : vector<1x128xf32> to vector<8x128xf32>
    %342 = arith.addf %340, %341 : vector<8x128xf32>
    %343 = tpu.transpose %39, [1, 0] : vector<8x8xf32> -> vector<8x8xf32>
    %c6 = arith.constant 6 : index
    %c0_112 = arith.constant 0 : index
    %c0_113 = arith.constant 0 : index
    %344 = vector.load %arg1[%c6, %c0_112, %c0_113] : memref<14x128x128xf32, #tpu.memory_space<vmem>>, vector<1x8x128xf32>
    %345 = vector.shape_cast %344 : vector<1x8x128xf32> to vector<8x128xf32>
    %c6_114 = arith.constant 6 : index
    %c0_115 = arith.constant 0 : index
    %c0_116 = arith.constant 0 : index
    %346 = vector.load %arg2[%c6_114, %c0_115, %c0_116] : memref<14x1x128xf32, #tpu.memory_space<vmem>>, vector<1x1x128xf32>
    %347 = vector.shape_cast %346 : vector<1x1x128xf32> to vector<1x128xf32>
    %cst_117 = arith.constant dense<0.000000e+00> : vector<8x128xf32>
    %348 = tpu.matmul %343, %345, %cst_117 {dimension_numbers = #tpu.dot_dimension_numbers<[1], [0], [0], [1], [0, 0, 1, 1], [], []>} : vector<8x8xf32>, vector<8x128xf32>, vector<8x128xf32> -> vector<8x128xf32>
    %349 = vector.broadcast %347 : vector<1x128xf32> to vector<8x128xf32>
    %350 = arith.addf %348, %349 : vector<8x128xf32>
    %351 = arith.negf %350 : vector<8x128xf32>
    %352 = math.exp %351 : vector<8x128xf32>
    %cst_118 = arith.constant 1.000000e+00 : f32
    %353 = vector.broadcast %cst_118 : f32 to vector<8x128xf32>
    %354 = arith.addf %353, %352 : vector<8x128xf32>
    %355 = arith.divf %353, %354 : vector<8x128xf32>
    %c7 = arith.constant 7 : index
    %c0_119 = arith.constant 0 : index
    %c0_120 = arith.constant 0 : index
    %356 = vector.load %arg1[%c7, %c0_119, %c0_120] : memref<14x128x128xf32, #tpu.memory_space<vmem>>, vector<1x128x128xf32>
    %357 = vector.shape_cast %356 : vector<1x128x128xf32> to vector<128x128xf32>
    %c7_121 = arith.constant 7 : index
    %c0_122 = arith.constant 0 : index
    %c0_123 = arith.constant 0 : index
    %358 = vector.load %arg2[%c7_121, %c0_122, %c0_123] : memref<14x1x128xf32, #tpu.memory_space<vmem>>, vector<1x1x128xf32>
    %359 = vector.shape_cast %358 : vector<1x1x128xf32> to vector<1x128xf32>
    %cst_124 = arith.constant dense<0.000000e+00> : vector<8x128xf32>
    %360 = tpu.matmul %355, %357, %cst_124 {dimension_numbers = #tpu.dot_dimension_numbers<[1], [0], [0], [1], [0, 0, 1, 1], [], []>} : vector<8x128xf32>, vector<128x128xf32>, vector<8x128xf32> -> vector<8x128xf32>
    %361 = vector.broadcast %359 : vector<1x128xf32> to vector<8x128xf32>
    %362 = arith.addf %360, %361 : vector<8x128xf32>
    %363 = arith.negf %362 : vector<8x128xf32>
    %364 = math.exp %363 : vector<8x128xf32>
    %cst_125 = arith.constant 1.000000e+00 : f32
    %365 = vector.broadcast %cst_125 : f32 to vector<8x128xf32>
    %366 = arith.addf %365, %364 : vector<8x128xf32>
    %367 = arith.divf %365, %366 : vector<8x128xf32>
    %c8 = arith.constant 8 : index
    %c0_126 = arith.constant 0 : index
    %c0_127 = arith.constant 0 : index
    %368 = vector.load %arg1[%c8, %c0_126, %c0_127] : memref<14x128x128xf32, #tpu.memory_space<vmem>>, vector<1x128x128xf32>
    %369 = vector.shape_cast %368 : vector<1x128x128xf32> to vector<128x128xf32>
    %c8_128 = arith.constant 8 : index
    %c0_129 = arith.constant 0 : index
    %c0_130 = arith.constant 0 : index
    %370 = vector.load %arg2[%c8_128, %c0_129, %c0_130] : memref<14x1x128xf32, #tpu.memory_space<vmem>>, vector<1x1x128xf32>
    %371 = vector.shape_cast %370 : vector<1x1x128xf32> to vector<1x128xf32>
    %cst_131 = arith.constant dense<0.000000e+00> : vector<8x128xf32>
    %372 = tpu.matmul %367, %369, %cst_131 {dimension_numbers = #tpu.dot_dimension_numbers<[1], [0], [0], [1], [0, 0, 1, 1], [], []>} : vector<8x128xf32>, vector<128x128xf32>, vector<8x128xf32> -> vector<8x128xf32>
    %373 = vector.broadcast %371 : vector<1x128xf32> to vector<8x128xf32>
    %374 = arith.addf %372, %373 : vector<8x128xf32>
    %375 = vector.extract_strided_slice %374 {offsets = [0, 0], sizes = [8, 8], strides = [1, 1]} : vector<8x128xf32> to vector<8x8xf32>
    %376 = tpu.transpose %375, [1, 0] : vector<8x8xf32> -> vector<8x8xf32>
    %c9 = arith.constant 9 : index
    %c0_132 = arith.constant 0 : index
    %c0_133 = arith.constant 0 : index
    %377 = vector.load %arg1[%c9, %c0_132, %c0_133] : memref<14x128x128xf32, #tpu.memory_space<vmem>>, vector<1x8x128xf32>
    %378 = vector.shape_cast %377 : vector<1x8x128xf32> to vector<8x128xf32>
    %c9_134 = arith.constant 9 : index
    %c0_135 = arith.constant 0 : index
    %c0_136 = arith.constant 0 : index
    %379 = vector.load %arg2[%c9_134, %c0_135, %c0_136] : memref<14x1x128xf32, #tpu.memory_space<vmem>>, vector<1x1x128xf32>
    %380 = vector.shape_cast %379 : vector<1x1x128xf32> to vector<1x128xf32>
    %cst_137 = arith.constant dense<0.000000e+00> : vector<8x128xf32>
    %381 = tpu.matmul %376, %378, %cst_137 {dimension_numbers = #tpu.dot_dimension_numbers<[1], [0], [0], [1], [0, 0, 1, 1], [], []>} : vector<8x8xf32>, vector<8x128xf32>, vector<8x128xf32> -> vector<8x128xf32>
    %382 = vector.broadcast %380 : vector<1x128xf32> to vector<8x128xf32>
    %383 = arith.addf %381, %382 : vector<8x128xf32>
    %384 = arith.negf %383 : vector<8x128xf32>
    %385 = math.exp %384 : vector<8x128xf32>
    %cst_138 = arith.constant 1.000000e+00 : f32
    %386 = vector.broadcast %cst_138 : f32 to vector<8x128xf32>
    %387 = arith.addf %386, %385 : vector<8x128xf32>
    %388 = arith.divf %386, %387 : vector<8x128xf32>
    %c10 = arith.constant 10 : index
    %c0_139 = arith.constant 0 : index
    %c0_140 = arith.constant 0 : index
    %389 = vector.load %arg1[%c10, %c0_139, %c0_140] : memref<14x128x128xf32, #tpu.memory_space<vmem>>, vector<1x128x128xf32>
    %390 = vector.shape_cast %389 : vector<1x128x128xf32> to vector<128x128xf32>
    %c10_141 = arith.constant 10 : index
    %c0_142 = arith.constant 0 : index
    %c0_143 = arith.constant 0 : index
    %391 = vector.load %arg2[%c10_141, %c0_142, %c0_143] : memref<14x1x128xf32, #tpu.memory_space<vmem>>, vector<1x1x128xf32>
    %392 = vector.shape_cast %391 : vector<1x1x128xf32> to vector<1x128xf32>
    %cst_144 = arith.constant dense<0.000000e+00> : vector<8x128xf32>
    %393 = tpu.matmul %388, %390, %cst_144 {dimension_numbers = #tpu.dot_dimension_numbers<[1], [0], [0], [1], [0, 0, 1, 1], [], []>} : vector<8x128xf32>, vector<128x128xf32>, vector<8x128xf32> -> vector<8x128xf32>
    %394 = vector.broadcast %392 : vector<1x128xf32> to vector<8x128xf32>
    %395 = arith.addf %393, %394 : vector<8x128xf32>
    %396 = arith.mulf %342, %395 : vector<8x128xf32>
    %397 = math.exp %311 : vector<8x128xf32>
    %398 = arith.mulf %3, %397 : vector<8x128xf32>
    %399 = arith.addf %396, %398 : vector<8x128xf32>
    %c0_145 = arith.constant 0 : index
    %c0_146 = arith.constant 0 : index
    %c0_147 = arith.constant 0 : index
    %400 = vector.load %arg5[%c0_145, %c0_146, %c0_147] : memref<3x8x128xf32, #tpu.memory_space<vmem>>, vector<1x8x128xf32>
    %401 = vector.shape_cast %400 : vector<1x8x128xf32> to vector<8x128xf32>
    %402 = vector.shape_cast %38 : vector<8x128xf32> to vector<1x8x128xf32>
    tpu.vector_store %arg5[%c0_145, %c0_146, %c0_147], %402 {strides = array<i32>} : memref<3x8x128xf32, #tpu.memory_space<vmem>>, vector<1x8x128xf32>,
    %c1_148 = arith.constant 1 : index
    %c0_149 = arith.constant 0 : index
    %c0_150 = arith.constant 0 : index
    %403 = vector.load %arg5[%c1_148, %c0_149, %c0_150] : memref<3x8x128xf32, #tpu.memory_space<vmem>>, vector<1x8x128xf32>
    %404 = vector.shape_cast %403 : vector<1x8x128xf32> to vector<8x128xf32>
    %405 = vector.shape_cast %399 : vector<8x128xf32> to vector<1x8x128xf32>
    tpu.vector_store %arg5[%c1_148, %c0_149, %c0_150], %405 {strides = array<i32>} : memref<3x8x128xf32, #tpu.memory_space<vmem>>, vector<1x8x128xf32>,
    %406 = arith.mulf %38, %38 : vector<8x128xf32>
    %407 = arith.mulf %399, %399 : vector<8x128xf32>
    %408 = arith.addf %406, %407 : vector<8x128xf32>
    %cst_151 = arith.constant dense<0.000000e+00> : vector<8xf32>
    %409 = vector.multi_reduction <add>, %408, %cst_151 [1] : vector<8x128xf32> to vector<8xf32>
    %410 = vector.shape_cast %409 : vector<8xf32> to vector<8x1xf32>
    %cst_152 = arith.constant -5.000000e-01 : f32
    %411 = vector.broadcast %cst_152 : f32 to vector<8x1xf32>
    %412 = arith.mulf %411, %410 : vector<8x1xf32>
    %cst_153 = arith.constant 14.7030163 : f32
    %413 = vector.broadcast %cst_153 : f32 to vector<8x1xf32>
    %414 = arith.subf %412, %413 : vector<8x1xf32>
    %cst_154 = arith.constant dense<0.000000e+00> : vector<8xf32>
    %415 = vector.multi_reduction <add>, %311, %cst_154 [1] : vector<8x128xf32> to vector<8xf32>
    %416 = vector.shape_cast %415 : vector<8xf32> to vector<8x1xf32>
    %417 = tpu.iota {dimensions = array<i32: 1>} : vector<8x128xi32>
    %c0_i32 = arith.constant 0 : i32
    %418 = vector.broadcast %c0_i32 : i32 to vector<8x128xi32>
    %419 = arith.cmpi eq, %417, %418 : vector<8x128xi32>
    %c1_i32 = arith.constant 1 : i32
    %420 = vector.broadcast %c1_i32 : i32 to vector<8x128xi32>
    %421 = arith.cmpi eq, %417, %420 : vector<8x128xi32>
    %cst_155 = arith.constant 0.000000e+00 : f32
    %422 = vector.shape_cast %416 : vector<8x1xf32> to vector<8x1xf32>
    %423 = vector.broadcast %422 : vector<8x1xf32> to vector<8x128xf32>
    %424 = vector.broadcast %cst_155 : f32 to vector<8x128xf32>
    %425 = arith.select %421, %423, %424 : vector<8x128xi1>, vector<8x128xf32>
    %426 = vector.shape_cast %414 : vector<8x1xf32> to vector<8x1xf32>
    %427 = vector.broadcast %426 : vector<8x1xf32> to vector<8x128xf32>
    %428 = arith.select %419, %427, %425 : vector<8x128xi1>, vector<8x128xf32>
    %c2_156 = arith.constant 2 : index
    %c0_157 = arith.constant 0 : index
    %c0_158 = arith.constant 0 : index
    %429 = vector.load %arg5[%c2_156, %c0_157, %c0_158] : memref<3x8x128xf32, #tpu.memory_space<vmem>>, vector<1x8x128xf32>
    %430 = vector.shape_cast %429 : vector<1x8x128xf32> to vector<8x128xf32>
    %431 = vector.shape_cast %428 : vector<8x128xf32> to vector<1x8x128xf32>
    tpu.vector_store %arg5[%c2_156, %c0_157, %c0_158], %431 {strides = array<i32>} : memref<3x8x128xf32, #tpu.memory_space<vmem>>, vector<1x8x128xf32>,
    return
  }
}

</mosaic_0001>

<llo_original>
// kernel: tpu_custom_call.1
$region0: #{tpu_custom_call.1}
  #allocation0 [shape = 'u32[]', space=smem, size = 0x4, offset = 0x4, fixed_abs, tag = 'smem constant byte address 0x4 - core index']
  #allocation1 [shape = 'u32[72,128]{1,0:T(1,128)}', space=vmem, size = 0x9000, scoped, tag = 'internal scratch']
  %s0 = inlined_call_operand.hbm [shape: f32[3,8,128], index: 0, kind: input, shape index: {}]
  %s1 = inlined_call_operand.hbm [shape: f32[14,128,128], index: 1, kind: input, shape index: {}]
  %s2 = inlined_call_operand.hbm [shape: f32[14,1,128], index: 2, kind: input, shape index: {}]
  %s3 = inlined_call_operand.hbm [shape: f32[2,128,512], index: 3, kind: input, shape index: {}]
  %s4 = inlined_call_operand.hbm [shape: f32[1,512], index: 4, kind: input, shape index: {}]
  %s5 = inlined_call_operand.hbm [shape: f32[3,8,128], index: 5, kind: output, shape index: {}]
  %s6 = sld [smem:[#allocation0]]
  $region50: #{tpu_custom_call.1} parent=0
    _
  %s8 = ssub.s32 1, %s6
  %s9 = scalar_select 0, %s8, %s6
  $region1: #{tpu_custom_call.1} parent=0
    #allocation2 [shape = 'u8[12288]{0}', space=vmem, size = 0x3000, scoped, tag = 'input window, operand 0, single buffered']
    #allocation3 [shape = 's32[1]{0}', space=sflag, size = 0x4, scoped, tag = 'scoped memory for tpu_custom_call.1']
    #allocation4 [shape = 's32[1]{0}', space=sflag, size = 0x4, scoped, tag = 'scoped memory for tpu_custom_call.1']
    #allocation5 [shape = 'u8[917504]{0}', space=vmem, size = 0xe0000, scoped, tag = 'input window, operand 1, single buffered']
    #allocation6 [shape = 's32[1]{0}', space=sflag, size = 0x4, scoped, tag = 'scoped memory for tpu_custom_call.1']
    #allocation7 [shape = 'u8[7168]{0}', space=vmem, size = 0x1c00, scoped, tag = 'input window, operand 2, single buffered']
    #allocation8 [shape = 'u8[524288]{0}', space=vmem, size = 0x80000, scoped, tag = 'input window, operand 3, single buffered']
    #allocation9 [shape = 's32[1]{0}', space=sflag, size = 0x4, scoped, tag = 'scoped memory for tpu_custom_call.1']
    #allocation10 [shape = 'u8[2048]{0}', space=vmem, size = 0x800, scoped, tag = 'input window, operand 4, single buffered']
    #allocation11 [shape = 'u8[12288]{0}', space=vmem, size = 0x3000, scoped, tag = 'output window, operand 0, single buffered']
    %10 = vsyncpa [#allocation3], 0
    %11 = vsyncpa [#allocation6], 0
    %12 = vsyncpa [#allocation9], 0
    %13 = vsyncpa [#allocation4], 0
    // Predicated region
    $region2: #{tpu_custom_call.1} parent=1 // pred_check
      _
    $region3: #{tpu_custom_call.1} parent=1 // pred_check_branch
      %15 = sbr.rel (0) target = $region5
    $region4: #{tpu_custom_call.1} parent=1 // pred_region
      %17 = vsyncadd [#allocation3], 0
      %s18 = sshll.u32 %s0, 4
      %s19 = int_to_ptr.hbm [resolvable:$true] %s18
      %s20 = sshll.u32 [#allocation2], 4
      %s21 = int_to_ptr.vmem [resolvable:$true] %s20
      %26 = dma.hbm_to_vmem [thread:$0]  %s19, 384, %s21, [#allocation3], 128, 128, 8
    $region5: #{tpu_custom_call.1} parent=1 // pred_fallthru
      _
    // Predicated region
    $region6: #{tpu_custom_call.1} parent=1 // pred_check
      _
    $region7: #{tpu_custom_call.1} parent=1 // pred_check_branch
      %28 = sbr.rel (0) target = $region9
    $region8: #{tpu_custom_call.1} parent=1 // pred_region
      %30 = vsyncadd [#allocation6], 0
      %s31 = sshll.u32 %s1, 4
      %s32 = int_to_ptr.hbm [resolvable:$true] %s31
      %s33 = sshll.u32 [#allocation5], 4
      %s34 = int_to_ptr.vmem [resolvable:$true] %s33
      %39 = dma.hbm_to_vmem [thread:$0]  %s32, 28672, %s34, [#allocation6], 128, 128, 8
    $region9: #{tpu_custom_call.1} parent=1 // pred_fallthru
      _
    // Predicated region
    $region10: #{tpu_custom_call.1} parent=1 // pred_check
      _
    $region11: #{tpu_custom_call.1} parent=1 // pred_check_branch
      %41 = sbr.rel (0) target = $region13
    $region12: #{tpu_custom_call.1} parent=1 // pred_region
      %43 = vsyncadd [#allocation6], 0
      %s44 = sshll.u32 %s2, 4
      %s45 = int_to_ptr.hbm [resolvable:$true] %s44
      %s46 = sshll.u32 [#allocation7], 4
      %s47 = int_to_ptr.vmem [resolvable:$true] %s46
      %52 = dma.hbm_to_vmem [thread:$0]  %s45, 224, %s47, [#allocation6], 16, 16, 1
    $region13: #{tpu_custom_call.1} parent=1 // pred_fallthru
      _
    // Predicated region
    $region14: #{tpu_custom_call.1} parent=1 // pred_check
      _
    $region15: #{tpu_custom_call.1} parent=1 // pred_check_branch
      %54 = sbr.rel (0) target = $region17
    $region16: #{tpu_custom_call.1} parent=1 // pred_region
      %56 = vsyncadd [#allocation9], 0
      %s57 = sshll.u32 %s3, 4
      %s58 = int_to_ptr.hbm [resolvable:$true] %s57
      %s59 = sshll.u32 [#allocation8], 4
      %s60 = int_to_ptr.vmem [resolvable:$true] %s59
      %65 = dma.hbm_to_vmem [thread:$0]  %s58, 16384, %s60, [#allocation9], 512, 512, 32
    $region17: #{tpu_custom_call.1} parent=1 // pred_fallthru
      _
    // Predicated region
    $region18: #{tpu_custom_call.1} parent=1 // pred_check
      _
    $region19: #{tpu_custom_call.1} parent=1 // pred_check_branch
      %67 = sbr.rel (0) target = $region21
    $region20: #{tpu_custom_call.1} parent=1 // pred_region
      %69 = vsyncadd [#allocation9], 0
      %s71 = sshll.u32 %s4, 4
      %s72 = int_to_ptr.hbm [resolvable:$true] %s71
      %s73 = sshll.u32 [#allocation10], 4
      %s74 = int_to_ptr.vmem [resolvable:$true] %s73
      %76 = dma.hbm_to_vmem [thread:$0]  %s72, 64, %s74, [#allocation9]
    $region21: #{tpu_custom_call.1} parent=1 // pred_fallthru
      _
    // Predicated region
    $region22: #{tpu_custom_call.1} parent=1 // pred_check
      _
    $region23: #{tpu_custom_call.1} parent=1 // pred_check_branch
      %78 = sbr.rel (0) target = $region25
    $region24: #{tpu_custom_call.1} parent=1 // pred_region
      %80 = dma.done [#allocation3], 384
    $region25: #{tpu_custom_call.1} parent=1 // pred_fallthru
      _
    // Predicated region
    $region26: #{tpu_custom_call.1} parent=1 // pred_check
      _
    $region27: #{tpu_custom_call.1} parent=1 // pred_check_branch
      %82 = sbr.rel (0) target = $region29
    $region28: #{tpu_custom_call.1} parent=1 // pred_region
      %84 = dma.done [#allocation6], 28672
    $region29: #{tpu_custom_call.1} parent=1 // pred_fallthru
      _
    // Predicated region
    $region30: #{tpu_custom_call.1} parent=1 // pred_check
      _
    $region31: #{tpu_custom_call.1} parent=1 // pred_check_branch
      %86 = sbr.rel (0) target = $region33
    $region32: #{tpu_custom_call.1} parent=1 // pred_region
      %88 = dma.done [#allocation6], 224
    $region33: #{tpu_custom_call.1} parent=1 // pred_fallthru
      _
    // Predicated region
    $region34: #{tpu_custom_call.1} parent=1 // pred_check
      _
    $region35: #{tpu_custom_call.1} parent=1 // pred_check_branch
      %90 = sbr.rel (0) target = $region37
    $region36: #{tpu_custom_call.1} parent=1 // pred_region
      %92 = dma.done [#allocation9], 16384
    $region37: #{tpu_custom_call.1} parent=1 // pred_fallthru
      _
    // Predicated region
    $region38: #{tpu_custom_call.1} parent=1 // pred_check
      _
    $region39: #{tpu_custom_call.1} parent=1 // pred_check_branch
      %94 = sbr.rel (0) target = $region41
    $region40: #{tpu_custom_call.1} parent=1 // pred_region
      %96 = dma.done [#allocation9], 64
    $region41: #{tpu_custom_call.1} parent=1 // pred_fallthru
      _
    %v97 = vld [vmem:[#allocation2] sm:$0xff]
    %s98 = scalar_lea.vmem [#allocation2], 8
    %v99 = vld [vmem:[%s98] sm:$0xff]
    %s100 = scalar_lea.vmem [#allocation2], 16
    %v101 = vld [vmem:[%s100] sm:$0xff]
    %v102 = vld [vmem:[#allocation5] sm:$0xff]
    %v103 = vld [vmem:[#allocation7] sm:$0x1]
    %v105 = vperm.slane %v103, 0
    %vm107 = vcmask 64512
    %v109 = vsel %vm107, %v101, 0
    %111 = vmatpush.msra.mxu0 0.0
    %112 = vmatpush.msra.mxu0 0.0
    %113 = vmatpush.msra.mxu0 0.0
    %114 = vmatpush.msra.mxu0 0.0
    %115 = vmatpush.msra.mxu0 0.0
    %116 = vmatpush.msra.mxu0 0.0
    %117 = vmatpush.msra.mxu0 0.0
    %118 = vmatpush.msra.mxu0 0.0
    %119 = vmatpush.msra.mxu0 0.0
    %120 = vmatpush.msra.mxu0 0.0
    %121 = vmatpush.msra.mxu0 0.0
    %122 = vmatpush.msra.mxu0 0.0
    %123 = vmatpush.msra.mxu0 0.0
    %124 = vmatpush.msra.mxu0 0.0
    %125 = vmatpush.msra.mxu0 0.0
    %126 = vmatpush.msra.mxu0 %v102
    %127 = vmatmul.f32.gmra.mxu0 %v109
    %v128 = vpop.f32.mrf.mxu0
    %v129 = vadd.f32 %v105, %v128
    %130 = vdwg.mxu0
    %v131 = vxor.u32 %v129, 2147483648
    %v132 = vmul.f32 %v131, 1.442695
    %v133 = vpow.pop %v132
    %v134 = vadd.f32 %v133, 1.0
    %v135 = vrcp.pop %v134
    %v136 = vmul.f32 %v134, %v135
    %v137 = vsub.f32 1.0, %v136
    %v138 = vmul.f32 %v135, %v137
    %v139 = vadd.f32 %v135, %v138
    %vm140 = vweird.f32 %v134
    %vm141 = vweird.f32 %v135
    %vm142 = vmor %vm140, %vm141
    %v143 = vsel %vm142, %v135, %v139
    %v144 = vand.u32 2147483647, %v134
    %vm145 = vcmp.eq.f32.partialorder %v144, 8.507059e+37
    %v146 = vand.u32 %v134, 2147483648
    %v147 = vor.u32 1.1754944e-38, %v146
    %v148 = vsel %vm145, %v147, %v143
    %v149 = vmul.f32 1.0, %v148
    %s150 = scalar_lea.vmem [#allocation5], 128
    %v151 = vld [vmem:[%s150] sm:$0xff]
    %v152 = vld [vmem:[%s150 + $0x8] sm:$0xff]
    %v153 = vld [vmem:[%s150 + $0x10] sm:$0xff]
    %v154 = vld [vmem:[%s150 + $0x18] sm:$0xff]
    %v155 = vld [vmem:[%s150 + $0x20] sm:$0xff]
    %v156 = vld [vmem:[%s150 + $0x28] sm:$0xff]
    %v157 = vld [vmem:[%s150 + $0x30] sm:$0xff]
    %v158 = vld [vmem:[%s150 + $0x38] sm:$0xff]
    %v159 = vld [vmem:[%s150 + $0x40] sm:$0xff]
    %v160 = vld [vmem:[%s150 + $0x48] sm:$0xff]
    %v161 = vld [vmem:[%s150 + $0x50] sm:$0xff]
    %v162 = vld [vmem:[%s150 + $0x58] sm:$0xff]
    %v163 = vld [vmem:[%s150 + $0x60] sm:$0xff]
    %v164 = vld [vmem:[%s150 + $0x68] sm:$0xff]
    %v165 = vld [vmem:[%s150 + $0x70] sm:$0xff]
    %v166 = vld [vmem:[%s150 + $0x78] sm:$0xff]
    %s167 = scalar_lea.vmem [#allocation7], 1
    %v168 = vld [vmem:[%s167] sm:$0x1]
    %v170 = vperm.slane %v168, 0
    %172 = vmatpush.msra.mxu0 %v166
    %173 = vmatpush.msra.mxu0 %v165
    %174 = vmatpush.msra.mxu0 %v164
    %175 = vmatpush.msra.mxu0 %v163
    %176 = vmatpush.msra.mxu0 %v162
    %177 = vmatpush.msra.mxu0 %v161
    %178 = vmatpush.msra.mxu0 %v160
    %179 = vmatpush.msra.mxu0 %v159
    %180 = vmatpush.msra.mxu0 %v158
    %181 = vmatpush.msra.mxu0 %v157
    %182 = vmatpush.msra.mxu0 %v156
    %183 = vmatpush.msra.mxu0 %v155
    %184 = vmatpush.msra.mxu0 %v154
    %185 = vmatpush.msra.mxu0 %v153
    %186 = vmatpush.msra.mxu0 %v152
    %187 = vmatpush.msra.mxu0 %v151
    %188 = vmatmul.f32.gmra.mxu0 %v149
    %v189 = vpop.f32.mrf.mxu0
    %v190 = vadd.f32 %v170, %v189
    %191 = vdwg.mxu0
    %v192 = vxor.u32 %v190, 2147483648
    %v193 = vmul.f32 %v192, 1.442695
    %v194 = vpow.pop %v193
    %v195 = vadd.f32 %v194, 1.0
    %v196 = vrcp.pop %v195
    %v197 = vmul.f32 %v195, %v196
    %v198 = vsub.f32 1.0, %v197
    %v199 = vmul.f32 %v196, %v198
    %v200 = vadd.f32 %v196, %v199
    %vm201 = vweird.f32 %v195
    %vm202 = vweird.f32 %v196
    %vm203 = vmor %vm201, %vm202
    %v204 = vsel %vm203, %v196, %v200
    %v205 = vand.u32 2147483647, %v195
    %vm206 = vcmp.eq.f32.partialorder %v205, 8.507059e+37
    %v207 = vand.u32 %v195, 2147483648
    %v208 = vor.u32 1.1754944e-38, %v207
    %v209 = vsel %vm206, %v208, %v204
    %v210 = vmul.f32 1.0, %v209
    %s211 = scalar_lea.vmem [#allocation5], 256
    %v212 = vld [vmem:[%s211] sm:$0xff]
    %v213 = vld [vmem:[%s211 + $0x8] sm:$0xff]
    %v214 = vld [vmem:[%s211 + $0x10] sm:$0xff]
    %v215 = vld [vmem:[%s211 + $0x18] sm:$0xff]
    %v216 = vld [vmem:[%s211 + $0x20] sm:$0xff]
    %v217 = vld [vmem:[%s211 + $0x28] sm:$0xff]
    %v218 = vld [vmem:[%s211 + $0x30] sm:$0xff]
    %v219 = vld [vmem:[%s211 + $0x38] sm:$0xff]
    %v220 = vld [vmem:[%s211 + $0x40] sm:$0xff]
    %v221 = vld [vmem:[%s211 + $0x48] sm:$0xff]
    %v222 = vld [vmem:[%s211 + $0x50] sm:$0xff]
    %v223 = vld [vmem:[%s211 + $0x58] sm:$0xff]
    %v224 = vld [vmem:[%s211 + $0x60] sm:$0xff]
    %v225 = vld [vmem:[%s211 + $0x68] sm:$0xff]
    %v226 = vld [vmem:[%s211 + $0x70] sm:$0xff]
    %v227 = vld [vmem:[%s211 + $0x78] sm:$0xff]
    %s228 = scalar_lea.vmem [#allocation7], 2
    %v229 = vld [vmem:[%s228] sm:$0x1]
    %v231 = vperm.slane %v229, 0
    %233 = vmatpush.msra.mxu0 %v227
    %234 = vmatpush.msra.mxu0 %v226
    %235 = vmatpush.msra.mxu0 %v225
    %236 = vmatpush.msra.mxu0 %v224
    %237 = vmatpush.msra.mxu0 %v223
    %238 = vmatpush.msra.mxu0 %v222
    %239 = vmatpush.msra.mxu0 %v221
    %240 = vmatpush.msra.mxu0 %v220
    %241 = vmatpush.msra.mxu0 %v219
    %242 = vmatpush.msra.mxu0 %v218
    %243 = vmatpush.msra.mxu0 %v217
    %244 = vmatpush.msra.mxu0 %v216
    %245 = vmatpush.msra.mxu0 %v215
    %246 = vmatpush.msra.mxu0 %v214
    %247 = vmatpush.msra.mxu0 %v213
    %248 = vmatpush.msra.mxu0 %v212
    %249 = vmatmul.f32.gmra.mxu0 %v210
    %v250 = vpop.f32.mrf.mxu0
    %v251 = vadd.f32 %v231, %v250
    %252 = vdwg.mxu0
    %v253 = vtanh.pop %v251
    %v254 = vadd.f32 %v97, %v253
    %v255 = vld [vmem:[#allocation8] sm:$0xff]
    %v256 = vld [vmem:[#allocation8 + $0x8] sm:$0xff]
    %v257 = vld [vmem:[#allocation8 + $0x10] sm:$0xff]
    %v258 = vld [vmem:[#allocation8 + $0x18] sm:$0xff]
    %v259 = vld [vmem:[#allocation8 + $0x20] sm:$0xff]
    %v260 = vld [vmem:[#allocation8 + $0x28] sm:$0xff]
    %v261 = vld [vmem:[#allocation8 + $0x30] sm:$0xff]
    %v262 = vld [vmem:[#allocation8 + $0x38] sm:$0xff]
    %v263 = vld [vmem:[#allocation8 + $0x40] sm:$0xff]
    %v264 = vld [vmem:[#allocation8 + $0x48] sm:$0xff]
    %v265 = vld [vmem:[#allocation8 + $0x50] sm:$0xff]
    %v266 = vld [vmem:[#allocation8 + $0x58] sm:$0xff]
    %v267 = vld [vmem:[#allocation8 + $0x60] sm:$0xff]
    %v268 = vld [vmem:[#allocation8 + $0x68] sm:$0xff]
    %v269 = vld [vmem:[#allocation8 + $0x70] sm:$0xff]
    %v270 = vld [vmem:[#allocation8 + $0x78] sm:$0xff]
    %v271 = vld [vmem:[#allocation8 + $0x80] sm:$0xff]
    %v272 = vld [vmem:[#allocation8 + $0x88] sm:$0xff]
    %v273 = vld [vmem:[#allocation8 + $0x90] sm:$0xff]
    %v274 = vld [vmem:[#allocation8 + $0x98] sm:$0xff]
    %v275 = vld [vmem:[#allocation8 + $0xa0] sm:$0xff]
    %v276 = vld [vmem:[#allocation8 + $0xa8] sm:$0xff]
    %v277 = vld [vmem:[#allocation8 + $0xb0] sm:$0xff]
    %v278 = vld [vmem:[#allocation8 + $0xb8] sm:$0xff]
    %v279 = vld [vmem:[#allocation8 + $0xc0] sm:$0xff]
    %v280 = vld [vmem:[#allocation8 + $0xc8] sm:$0xff]
    %v281 = vld [vmem:[#allocation8 + $0xd0] sm:$0xff]
    %v282 = vld [vmem:[#allocation8 + $0xd8] sm:$0xff]
    %v283 = vld [vmem:[#allocation8 + $0xe0] sm:$0xff]
    %v284 = vld [vmem:[#allocation8 + $0xe8] sm:$0xff]
    %v285 = vld [vmem:[#allocation8 + $0xf0] sm:$0xff]
    %v286 = vld [vmem:[#allocation8 + $0xf8] sm:$0xff]
    %v287 = vld [vmem:[#allocation8 + $0x100] sm:$0xff]
    %v288 = vld [vmem:[#allocation8 + $0x108] sm:$0xff]
    %v289 = vld [vmem:[#allocation8 + $0x110] sm:$0xff]
    %v290 = vld [vmem:[#allocation8 + $0x118] sm:$0xff]
    %v291 = vld [vmem:[#allocation8 + $0x120] sm:$0xff]
    %v292 = vld [vmem:[#allocation8 + $0x128] sm:$0xff]
    %v293 = vld [vmem:[#allocation8 + $0x130] sm:$0xff]
    %v294 = vld [vmem:[#allocation8 + $0x138] sm:$0xff]
    %v295 = vld [vmem:[#allocation8 + $0x140] sm:$0xff]
    %v296 = vld [vmem:[#allocation8 + $0x148] sm:$0xff]
    %v297 = vld [vmem:[#allocation8 + $0x150] sm:$0xff]
    %v298 = vld [vmem:[#allocation8 + $0x158] sm:$0xff]
    %v299 = vld [vmem:[#allocation8 + $0x160] sm:$0xff]
    %v300 = vld [vmem:[#allocation8 + $0x168] sm:$0xff]
    %v301 = vld [vmem:[#allocation8 + $0x170] sm:$0xff]
    %v302 = vld [vmem:[#allocation8 + $0x178] sm:$0xff]
    %v303 = vld [vmem:[#allocation8 + $0x180] sm:$0xff]
    %v304 = vld [vmem:[#allocation8 + $0x188] sm:$0xff]
    %v305 = vld [vmem:[#allocation8 + $0x190] sm:$0xff]
    %v306 = vld [vmem:[#allocation8 + $0x198] sm:$0xff]
    %v307 = vld [vmem:[#allocation8 + $0x1a0] sm:$0xff]
    %v308 = vld [vmem:[#allocation8 + $0x1a8] sm:$0xff]
    %v309 = vld [vmem:[#allocation8 + $0x1b0] sm:$0xff]
    %v310 = vld [vmem:[#allocation8 + $0x1b8] sm:$0xff]
    %v311 = vld [vmem:[#allocation8 + $0x1c0] sm:$0xff]
    %v312 = vld [vmem:[#allocation8 + $0x1c8] sm:$0xff]
    %v313 = vld [vmem:[#allocation8 + $0x1d0] sm:$0xff]
    %v314 = vld [vmem:[#allocation8 + $0x1d8] sm:$0xff]
    %v315 = vld [vmem:[#allocation8 + $0x1e0] sm:$0xff]
    %v316 = vld [vmem:[#allocation8 + $0x1e8] sm:$0xff]
    %v317 = vld [vmem:[#allocation8 + $0x1f0] sm:$0xff]
    %v318 = vld [vmem:[#allocation8 + $0x1f8] sm:$0xff]
    %s319 = scalar_lea.vmem [#allocation8], 512
    %v320 = vld [vmem:[%s319] sm:$0xff]
    %v321 = vld [vmem:[%s319 + $0x8] sm:$0xff]
    %v322 = vld [vmem:[%s319 + $0x10] sm:$0xff]
    %v323 = vld [vmem:[%s319 + $0x18] sm:$0xff]
    %v324 = vld [vmem:[%s319 + $0x20] sm:$0xff]
    %v325 = vld [vmem:[%s319 + $0x28] sm:$0xff]
    %v326 = vld [vmem:[%s319 + $0x30] sm:$0xff]
    %v327 = vld [vmem:[%s319 + $0x38] sm:$0xff]
    %v328 = vld [vmem:[%s319 + $0x40] sm:$0xff]
    %v329 = vld [vmem:[%s319 + $0x48] sm:$0xff]
    %v330 = vld [vmem:[%s319 + $0x50] sm:$0xff]
    %v331 = vld [vmem:[%s319 + $0x58] sm:$0xff]
    %v332 = vld [vmem:[%s319 + $0x60] sm:$0xff]
    %v333 = vld [vmem:[%s319 + $0x68] sm:$0xff]
    %v334 = vld [vmem:[%s319 + $0x70] sm:$0xff]
    %v335 = vld [vmem:[%s319 + $0x78] sm:$0xff]
    %v336 = vld [vmem:[%s319 + $0x80] sm:$0xff]
    %v337 = vld [vmem:[%s319 + $0x88] sm:$0xff]
    %v338 = vld [vmem:[%s319 + $0x90] sm:$0xff]
    %v339 = vld [vmem:[%s319 + $0x98] sm:$0xff]
    %v340 = vld [vmem:[%s319 + $0xa0] sm:$0xff]
    %v341 = vld [vmem:[%s319 + $0xa8] sm:$0xff]
    %v342 = vld [vmem:[%s319 + $0xb0] sm:$0xff]
    %v343 = vld [vmem:[%s319 + $0xb8] sm:$0xff]
    %v344 = vld [vmem:[%s319 + $0xc0] sm:$0xff]
    %v345 = vld [vmem:[%s319 + $0xc8] sm:$0xff]
    %v346 = vld [vmem:[%s319 + $0xd0] sm:$0xff]
    %v347 = vld [vmem:[%s319 + $0xd8] sm:$0xff]
    %v348 = vld [vmem:[%s319 + $0xe0] sm:$0xff]
    %v349 = vld [vmem:[%s319 + $0xe8] sm:$0xff]
    %v350 = vld [vmem:[%s319 + $0xf0] sm:$0xff]
    %v351 = vld [vmem:[%s319 + $0xf8] sm:$0xff]
    %v352 = vld [vmem:[%s319 + $0x100] sm:$0xff]
    %v353 = vld [vmem:[%s319 + $0x108] sm:$0xff]
    %v354 = vld [vmem:[%s319 + $0x110] sm:$0xff]
    %v355 = vld [vmem:[%s319 + $0x118] sm:$0xff]
    %v356 = vld [vmem:[%s319 + $0x120] sm:$0xff]
    %v357 = vld [vmem:[%s319 + $0x128] sm:$0xff]
    %v358 = vld [vmem:[%s319 + $0x130] sm:$0xff]
    %v359 = vld [vmem:[%s319 + $0x138] sm:$0xff]
    %v360 = vld [vmem:[%s319 + $0x140] sm:$0xff]
    %v361 = vld [vmem:[%s319 + $0x148] sm:$0xff]
    %v362 = vld [vmem:[%s319 + $0x150] sm:$0xff]
    %v363 = vld [vmem:[%s319 + $0x158] sm:$0xff]
    %v364 = vld [vmem:[%s319 + $0x160] sm:$0xff]
    %v365 = vld [vmem:[%s319 + $0x168] sm:$0xff]
    %v366 = vld [vmem:[%s319 + $0x170] sm:$0xff]
    %v367 = vld [vmem:[%s319 + $0x178] sm:$0xff]
    %v368 = vld [vmem:[%s319 + $0x180] sm:$0xff]
    %v369 = vld [vmem:[%s319 + $0x188] sm:$0xff]
    %v370 = vld [vmem:[%s319 + $0x190] sm:$0xff]
    %v371 = vld [vmem:[%s319 + $0x198] sm:$0xff]
    %v372 = vld [vmem:[%s319 + $0x1a0] sm:$0xff]
    %v373 = vld [vmem:[%s319 + $0x1a8] sm:$0xff]
    %v374 = vld [vmem:[%s319 + $0x1b0] sm:$0xff]
    %v375 = vld [vmem:[%s319 + $0x1b8] sm:$0xff]
    %v376 = vld [vmem:[%s319 + $0x1c0] sm:$0xff]
    %v377 = vld [vmem:[%s319 + $0x1c8] sm:$0xff]
    %v378 = vld [vmem:[%s319 + $0x1d0] sm:$0xff]
    %v379 = vld [vmem:[%s319 + $0x1d8] sm:$0xff]
    %v380 = vld [vmem:[%s319 + $0x1e0] sm:$0xff]
    %v381 = vld [vmem:[%s319 + $0x1e8] sm:$0xff]
    %v382 = vld [vmem:[%s319 + $0x1f0] sm:$0xff]
    %v383 = vld [vmem:[%s319 + $0x1f8] sm:$0xff]
    %v384 = vld [vmem:[#allocation10] sm:$0xf]
    %v386 = vperm.slane %v384, 0
    %v387 = vperm.slane %v384, 1
    %v388 = vperm.slane %v384, 2
    %v389 = vperm.slane %v384, 3
    %394 = vmatpush.msra.mxu0 %v315
    %395 = vmatpush.msra.mxu0 %v311
    %396 = vmatpush.msra.mxu0 %v307
    %397 = vmatpush.msra.mxu0 %v303
    %398 = vmatpush.msra.mxu0 %v299
    %399 = vmatpush.msra.mxu0 %v295
    %400 = vmatpush.msra.mxu0 %v291
    %401 = vmatpush.msra.mxu0 %v287
    %402 = vmatpush.msra.mxu0 %v283
    %403 = vmatpush.msra.mxu0 %v279
    %404 = vmatpush.msra.mxu0 %v275
    %405 = vmatpush.msra.mxu0 %v271
    %406 = vmatpush.msra.mxu0 %v267
    %407 = vmatpush.msra.mxu0 %v263
    %408 = vmatpush.msra.mxu0 %v259
    %409 = vmatpush.msra.mxu0 %v255
    %410 = vmatmul.f32.gmra.mxu0 %v254
    %v411 = vpop.f32.mrf.mxu0
    %v412 = vadd.f32 %v386, %v411
    %413 = vdwg.mxu0
    %414 = vmatpush.msra.mxu0 %v316
    %415 = vmatpush.msra.mxu0 %v312
    %416 = vmatpush.msra.mxu0 %v308
    %417 = vmatpush.msra.mxu0 %v304
    %418 = vmatpush.msra.mxu0 %v300
    %419 = vmatpush.msra.mxu0 %v296
    %420 = vmatpush.msra.mxu0 %v292
    %421 = vmatpush.msra.mxu0 %v288
    %422 = vmatpush.msra.mxu0 %v284
    %423 = vmatpush.msra.mxu0 %v280
    %424 = vmatpush.msra.mxu0 %v276
    %425 = vmatpush.msra.mxu0 %v272
    %426 = vmatpush.msra.mxu0 %v268
    %427 = vmatpush.msra.mxu0 %v264
    %428 = vmatpush.msra.mxu0 %v260
    %429 = vmatpush.msra.mxu0 %v256
    %430 = vmatmul.f32.gmra.mxu0 %v254
    %v431 = vpop.f32.mrf.mxu0
    %v432 = vadd.f32 %v387, %v431
    %433 = vdwg.mxu0
    %434 = vmatpush.msra.mxu0 %v317
    %435 = vmatpush.msra.mxu0 %v313
    %436 = vmatpush.msra.mxu0 %v309
    %437 = vmatpush.msra.mxu0 %v305
    %438 = vmatpush.msra.mxu0 %v301
    %439 = vmatpush.msra.mxu0 %v297
    %440 = vmatpush.msra.mxu0 %v293
    %441 = vmatpush.msra.mxu0 %v289
    %442 = vmatpush.msra.mxu0 %v285
    %443 = vmatpush.msra.mxu0 %v281
    %444 = vmatpush.msra.mxu0 %v277
    %445 = vmatpush.msra.mxu0 %v273
    %446 = vmatpush.msra.mxu0 %v269
    %447 = vmatpush.msra.mxu0 %v265
    %448 = vmatpush.msra.mxu0 %v261
    %449 = vmatpush.msra.mxu0 %v257
    %450 = vmatmul.f32.gmra.mxu0 %v254
    %v451 = vpop.f32.mrf.mxu0
    %v452 = vadd.f32 %v388, %v451
    %453 = vdwg.mxu0
    %454 = vmatpush.msra.mxu0 %v318
    %455 = vmatpush.msra.mxu0 %v314
    %456 = vmatpush.msra.mxu0 %v310
    %457 = vmatpush.msra.mxu0 %v306
    %458 = vmatpush.msra.mxu0 %v302
    %459 = vmatpush.msra.mxu0 %v298
    %460 = vmatpush.msra.mxu0 %v294
    %461 = vmatpush.msra.mxu0 %v290
    %462 = vmatpush.msra.mxu0 %v286
    %463 = vmatpush.msra.mxu0 %v282
    %464 = vmatpush.msra.mxu0 %v278
    %465 = vmatpush.msra.mxu0 %v274
    %466 = vmatpush.msra.mxu0 %v270
    %467 = vmatpush.msra.mxu0 %v266
    %468 = vmatpush.msra.mxu0 %v262
    %469 = vmatpush.msra.mxu0 %v258
    %470 = vmatmul.f32.gmra.mxu0 %v254
    %v471 = vpop.f32.mrf.mxu0
    %v472 = vadd.f32 %v389, %v471
    %473 = vdwg.mxu0
    %474 = vmatpush.msra.mxu0 %v380
    %475 = vmatpush.msra.mxu0 %v376
    %476 = vmatpush.msra.mxu0 %v372
    %477 = vmatpush.msra.mxu0 %v368
    %478 = vmatpush.msra.mxu0 %v364
    %479 = vmatpush.msra.mxu0 %v360
    %480 = vmatpush.msra.mxu0 %v356
    %481 = vmatpush.msra.mxu0 %v352
    %482 = vmatpush.msra.mxu0 %v348
    %483 = vmatpush.msra.mxu0 %v344
    %484 = vmatpush.msra.mxu0 %v340
    %485 = vmatpush.msra.mxu0 %v336
    %486 = vmatpush.msra.mxu0 %v332
    %487 = vmatpush.msra.mxu0 %v328
    %488 = vmatpush.msra.mxu0 %v324
    %489 = vmatpush.msra.mxu0 %v320
    %490 = vmatmul.f32.gmra.mxu0 0.0
    %v491 = vpop.f32.mrf.mxu0
    %v492 = vadd.f32 0.0, %v491
    %493 = vdwg.mxu0
    %494 = vmatpush.msra.mxu0 %v381
    %495 = vmatpush.msra.mxu0 %v377
    %496 = vmatpush.msra.mxu0 %v373
    %497 = vmatpush.msra.mxu0 %v369
    %498 = vmatpush.msra.mxu0 %v365
    %499 = vmatpush.msra.mxu0 %v361
    %500 = vmatpush.msra.mxu0 %v357
    %501 = vmatpush.msra.mxu0 %v353
    %502 = vmatpush.msra.mxu0 %v349
    %503 = vmatpush.msra.mxu0 %v345
    %504 = vmatpush.msra.mxu0 %v341
    %505 = vmatpush.msra.mxu0 %v337
    %506 = vmatpush.msra.mxu0 %v333
    %507 = vmatpush.msra.mxu0 %v329
    %508 = vmatpush.msra.mxu0 %v325
    %509 = vmatpush.msra.mxu0 %v321
    %510 = vmatmul.f32.gmra.mxu0 0.0
    %v511 = vpop.f32.mrf.mxu0
    %v512 = vadd.f32 0.0, %v511
    %513 = vdwg.mxu0
    %514 = vmatpush.msra.mxu0 %v382
    %515 = vmatpush.msra.mxu0 %v378
    %516 = vmatpush.msra.mxu0 %v374
    %517 = vmatpush.msra.mxu0 %v370
    %518 = vmatpush.msra.mxu0 %v366
    %519 = vmatpush.msra.mxu0 %v362
    %520 = vmatpush.msra.mxu0 %v358
    %521 = vmatpush.msra.mxu0 %v354
    %522 = vmatpush.msra.mxu0 %v350
    %523 = vmatpush.msra.mxu0 %v346
    %524 = vmatpush.msra.mxu0 %v342
    %525 = vmatpush.msra.mxu0 %v338
    %526 = vmatpush.msra.mxu0 %v334
    %527 = vmatpush.msra.mxu0 %v330
    %528 = vmatpush.msra.mxu0 %v326
    %529 = vmatpush.msra.mxu0 %v322
    %530 = vmatmul.f32.gmra.mxu0 0.0
    %v531 = vpop.f32.mrf.mxu0
    %v532 = vadd.f32 0.0, %v531
    %533 = vdwg.mxu0
    %534 = vmatpush.msra.mxu0 %v383
    %535 = vmatpush.msra.mxu0 %v379
    %536 = vmatpush.msra.mxu0 %v375
    %537 = vmatpush.msra.mxu0 %v371
    %538 = vmatpush.msra.mxu0 %v367
    %539 = vmatpush.msra.mxu0 %v363
    %540 = vmatpush.msra.mxu0 %v359
    %541 = vmatpush.msra.mxu0 %v355
    %542 = vmatpush.msra.mxu0 %v351
    %543 = vmatpush.msra.mxu0 %v347
    %544 = vmatpush.msra.mxu0 %v343
    %545 = vmatpush.msra.mxu0 %v339
    %546 = vmatpush.msra.mxu0 %v335
    %547 = vmatpush.msra.mxu0 %v331
    %548 = vmatpush.msra.mxu0 %v327
    %549 = vmatpush.msra.mxu0 %v323
    %550 = vmatmul.f32.gmra.mxu0 0.0
    %v551 = vpop.f32.mrf.mxu0
    %v552 = vadd.f32 0.0, %v551
    %553 = vdwg.mxu0
    %v554 = vadd.f32 %v412, %v492
    %v555 = vadd.f32 %v432, %v512
    %v556 = vadd.f32 %v452, %v532
    %v557 = vadd.f32 %v472, %v552
    %v558 = vxor.u32 %v554, 2147483648
    %v559 = vmul.f32 %v558, 1.442695
    %v560 = vpow.pop %v559
    %v561 = vadd.f32 %v560, 1.0
    %v562 = vrcp.pop %v561
    %v563 = vmul.f32 %v561, %v562
    %v564 = vsub.f32 1.0, %v563
    %v565 = vmul.f32 %v562, %v564
    %v566 = vadd.f32 %v562, %v565
    %vm567 = vweird.f32 %v561
    %vm568 = vweird.f32 %v562
    %vm569 = vmor %vm567, %vm568
    %v570 = vsel %vm569, %v562, %v566
    %v571 = vand.u32 2147483647, %v561
    %vm572 = vcmp.eq.f32.partialorder %v571, 8.507059e+37
    %v573 = vand.u32 %v561, 2147483648
    %v574 = vor.u32 1.1754944e-38, %v573
    %v575 = vsel %vm572, %v574, %v570
    %v576 = vmul.f32 1.0, %v575
    %v577 = vxor.u32 %v555, 2147483648
    %v578 = vmul.f32 %v577, 1.442695
    %v579 = vpow.pop %v578
    %v580 = vadd.f32 %v579, 1.0
    %v581 = vrcp.pop %v580
    %v582 = vmul.f32 %v580, %v581
    %v583 = vsub.f32 1.0, %v582
    %v584 = vmul.f32 %v581, %v583
    %v585 = vadd.f32 %v581, %v584
    %vm586 = vweird.f32 %v580
    %vm587 = vweird.f32 %v581
    %vm588 = vmor %vm586, %vm587
    %v589 = vsel %vm588, %v581, %v585
    %v590 = vand.u32 2147483647, %v580
    %vm591 = vcmp.eq.f32.partialorder %v590, 8.507059e+37
    %v592 = vand.u32 %v580, 2147483648
    %v593 = vor.u32 1.1754944e-38, %v592
    %v594 = vsel %vm591, %v593, %v589
    %v595 = vmul.f32 1.0, %v594
    %v596 = vtanh.pop %v556
    %v597 = vxor.u32 %v557, 2147483648
    %v598 = vmul.f32 %v597, 1.442695
    %v599 = vpow.pop %v598
    %v600 = vadd.f32 %v599, 1.0
    %v601 = vrcp.pop %v600
    %v602 = vmul.f32 %v600, %v601
    %v603 = vsub.f32 1.0, %v602
    %v604 = vmul.f32 %v601, %v603
    %v605 = vadd.f32 %v601, %v604
    %vm606 = vweird.f32 %v600
    %vm607 = vweird.f32 %v601
    %vm608 = vmor %vm606, %vm607
    %v609 = vsel %vm608, %v601, %v605
    %v610 = vand.u32 2147483647, %v600
    %vm611 = vcmp.eq.f32.partialorder %v610, 8.507059e+37
    %v612 = vand.u32 %v600, 2147483648
    %v613 = vor.u32 1.1754944e-38, %v612
    %v614 = vsel %vm611, %v613, %v609
    %v615 = vmul.f32 1.0, %v614
    %v616 = vmul.f32 %v595, 0.0
    %v617 = vmul.f32 %v576, %v596
    %v618 = vadd.f32 %v616, %v617
    %v619 = vtanh.pop %v618
    %v620 = vmul.f32 %v615, %v619
    %621 = vmatpush.msra.mxu0 %v380
    %622 = vmatpush.msra.mxu0 %v376
    %623 = vmatpush.msra.mxu0 %v372
    %624 = vmatpush.msra.mxu0 %v368
    %625 = vmatpush.msra.mxu0 %v364
    %626 = vmatpush.msra.mxu0 %v360
    %627 = vmatpush.msra.mxu0 %v356
    %628 = vmatpush.msra.mxu0 %v352
    %629 = vmatpush.msra.mxu0 %v348
    %630 = vmatpush.msra.mxu0 %v344
    %631 = vmatpush.msra.mxu0 %v340
    %632 = vmatpush.msra.mxu0 %v336
    %633 = vmatpush.msra.mxu0 %v332
    %634 = vmatpush.msra.mxu0 %v328
    %635 = vmatpush.msra.mxu0 %v324
    %636 = vmatpush.msra.mxu0 %v320
    %637 = vmatmul.f32.gmra.mxu0 %v620
    %v638 = vpop.f32.mrf.mxu0
    %v639 = vadd.f32 0.0, %v638
    %640 = vdwg.mxu0
    %641 = vmatpush.msra.mxu0 %v381
    %642 = vmatpush.msra.mxu0 %v377
    %643 = vmatpush.msra.mxu0 %v373
    %644 = vmatpush.msra.mxu0 %v369
    %645 = vmatpush.msra.mxu0 %v365
    %646 = vmatpush.msra.mxu0 %v361
    %647 = vmatpush.msra.mxu0 %v357
    %648 = vmatpush.msra.mxu0 %v353
    %649 = vmatpush.msra.mxu0 %v349
    %650 = vmatpush.msra.mxu0 %v345
    %651 = vmatpush.msra.mxu0 %v341
    %652 = vmatpush.msra.mxu0 %v337
    %653 = vmatpush.msra.mxu0 %v333
    %654 = vmatpush.msra.mxu0 %v329
    %655 = vmatpush.msra.mxu0 %v325
    %656 = vmatpush.msra.mxu0 %v321
    %657 = vmatmul.f32.gmra.mxu0 %v620
    %v658 = vpop.f32.mrf.mxu0
    %v659 = vadd.f32 0.0, %v658
    %660 = vdwg.mxu0
    %661 = vmatpush.msra.mxu0 %v382
    %662 = vmatpush.msra.mxu0 %v378
    %663 = vmatpush.msra.mxu0 %v374
    %664 = vmatpush.msra.mxu0 %v370
    %665 = vmatpush.msra.mxu0 %v366
    %666 = vmatpush.msra.mxu0 %v362
    %667 = vmatpush.msra.mxu0 %v358
    %668 = vmatpush.msra.mxu0 %v354
    %669 = vmatpush.msra.mxu0 %v350
    %670 = vmatpush.msra.mxu0 %v346
    %671 = vmatpush.msra.mxu0 %v342
    %672 = vmatpush.msra.mxu0 %v338
    %673 = vmatpush.msra.mxu0 %v334
    %674 = vmatpush.msra.mxu0 %v330
    %675 = vmatpush.msra.mxu0 %v326
    %676 = vmatpush.msra.mxu0 %v322
    %677 = vmatmul.f32.gmra.mxu0 %v620
    %v678 = vpop.f32.mrf.mxu0
    %v679 = vadd.f32 0.0, %v678
    %680 = vdwg.mxu0
    %681 = vmatpush.msra.mxu0 %v383
    %682 = vmatpush.msra.mxu0 %v379
    %683 = vmatpush.msra.mxu0 %v375
    %684 = vmatpush.msra.mxu0 %v371
    %685 = vmatpush.msra.mxu0 %v367
    %686 = vmatpush.msra.mxu0 %v363
    %687 = vmatpush.msra.mxu0 %v359
    %688 = vmatpush.msra.mxu0 %v355
    %689 = vmatpush.msra.mxu0 %v351
    %690 = vmatpush.msra.mxu0 %v347
    %691 = vmatpush.msra.mxu0 %v343
    %692 = vmatpush.msra.mxu0 %v339
    %693 = vmatpush.msra.mxu0 %v335
    %694 = vmatpush.msra.mxu0 %v331
    %695 = vmatpush.msra.mxu0 %v327
    %696 = vmatpush.msra.mxu0 %v323
    %697 = vmatmul.f32.gmra.mxu0 %v620
    %v698 = vpop.f32.mrf.mxu0
    %v699 = vadd.f32 0.0, %v698
    %700 = vdwg.mxu0
    %v705 = vrot.slane %v639, 7
    %v706 = vrot.slane %v659, 7
    %v707 = vrot.slane %v679, 7
    %v708 = vrot.slane %v699, 7
    %v713 = vadd.f32 %v412, %v705
    %v714 = vadd.f32 %v432, %v706
    %v715 = vadd.f32 %v452, %v707
    %v716 = vadd.f32 %v472, %v708
    %v717 = vxor.u32 %v713, 2147483648
    %v718 = vmul.f32 %v717, 1.442695
    %v719 = vpow.pop %v718
    %v720 = vadd.f32 %v719, 1.0
    %v721 = vrcp.pop %v720
    %v722 = vmul.f32 %v720, %v721
    %v723 = vsub.f32 1.0, %v722
    %v724 = vmul.f32 %v721, %v723
    %v725 = vadd.f32 %v721, %v724
    %vm726 = vweird.f32 %v720
    %vm727 = vweird.f32 %v721
    %vm728 = vmor %vm726, %vm727
    %v729 = vsel %vm728, %v721, %v725
    %v730 = vand.u32 2147483647, %v720
    %vm731 = vcmp.eq.f32.partialorder %v730, 8.507059e+37
    %v732 = vand.u32 %v720, 2147483648
    %v733 = vor.u32 1.1754944e-38, %v732
    %v734 = vsel %vm731, %v733, %v729
    %v735 = vmul.f32 1.0, %v734
    %v736 = vxor.u32 %v714, 2147483648
    %v737 = vmul.f32 %v736, 1.442695
    %v738 = vpow.pop %v737
    %v739 = vadd.f32 %v738, 1.0
    %v740 = vrcp.pop %v739
    %v741 = vmul.f32 %v739, %v740
    %v742 = vsub.f32 1.0, %v741
    %v743 = vmul.f32 %v740, %v742
    %v744 = vadd.f32 %v740, %v743
    %vm745 = vweird.f32 %v739
    %vm746 = vweird.f32 %v740
    %vm747 = vmor %vm745, %vm746
    %v748 = vsel %vm747, %v740, %v744
    %v749 = vand.u32 2147483647, %v739
    %vm750 = vcmp.eq.f32.partialorder %v749, 8.507059e+37
    %v751 = vand.u32 %v739, 2147483648
    %v752 = vor.u32 1.1754944e-38, %v751
    %v753 = vsel %vm750, %v752, %v748
    %v754 = vmul.f32 1.0, %v753
    %v755 = vtanh.pop %v715
    %v756 = vxor.u32 %v716, 2147483648
    %v757 = vmul.f32 %v756, 1.442695
    %v758 = vpow.pop %v757
    %v759 = vadd.f32 %v758, 1.0
    %v760 = vrcp.pop %v759
    %v761 = vmul.f32 %v759, %v760
    %v762 = vsub.f32 1.0, %v761
    %v763 = vmul.f32 %v760, %v762
    %v764 = vadd.f32 %v760, %v763
    %vm765 = vweird.f32 %v759
    %vm766 = vweird.f32 %v760
    %vm767 = vmor %vm765, %vm766
    %v768 = vsel %vm767, %v760, %v764
    %v769 = vand.u32 2147483647, %v759
    %vm770 = vcmp.eq.f32.partialorder %v769, 8.507059e+37
    %v771 = vand.u32 %v759, 2147483648
    %v772 = vor.u32 1.1754944e-38, %v771
    %v773 = vsel %vm770, %v772, %v768
    %v774 = vmul.f32 1.0, %v773
    %v776 = vrot.slane %v618, 7
    %v778 = vmul.f32 %v754, %v776
    %v779 = vmul.f32 %v735, %v755
    %v780 = vadd.f32 %v778, %v779
    %v781 = vtanh.pop %v780
    %v782 = vmul.f32 %v774, %v781
    %v784 = vrot.slane %v782, 1
    %786 = vmatpush.msra.mxu0 %v380
    %787 = vmatpush.msra.mxu0 %v376
    %788 = vmatpush.msra.mxu0 %v372
    %789 = vmatpush.msra.mxu0 %v368
    %790 = vmatpush.msra.mxu0 %v364
    %791 = vmatpush.msra.mxu0 %v360
    %792 = vmatpush.msra.mxu0 %v356
    %793 = vmatpush.msra.mxu0 %v352
    %794 = vmatpush.msra.mxu0 %v348
    %795 = vmatpush.msra.mxu0 %v344
    %796 = vmatpush.msra.mxu0 %v340
    %797 = vmatpush.msra.mxu0 %v336
    %798 = vmatpush.msra.mxu0 %v332
    %799 = vmatpush.msra.mxu0 %v328
    %800 = vmatpush.msra.mxu0 %v324
    %801 = vmatpush.msra.mxu0 %v320
    %802 = vmatmul.f32.gmra.mxu0 %v784
    %v803 = vpop.f32.mrf.mxu0
    %v804 = vadd.f32 0.0, %v803
    %805 = vdwg.mxu0
    %806 = vmatpush.msra.mxu0 %v381
    %807 = vmatpush.msra.mxu0 %v377
    %808 = vmatpush.msra.mxu0 %v373
    %809 = vmatpush.msra.mxu0 %v369
    %810 = vmatpush.msra.mxu0 %v365
    %811 = vmatpush.msra.mxu0 %v361
    %812 = vmatpush.msra.mxu0 %v357
    %813 = vmatpush.msra.mxu0 %v353
    %814 = vmatpush.msra.mxu0 %v349
    %815 = vmatpush.msra.mxu0 %v345
    %816 = vmatpush.msra.mxu0 %v341
    %817 = vmatpush.msra.mxu0 %v337
    %818 = vmatpush.msra.mxu0 %v333
    %819 = vmatpush.msra.mxu0 %v329
    %820 = vmatpush.msra.mxu0 %v325
    %821 = vmatpush.msra.mxu0 %v321
    %822 = vmatmul.f32.gmra.mxu0 %v784
    %v823 = vpop.f32.mrf.mxu0
    %v824 = vadd.f32 0.0, %v823
    %825 = vdwg.mxu0
    %826 = vmatpush.msra.mxu0 %v382
    %827 = vmatpush.msra.mxu0 %v378
    %828 = vmatpush.msra.mxu0 %v374
    %829 = vmatpush.msra.mxu0 %v370
    %830 = vmatpush.msra.mxu0 %v366
    %831 = vmatpush.msra.mxu0 %v362
    %832 = vmatpush.msra.mxu0 %v358
    %833 = vmatpush.msra.mxu0 %v354
    %834 = vmatpush.msra.mxu0 %v350
    %835 = vmatpush.msra.mxu0 %v346
    %836 = vmatpush.msra.mxu0 %v342
    %837 = vmatpush.msra.mxu0 %v338
    %838 = vmatpush.msra.mxu0 %v334
    %839 = vmatpush.msra.mxu0 %v330
    %840 = vmatpush.msra.mxu0 %v326
    %841 = vmatpush.msra.mxu0 %v322
    %842 = vmatmul.f32.gmra.mxu0 %v784
    %v843 = vpop.f32.mrf.mxu0
    %v844 = vadd.f32 0.0, %v843
    %845 = vdwg.mxu0
    %846 = vmatpush.msra.mxu0 %v383
    %847 = vmatpush.msra.mxu0 %v379
    %848 = vmatpush.msra.mxu0 %v375
    %849 = vmatpush.msra.mxu0 %v371
    %850 = vmatpush.msra.mxu0 %v367
    %851 = vmatpush.msra.mxu0 %v363
    %852 = vmatpush.msra.mxu0 %v359
    %853 = vmatpush.msra.mxu0 %v355
    %854 = vmatpush.msra.mxu0 %v351
    %855 = vmatpush.msra.mxu0 %v347
    %856 = vmatpush.msra.mxu0 %v343
    %857 = vmatpush.msra.mxu0 %v339
    %858 = vmatpush.msra.mxu0 %v335
    %859 = vmatpush.msra.mxu0 %v331
    %860 = vmatpush.msra.mxu0 %v327
    %861 = vmatpush.msra.mxu0 %v323
    %862 = vmatmul.f32.gmra.mxu0 %v784
    %v863 = vpop.f32.mrf.mxu0
    %v864 = vadd.f32 0.0, %v863
    %865 = vdwg.mxu0
    %v870 = vrot.slane %v804, 6
    %v871 = vrot.slane %v824, 6
    %v872 = vrot.slane %v844, 6
    %v873 = vrot.slane %v864, 6
    %v878 = vadd.f32 %v412, %v870
    %v879 = vadd.f32 %v432, %v871
    %v880 = vadd.f32 %v452, %v872
    %v881 = vadd.f32 %v472, %v873
    %v882 = vxor.u32 %v878, 2147483648
    %v883 = vmul.f32 %v882, 1.442695
    %v884 = vpow.pop %v883
    %v885 = vadd.f32 %v884, 1.0
    %v886 = vrcp.pop %v885
    %v887 = vmul.f32 %v885, %v886
    %v888 = vsub.f32 1.0, %v887
    %v889 = vmul.f32 %v886, %v888
    %v890 = vadd.f32 %v886, %v889
    %vm891 = vweird.f32 %v885
    %vm892 = vweird.f32 %v886
    %vm893 = vmor %vm891, %vm892
    %v894 = vsel %vm893, %v886, %v890
    %v895 = vand.u32 2147483647, %v885
    %vm896 = vcmp.eq.f32.partialorder %v895, 8.507059e+37
    %v897 = vand.u32 %v885, 2147483648
    %v898 = vor.u32 1.1754944e-38, %v897
    %v899 = vsel %vm896, %v898, %v894
    %v900 = vmul.f32 1.0, %v899
    %v901 = vxor.u32 %v879, 2147483648
    %v902 = vmul.f32 %v901, 1.442695
    %v903 = vpow.pop %v902
    %v904 = vadd.f32 %v903, 1.0
    %v905 = vrcp.pop %v904
    %v906 = vmul.f32 %v904, %v905
    %v907 = vsub.f32 1.0, %v906
    %v908 = vmul.f32 %v905, %v907
    %v909 = vadd.f32 %v905, %v908
    %vm910 = vweird.f32 %v904
    %vm911 = vweird.f32 %v905
    %vm912 = vmor %vm910, %vm911
    %v913 = vsel %vm912, %v905, %v909
    %v914 = vand.u32 2147483647, %v904
    %vm915 = vcmp.eq.f32.partialorder %v914, 8.507059e+37
    %v916 = vand.u32 %v904, 2147483648
    %v917 = vor.u32 1.1754944e-38, %v916
    %v918 = vsel %vm915, %v917, %v913
    %v919 = vmul.f32 1.0, %v918
    %v920 = vtanh.pop %v880
    %v921 = vxor.u32 %v881, 2147483648
    %v922 = vmul.f32 %v921, 1.442695
    %v923 = vpow.pop %v922
    %v924 = vadd.f32 %v923, 1.0
    %v925 = vrcp.pop %v924
    %v926 = vmul.f32 %v924, %v925
    %v927 = vsub.f32 1.0, %v926
    %v928 = vmul.f32 %v925, %v927
    %v929 = vadd.f32 %v925, %v928
    %vm930 = vweird.f32 %v924
    %vm931 = vweird.f32 %v925
    %vm932 = vmor %vm930, %vm931
    %v933 = vsel %vm932, %v925, %v929
    %v934 = vand.u32 2147483647, %v924
    %vm935 = vcmp.eq.f32.partialorder %v934, 8.507059e+37
    %v936 = vand.u32 %v924, 2147483648
    %v937 = vor.u32 1.1754944e-38, %v936
    %v938 = vsel %vm935, %v937, %v933
    %v939 = vmul.f32 1.0, %v938
    %v941 = vrot.slane %v780, 7
    %v943 = vmul.f32 %v919, %v941
    %v944 = vmul.f32 %v900, %v920
    %v945 = vadd.f32 %v943, %v944
    %v946 = vtanh.pop %v945
    %v947 = vmul.f32 %v939, %v946
    %v949 = vrot.slane %v947, 2
    %951 = vmatpush.msra.mxu0 %v380
    %952 = vmatpush.msra.mxu0 %v376
    %953 = vmatpush.msra.mxu0 %v372
    %954 = vmatpush.msra.mxu0 %v368
    %955 = vmatpush.msra.mxu0 %v364
    %956 = vmatpush.msra.mxu0 %v360
    %957 = vmatpush.msra.mxu0 %v356
    %958 = vmatpush.msra.mxu0 %v352
    %959 = vmatpush.msra.mxu0 %v348
    %960 = vmatpush.msra.mxu0 %v344
    %961 = vmatpush.msra.mxu0 %v340
    %962 = vmatpush.msra.mxu0 %v336
    %963 = vmatpush.msra.mxu0 %v332
    %964 = vmatpush.msra.mxu0 %v328
    %965 = vmatpush.msra.mxu0 %v324
    %966 = vmatpush.msra.mxu0 %v320
    %967 = vmatmul.f32.gmra.mxu0 %v949
    %v968 = vpop.f32.mrf.mxu0
    %v969 = vadd.f32 0.0, %v968
    %970 = vdwg.mxu0
    %971 = vmatpush.msra.mxu0 %v381
    %972 = vmatpush.msra.mxu0 %v377
    %973 = vmatpush.msra.mxu0 %v373
    %974 = vmatpush.msra.mxu0 %v369
    %975 = vmatpush.msra.mxu0 %v365
    %976 = vmatpush.msra.mxu0 %v361
    %977 = vmatpush.msra.mxu0 %v357
    %978 = vmatpush.msra.mxu0 %v353
    %979 = vmatpush.msra.mxu0 %v349
    %980 = vmatpush.msra.mxu0 %v345
    %981 = vmatpush.msra.mxu0 %v341
    %982 = vmatpush.msra.mxu0 %v337
    %983 = vmatpush.msra.mxu0 %v333
    %984 = vmatpush.msra.mxu0 %v329
    %985 = vmatpush.msra.mxu0 %v325
    %986 = vmatpush.msra.mxu0 %v321
    %987 = vmatmul.f32.gmra.mxu0 %v949
    %v988 = vpop.f32.mrf.mxu0
    %v989 = vadd.f32 0.0, %v988
    %990 = vdwg.mxu0
    %991 = vmatpush.msra.mxu0 %v382
    %992 = vmatpush.msra.mxu0 %v378
    %993 = vmatpush.msra.mxu0 %v374
    %994 = vmatpush.msra.mxu0 %v370
    %995 = vmatpush.msra.mxu0 %v366
    %996 = vmatpush.msra.mxu0 %v362
    %997 = vmatpush.msra.mxu0 %v358
    %998 = vmatpush.msra.mxu0 %v354
    %999 = vmatpush.msra.mxu0 %v350
    %1000 = vmatpush.msra.mxu0 %v346
    %1001 = vmatpush.msra.mxu0 %v342
    %1002 = vmatpush.msra.mxu0 %v338
    %1003 = vmatpush.msra.mxu0 %v334
    %1004 = vmatpush.msra.mxu0 %v330
    %1005 = vmatpush.msra.mxu0 %v326
    %1006 = vmatpush.msra.mxu0 %v322
    %1007 = vmatmul.f32.gmra.mxu0 %v949
    %v1008 = vpop.f32.mrf.mxu0
    %v1009 = vadd.f32 0.0, %v1008
    %1010 = vdwg.mxu0
    %1011 = vmatpush.msra.mxu0 %v383
    %1012 = vmatpush.msra.mxu0 %v379
    %1013 = vmatpush.msra.mxu0 %v375
    %1014 = vmatpush.msra.mxu0 %v371
    %1015 = vmatpush.msra.mxu0 %v367
    %1016 = vmatpush.msra.mxu0 %v363
    %1017 = vmatpush.msra.mxu0 %v359
    %1018 = vmatpush.msra.mxu0 %v355
    %1019 = vmatpush.msra.mxu0 %v351
    %1020 = vmatpush.msra.mxu0 %v347
    %1021 = vmatpush.msra.mxu0 %v343
    %1022 = vmatpush.msra.mxu0 %v339
    %1023 = vmatpush.msra.mxu0 %v335
    %1024 = vmatpush.msra.mxu0 %v331
    %1025 = vmatpush.msra.mxu0 %v327
    %1026 = vmatpush.msra.mxu0 %v323
    %1027 = vmatmul.f32.gmra.mxu0 %v949
    %v1028 = vpop.f32.mrf.mxu0
    %v1029 = vadd.f32 0.0, %v1028
    %1030 = vdwg.mxu0
    %v1035 = vrot.slane %v969, 5
    %v1036 = vrot.slane %v989, 5
    %v1037 = vrot.slane %v1009, 5
    %v1038 = vrot.slane %v1029, 5
    %v1043 = vadd.f32 %v412, %v1035
    %v1044 = vadd.f32 %v432, %v1036
    %v1045 = vadd.f32 %v452, %v1037
    %v1046 = vadd.f32 %v472, %v1038
    %v1047 = vxor.u32 %v1043, 2147483648
    %v1048 = vmul.f32 %v1047, 1.442695
    %v1049 = vpow.pop %v1048
    %v1050 = vadd.f32 %v1049, 1.0
    %v1051 = vrcp.pop %v1050
    %v1052 = vmul.f32 %v1050, %v1051
    %v1053 = vsub.f32 1.0, %v1052
    %v1054 = vmul.f32 %v1051, %v1053
    %v1055 = vadd.f32 %v1051, %v1054
    %vm1056 = vweird.f32 %v1050
    %vm1057 = vweird.f32 %v1051
    %vm1058 = vmor %vm1056, %vm1057
    %v1059 = vsel %vm1058, %v1051, %v1055
    %v1060 = vand.u32 2147483647, %v1050
    %vm1061 = vcmp.eq.f32.partialorder %v1060, 8.507059e+37
    %v1062 = vand.u32 %v1050, 2147483648
    %v1063 = vor.u32 1.1754944e-38, %v1062
    %v1064 = vsel %vm1061, %v1063, %v1059
    %v1065 = vmul.f32 1.0, %v1064
    %v1066 = vxor.u32 %v1044, 2147483648
    %v1067 = vmul.f32 %v1066, 1.442695
    %v1068 = vpow.pop %v1067
    %v1069 = vadd.f32 %v1068, 1.0
    %v1070 = vrcp.pop %v1069
    %v1071 = vmul.f32 %v1069, %v1070
    %v1072 = vsub.f32 1.0, %v1071
    %v1073 = vmul.f32 %v1070, %v1072
    %v1074 = vadd.f32 %v1070, %v1073
    %vm1075 = vweird.f32 %v1069
    %vm1076 = vweird.f32 %v1070
    %vm1077 = vmor %vm1075, %vm1076
    %v1078 = vsel %vm1077, %v1070, %v1074
    %v1079 = vand.u32 2147483647, %v1069
    %vm1080 = vcmp.eq.f32.partialorder %v1079, 8.507059e+37
    %v1081 = vand.u32 %v1069, 2147483648
    %v1082 = vor.u32 1.1754944e-38, %v1081
    %v1083 = vsel %vm1080, %v1082, %v1078
    %v1084 = vmul.f32 1.0, %v1083
    %v1085 = vtanh.pop %v1045
    %v1086 = vxor.u32 %v1046, 2147483648
    %v1087 = vmul.f32 %v1086, 1.442695
    %v1088 = vpow.pop %v1087
    %v1089 = vadd.f32 %v1088, 1.0
    %v1090 = vrcp.pop %v1089
    %v1091 = vmul.f32 %v1089, %v1090
    %v1092 = vsub.f32 1.0, %v1091
    %v1093 = vmul.f32 %v1090, %v1092
    %v1094 = vadd.f32 %v1090, %v1093
    %vm1095 = vweird.f32 %v1089
    %vm1096 = vweird.f32 %v1090
    %vm1097 = vmor %vm1095, %vm1096
    %v1098 = vsel %vm1097, %v1090, %v1094
    %v1099 = vand.u32 2147483647, %v1089
    %vm1100 = vcmp.eq.f32.partialorder %v1099, 8.507059e+37
    %v1101 = vand.u32 %v1089, 2147483648
    %v1102 = vor.u32 1.1754944e-38, %v1101
    %v1103 = vsel %vm1100, %v1102, %v1098
    %v1104 = vmul.f32 1.0, %v1103
    %v1106 = vrot.slane %v945, 7
    %v1108 = vmul.f32 %v1084, %v1106
    %v1109 = vmul.f32 %v1065, %v1085
    %v1110 = vadd.f32 %v1108, %v1109
    %v1111 = vtanh.pop %v1110
    %v1112 = vmul.f32 %v1104, %v1111
    %v1114 = vrot.slane %v1112, 3
    %1116 = vmatpush.msra.mxu0 %v380
    %1117 = vmatpush.msra.mxu0 %v376
    %1118 = vmatpush.msra.mxu0 %v372
    %1119 = vmatpush.msra.mxu0 %v368
    %1120 = vmatpush.msra.mxu0 %v364
    %1121 = vmatpush.msra.mxu0 %v360
    %1122 = vmatpush.msra.mxu0 %v356
    %1123 = vmatpush.msra.mxu0 %v352
    %1124 = vmatpush.msra.mxu0 %v348
    %1125 = vmatpush.msra.mxu0 %v344
    %1126 = vmatpush.msra.mxu0 %v340
    %1127 = vmatpush.msra.mxu0 %v336
    %1128 = vmatpush.msra.mxu0 %v332
    %1129 = vmatpush.msra.mxu0 %v328
    %1130 = vmatpush.msra.mxu0 %v324
    %1131 = vmatpush.msra.mxu0 %v320
    %1132 = vmatmul.f32.gmra.mxu0 %v1114
    %v1133 = vpop.f32.mrf.mxu0
    %v1134 = vadd.f32 0.0, %v1133
    %1135 = vdwg.mxu0
    %1136 = vmatpush.msra.mxu0 %v381
    %1137 = vmatpush.msra.mxu0 %v377
    %1138 = vmatpush.msra.mxu0 %v373
    %1139 = vmatpush.msra.mxu0 %v369
    %1140 = vmatpush.msra.mxu0 %v365
    %1141 = vmatpush.msra.mxu0 %v361
    %1142 = vmatpush.msra.mxu0 %v357
    %1143 = vmatpush.msra.mxu0 %v353
    %1144 = vmatpush.msra.mxu0 %v349
    %1145 = vmatpush.msra.mxu0 %v345
    %1146 = vmatpush.msra.mxu0 %v341
    %1147 = vmatpush.msra.mxu0 %v337
    %1148 = vmatpush.msra.mxu0 %v333
    %1149 = vmatpush.msra.mxu0 %v329
    %1150 = vmatpush.msra.mxu0 %v325
    %1151 = vmatpush.msra.mxu0 %v321
    %1152 = vmatmul.f32.gmra.mxu0 %v1114
    %v1153 = vpop.f32.mrf.mxu0
    %v1154 = vadd.f32 0.0, %v1153
    %1155 = vdwg.mxu0
    %1156 = vmatpush.msra.mxu0 %v382
    %1157 = vmatpush.msra.mxu0 %v378
    %1158 = vmatpush.msra.mxu0 %v374
    %1159 = vmatpush.msra.mxu0 %v370
    %1160 = vmatpush.msra.mxu0 %v366
    %1161 = vmatpush.msra.mxu0 %v362
    %1162 = vmatpush.msra.mxu0 %v358
    %1163 = vmatpush.msra.mxu0 %v354
    %1164 = vmatpush.msra.mxu0 %v350
    %1165 = vmatpush.msra.mxu0 %v346
    %1166 = vmatpush.msra.mxu0 %v342
    %1167 = vmatpush.msra.mxu0 %v338
    %1168 = vmatpush.msra.mxu0 %v334
    %1169 = vmatpush.msra.mxu0 %v330
    %1170 = vmatpush.msra.mxu0 %v326
    %1171 = vmatpush.msra.mxu0 %v322
    %1172 = vmatmul.f32.gmra.mxu0 %v1114
    %v1173 = vpop.f32.mrf.mxu0
    %v1174 = vadd.f32 0.0, %v1173
    %1175 = vdwg.mxu0
    %1176 = vmatpush.msra.mxu0 %v383
    %1177 = vmatpush.msra.mxu0 %v379
    %1178 = vmatpush.msra.mxu0 %v375
    %1179 = vmatpush.msra.mxu0 %v371
    %1180 = vmatpush.msra.mxu0 %v367
    %1181 = vmatpush.msra.mxu0 %v363
    %1182 = vmatpush.msra.mxu0 %v359
    %1183 = vmatpush.msra.mxu0 %v355
    %1184 = vmatpush.msra.mxu0 %v351
    %1185 = vmatpush.msra.mxu0 %v347
    %1186 = vmatpush.msra.mxu0 %v343
    %1187 = vmatpush.msra.mxu0 %v339
    %1188 = vmatpush.msra.mxu0 %v335
    %1189 = vmatpush.msra.mxu0 %v331
    %1190 = vmatpush.msra.mxu0 %v327
    %1191 = vmatpush.msra.mxu0 %v323
    %1192 = vmatmul.f32.gmra.mxu0 %v1114
    %v1193 = vpop.f32.mrf.mxu0
    %v1194 = vadd.f32 0.0, %v1193
    %1195 = vdwg.mxu0
    %v1200 = vrot.slane %v1134, 4
    %v1201 = vrot.slane %v1154, 4
    %v1202 = vrot.slane %v1174, 4
    %v1203 = vrot.slane %v1194, 4
    %v1208 = vadd.f32 %v412, %v1200
    %v1209 = vadd.f32 %v432, %v1201
    %v1210 = vadd.f32 %v452, %v1202
    %v1211 = vadd.f32 %v472, %v1203
    %v1212 = vxor.u32 %v1208, 2147483648
    %v1213 = vmul.f32 %v1212, 1.442695
    %v1214 = vpow.pop %v1213
    %v1215 = vadd.f32 %v1214, 1.0
    %v1216 = vrcp.pop %v1215
    %v1217 = vmul.f32 %v1215, %v1216
    %v1218 = vsub.f32 1.0, %v1217
    %v1219 = vmul.f32 %v1216, %v1218
    %v1220 = vadd.f32 %v1216, %v1219
    %vm1221 = vweird.f32 %v1215
    %vm1222 = vweird.f32 %v1216
    %vm1223 = vmor %vm1221, %vm1222
    %v1224 = vsel %vm1223, %v1216, %v1220
    %v1225 = vand.u32 2147483647, %v1215
    %vm1226 = vcmp.eq.f32.partialorder %v1225, 8.507059e+37
    %v1227 = vand.u32 %v1215, 2147483648
    %v1228 = vor.u32 1.1754944e-38, %v1227
    %v1229 = vsel %vm1226, %v1228, %v1224
    %v1230 = vmul.f32 1.0, %v1229
    %v1231 = vxor.u32 %v1209, 2147483648
    %v1232 = vmul.f32 %v1231, 1.442695
    %v1233 = vpow.pop %v1232
    %v1234 = vadd.f32 %v1233, 1.0
    %v1235 = vrcp.pop %v1234
    %v1236 = vmul.f32 %v1234, %v1235
    %v1237 = vsub.f32 1.0, %v1236
    %v1238 = vmul.f32 %v1235, %v1237
    %v1239 = vadd.f32 %v1235, %v1238
    %vm1240 = vweird.f32 %v1234
    %vm1241 = vweird.f32 %v1235
    %vm1242 = vmor %vm1240, %vm1241
    %v1243 = vsel %vm1242, %v1235, %v1239
    %v1244 = vand.u32 2147483647, %v1234
    %vm1245 = vcmp.eq.f32.partialorder %v1244, 8.507059e+37
    %v1246 = vand.u32 %v1234, 2147483648
    %v1247 = vor.u32 1.1754944e-38, %v1246
    %v1248 = vsel %vm1245, %v1247, %v1243
    %v1249 = vmul.f32 1.0, %v1248
    %v1250 = vtanh.pop %v1210
    %v1251 = vxor.u32 %v1211, 2147483648
    %v1252 = vmul.f32 %v1251, 1.442695
    %v1253 = vpow.pop %v1252
    %v1254 = vadd.f32 %v1253, 1.0
    %v1255 = vrcp.pop %v1254
    %v1256 = vmul.f32 %v1254, %v1255
    %v1257 = vsub.f32 1.0, %v1256
    %v1258 = vmul.f32 %v1255, %v1257
    %v1259 = vadd.f32 %v1255, %v1258
    %vm1260 = vweird.f32 %v1254
    %vm1261 = vweird.f32 %v1255
    %vm1262 = vmor %vm1260, %vm1261
    %v1263 = vsel %vm1262, %v1255, %v1259
    %v1264 = vand.u32 2147483647, %v1254
    %vm1265 = vcmp.eq.f32.partialorder %v1264, 8.507059e+37
    %v1266 = vand.u32 %v1254, 2147483648
    %v1267 = vor.u32 1.1754944e-38, %v1266
    %v1268 = vsel %vm1265, %v1267, %v1263
    %v1269 = vmul.f32 1.0, %v1268
    %v1271 = vrot.slane %v1110, 7
    %v1273 = vmul.f32 %v1249, %v1271
    %v1274 = vmul.f32 %v1230, %v1250
    %v1275 = vadd.f32 %v1273, %v1274
    %v1276 = vtanh.pop %v1275
    %v1277 = vmul.f32 %v1269, %v1276
    %v1279 = vrot.slane %v1277, 4
    %1281 = vmatpush.msra.mxu0 %v380
    %1282 = vmatpush.msra.mxu0 %v376
    %1283 = vmatpush.msra.mxu0 %v372
    %1284 = vmatpush.msra.mxu0 %v368
    %1285 = vmatpush.msra.mxu0 %v364
    %1286 = vmatpush.msra.mxu0 %v360
    %1287 = vmatpush.msra.mxu0 %v356
    %1288 = vmatpush.msra.mxu0 %v352
    %1289 = vmatpush.msra.mxu0 %v348
    %1290 = vmatpush.msra.mxu0 %v344
    %1291 = vmatpush.msra.mxu0 %v340
    %1292 = vmatpush.msra.mxu0 %v336
    %1293 = vmatpush.msra.mxu0 %v332
    %1294 = vmatpush.msra.mxu0 %v328
    %1295 = vmatpush.msra.mxu0 %v324
    %1296 = vmatpush.msra.mxu0 %v320
    %1297 = vmatmul.f32.gmra.mxu0 %v1279
    %v1298 = vpop.f32.mrf.mxu0
    %v1299 = vadd.f32 0.0, %v1298
    %1300 = vdwg.mxu0
    %1301 = vmatpush.msra.mxu0 %v381
    %1302 = vmatpush.msra.mxu0 %v377
    %1303 = vmatpush.msra.mxu0 %v373
    %1304 = vmatpush.msra.mxu0 %v369
    %1305 = vmatpush.msra.mxu0 %v365
    %1306 = vmatpush.msra.mxu0 %v361
    %1307 = vmatpush.msra.mxu0 %v357
    %1308 = vmatpush.msra.mxu0 %v353
    %1309 = vmatpush.msra.mxu0 %v349
    %1310 = vmatpush.msra.mxu0 %v345
    %1311 = vmatpush.msra.mxu0 %v341
    %1312 = vmatpush.msra.mxu0 %v337
    %1313 = vmatpush.msra.mxu0 %v333
    %1314 = vmatpush.msra.mxu0 %v329
    %1315 = vmatpush.msra.mxu0 %v325
    %1316 = vmatpush.msra.mxu0 %v321
    %1317 = vmatmul.f32.gmra.mxu0 %v1279
    %v1318 = vpop.f32.mrf.mxu0
    %v1319 = vadd.f32 0.0, %v1318
    %1320 = vdwg.mxu0
    %1321 = vmatpush.msra.mxu0 %v382
    %1322 = vmatpush.msra.mxu0 %v378
    %1323 = vmatpush.msra.mxu0 %v374
    %1324 = vmatpush.msra.mxu0 %v370
    %1325 = vmatpush.msra.mxu0 %v366
    %1326 = vmatpush.msra.mxu0 %v362
    %1327 = vmatpush.msra.mxu0 %v358
    %1328 = vmatpush.msra.mxu0 %v354
    %1329 = vmatpush.msra.mxu0 %v350
    %1330 = vmatpush.msra.mxu0 %v346
    %1331 = vmatpush.msra.mxu0 %v342
    %1332 = vmatpush.msra.mxu0 %v338
    %1333 = vmatpush.msra.mxu0 %v334
    %1334 = vmatpush.msra.mxu0 %v330
    %1335 = vmatpush.msra.mxu0 %v326
    %1336 = vmatpush.msra.mxu0 %v322
    %1337 = vmatmul.f32.gmra.mxu0 %v1279
    %v1338 = vpop.f32.mrf.mxu0
    %v1339 = vadd.f32 0.0, %v1338
    %1340 = vdwg.mxu0
    %1341 = vmatpush.msra.mxu0 %v383
    %1342 = vmatpush.msra.mxu0 %v379
    %1343 = vmatpush.msra.mxu0 %v375
    %1344 = vmatpush.msra.mxu0 %v371
    %1345 = vmatpush.msra.mxu0 %v367
    %1346 = vmatpush.msra.mxu0 %v363
    %1347 = vmatpush.msra.mxu0 %v359
    %1348 = vmatpush.msra.mxu0 %v355
    %1349 = vmatpush.msra.mxu0 %v351
    %1350 = vmatpush.msra.mxu0 %v347
    %1351 = vmatpush.msra.mxu0 %v343
    %1352 = vmatpush.msra.mxu0 %v339
    %1353 = vmatpush.msra.mxu0 %v335
    %1354 = vmatpush.msra.mxu0 %v331
    %1355 = vmatpush.msra.mxu0 %v327
    %1356 = vmatpush.msra.mxu0 %v323
    %1357 = vmatmul.f32.gmra.mxu0 %v1279
    %v1358 = vpop.f32.mrf.mxu0
    %v1359 = vadd.f32 0.0, %v1358
    %1360 = vdwg.mxu0
    %v1365 = vrot.slane %v1299, 3
    %v1366 = vrot.slane %v1319, 3
    %v1367 = vrot.slane %v1339, 3
    %v1368 = vrot.slane %v1359, 3
    %v1373 = vadd.f32 %v412, %v1365
    %v1374 = vadd.f32 %v432, %v1366
    %v1375 = vadd.f32 %v452, %v1367
    %v1376 = vadd.f32 %v472, %v1368
    %v1377 = vxor.u32 %v1373, 2147483648
    %v1378 = vmul.f32 %v1377, 1.442695
    %v1379 = vpow.pop %v1378
    %v1380 = vadd.f32 %v1379, 1.0
    %v1381 = vrcp.pop %v1380
    %v1382 = vmul.f32 %v1380, %v1381
    %v1383 = vsub.f32 1.0, %v1382
    %v1384 = vmul.f32 %v1381, %v1383
    %v1385 = vadd.f32 %v1381, %v1384
    %vm1386 = vweird.f32 %v1380
    %vm1387 = vweird.f32 %v1381
    %vm1388 = vmor %vm1386, %vm1387
    %v1389 = vsel %vm1388, %v1381, %v1385
    %v1390 = vand.u32 2147483647, %v1380
    %vm1391 = vcmp.eq.f32.partialorder %v1390, 8.507059e+37
    %v1392 = vand.u32 %v1380, 2147483648
    %v1393 = vor.u32 1.1754944e-38, %v1392
    %v1394 = vsel %vm1391, %v1393, %v1389
    %v1395 = vmul.f32 1.0, %v1394
    %v1396 = vxor.u32 %v1374, 2147483648
    %v1397 = vmul.f32 %v1396, 1.442695
    %v1398 = vpow.pop %v1397
    %v1399 = vadd.f32 %v1398, 1.0
    %v1400 = vrcp.pop %v1399
    %v1401 = vmul.f32 %v1399, %v1400
    %v1402 = vsub.f32 1.0, %v1401
    %v1403 = vmul.f32 %v1400, %v1402
    %v1404 = vadd.f32 %v1400, %v1403
    %vm1405 = vweird.f32 %v1399
    %vm1406 = vweird.f32 %v1400
    %vm1407 = vmor %vm1405, %vm1406
    %v1408 = vsel %vm1407, %v1400, %v1404
    %v1409 = vand.u32 2147483647, %v1399
    %vm1410 = vcmp.eq.f32.partialorder %v1409, 8.507059e+37
    %v1411 = vand.u32 %v1399, 2147483648
    %v1412 = vor.u32 1.1754944e-38, %v1411
    %v1413 = vsel %vm1410, %v1412, %v1408
    %v1414 = vmul.f32 1.0, %v1413
    %v1415 = vtanh.pop %v1375
    %v1416 = vxor.u32 %v1376, 2147483648
    %v1417 = vmul.f32 %v1416, 1.442695
    %v1418 = vpow.pop %v1417
    %v1419 = vadd.f32 %v1418, 1.0
    %v1420 = vrcp.pop %v1419
    %v1421 = vmul.f32 %v1419, %v1420
    %v1422 = vsub.f32 1.0, %v1421
    %v1423 = vmul.f32 %v1420, %v1422
    %v1424 = vadd.f32 %v1420, %v1423
    %vm1425 = vweird.f32 %v1419
    %vm1426 = vweird.f32 %v1420
    %vm1427 = vmor %vm1425, %vm1426
    %v1428 = vsel %vm1427, %v1420, %v1424
    %v1429 = vand.u32 2147483647, %v1419
    %vm1430 = vcmp.eq.f32.partialorder %v1429, 8.507059e+37
    %v1431 = vand.u32 %v1419, 2147483648
    %v1432 = vor.u32 1.1754944e-38, %v1431
    %v1433 = vsel %vm1430, %v1432, %v1428
    %v1434 = vmul.f32 1.0, %v1433
    %v1436 = vrot.slane %v1275, 7
    %v1438 = vmul.f32 %v1414, %v1436
    %v1439 = vmul.f32 %v1395, %v1415
    %v1440 = vadd.f32 %v1438, %v1439
    %v1441 = vtanh.pop %v1440
    %v1442 = vmul.f32 %v1434, %v1441
    %v1444 = vrot.slane %v1442, 5
    %1446 = vmatpush.msra.mxu0 %v380
    %1447 = vmatpush.msra.mxu0 %v376
    %1448 = vmatpush.msra.mxu0 %v372
    %1449 = vmatpush.msra.mxu0 %v368
    %1450 = vmatpush.msra.mxu0 %v364
    %1451 = vmatpush.msra.mxu0 %v360
    %1452 = vmatpush.msra.mxu0 %v356
    %1453 = vmatpush.msra.mxu0 %v352
    %1454 = vmatpush.msra.mxu0 %v348
    %1455 = vmatpush.msra.mxu0 %v344
    %1456 = vmatpush.msra.mxu0 %v340
    %1457 = vmatpush.msra.mxu0 %v336
    %1458 = vmatpush.msra.mxu0 %v332
    %1459 = vmatpush.msra.mxu0 %v328
    %1460 = vmatpush.msra.mxu0 %v324
    %1461 = vmatpush.msra.mxu0 %v320
    %1462 = vmatmul.f32.gmra.mxu0 %v1444
    %v1463 = vpop.f32.mrf.mxu0
    %v1464 = vadd.f32 0.0, %v1463
    %1465 = vdwg.mxu0
    %1466 = vmatpush.msra.mxu0 %v381
    %1467 = vmatpush.msra.mxu0 %v377
    %1468 = vmatpush.msra.mxu0 %v373
    %1469 = vmatpush.msra.mxu0 %v369
    %1470 = vmatpush.msra.mxu0 %v365
    %1471 = vmatpush.msra.mxu0 %v361
    %1472 = vmatpush.msra.mxu0 %v357
    %1473 = vmatpush.msra.mxu0 %v353
    %1474 = vmatpush.msra.mxu0 %v349
    %1475 = vmatpush.msra.mxu0 %v345
    %1476 = vmatpush.msra.mxu0 %v341
    %1477 = vmatpush.msra.mxu0 %v337
    %1478 = vmatpush.msra.mxu0 %v333
    %1479 = vmatpush.msra.mxu0 %v329
    %1480 = vmatpush.msra.mxu0 %v325
    %1481 = vmatpush.msra.mxu0 %v321
    %1482 = vmatmul.f32.gmra.mxu0 %v1444
    %v1483 = vpop.f32.mrf.mxu0
    %v1484 = vadd.f32 0.0, %v1483
    %1485 = vdwg.mxu0
    %1486 = vmatpush.msra.mxu0 %v382
    %1487 = vmatpush.msra.mxu0 %v378
    %1488 = vmatpush.msra.mxu0 %v374
    %1489 = vmatpush.msra.mxu0 %v370
    %1490 = vmatpush.msra.mxu0 %v366
    %1491 = vmatpush.msra.mxu0 %v362
    %1492 = vmatpush.msra.mxu0 %v358
    %1493 = vmatpush.msra.mxu0 %v354
    %1494 = vmatpush.msra.mxu0 %v350
    %1495 = vmatpush.msra.mxu0 %v346
    %1496 = vmatpush.msra.mxu0 %v342
    %1497 = vmatpush.msra.mxu0 %v338
    %1498 = vmatpush.msra.mxu0 %v334
    %1499 = vmatpush.msra.mxu0 %v330
    %1500 = vmatpush.msra.mxu0 %v326
    %1501 = vmatpush.msra.mxu0 %v322
    %1502 = vmatmul.f32.gmra.mxu0 %v1444
    %v1503 = vpop.f32.mrf.mxu0
    %v1504 = vadd.f32 0.0, %v1503
    %1505 = vdwg.mxu0
    %1506 = vmatpush.msra.mxu0 %v383
    %1507 = vmatpush.msra.mxu0 %v379
    %1508 = vmatpush.msra.mxu0 %v375
    %1509 = vmatpush.msra.mxu0 %v371
    %1510 = vmatpush.msra.mxu0 %v367
    %1511 = vmatpush.msra.mxu0 %v363
    %1512 = vmatpush.msra.mxu0 %v359
    %1513 = vmatpush.msra.mxu0 %v355
    %1514 = vmatpush.msra.mxu0 %v351
    %1515 = vmatpush.msra.mxu0 %v347
    %1516 = vmatpush.msra.mxu0 %v343
    %1517 = vmatpush.msra.mxu0 %v339
    %1518 = vmatpush.msra.mxu0 %v335
    %1519 = vmatpush.msra.mxu0 %v331
    %1520 = vmatpush.msra.mxu0 %v327
    %1521 = vmatpush.msra.mxu0 %v323
    %1522 = vmatmul.f32.gmra.mxu0 %v1444
    %v1523 = vpop.f32.mrf.mxu0
    %v1524 = vadd.f32 0.0, %v1523
    %1525 = vdwg.mxu0
    %v1530 = vrot.slane %v1464, 2
    %v1531 = vrot.slane %v1484, 2
    %v1532 = vrot.slane %v1504, 2
    %v1533 = vrot.slane %v1524, 2
    %v1538 = vadd.f32 %v412, %v1530
    %v1539 = vadd.f32 %v432, %v1531
    %v1540 = vadd.f32 %v452, %v1532
    %v1541 = vadd.f32 %v472, %v1533
    %v1542 = vxor.u32 %v1538, 2147483648
    %v1543 = vmul.f32 %v1542, 1.442695
    %v1544 = vpow.pop %v1543
    %v1545 = vadd.f32 %v1544, 1.0
    %v1546 = vrcp.pop %v1545
    %v1547 = vmul.f32 %v1545, %v1546
    %v1548 = vsub.f32 1.0, %v1547
    %v1549 = vmul.f32 %v1546, %v1548
    %v1550 = vadd.f32 %v1546, %v1549
    %vm1551 = vweird.f32 %v1545
    %vm1552 = vweird.f32 %v1546
    %vm1553 = vmor %vm1551, %vm1552
    %v1554 = vsel %vm1553, %v1546, %v1550
    %v1555 = vand.u32 2147483647, %v1545
    %vm1556 = vcmp.eq.f32.partialorder %v1555, 8.507059e+37
    %v1557 = vand.u32 %v1545, 2147483648
    %v1558 = vor.u32 1.1754944e-38, %v1557
    %v1559 = vsel %vm1556, %v1558, %v1554
    %v1560 = vmul.f32 1.0, %v1559
    %v1561 = vxor.u32 %v1539, 2147483648
    %v1562 = vmul.f32 %v1561, 1.442695
    %v1563 = vpow.pop %v1562
    %v1564 = vadd.f32 %v1563, 1.0
    %v1565 = vrcp.pop %v1564
    %v1566 = vmul.f32 %v1564, %v1565
    %v1567 = vsub.f32 1.0, %v1566
    %v1568 = vmul.f32 %v1565, %v1567
    %v1569 = vadd.f32 %v1565, %v1568
    %vm1570 = vweird.f32 %v1564
    %vm1571 = vweird.f32 %v1565
    %vm1572 = vmor %vm1570, %vm1571
    %v1573 = vsel %vm1572, %v1565, %v1569
    %v1574 = vand.u32 2147483647, %v1564
    %vm1575 = vcmp.eq.f32.partialorder %v1574, 8.507059e+37
    %v1576 = vand.u32 %v1564, 2147483648
    %v1577 = vor.u32 1.1754944e-38, %v1576
    %v1578 = vsel %vm1575, %v1577, %v1573
    %v1579 = vmul.f32 1.0, %v1578
    %v1580 = vtanh.pop %v1540
    %v1581 = vxor.u32 %v1541, 2147483648
    %v1582 = vmul.f32 %v1581, 1.442695
    %v1583 = vpow.pop %v1582
    %v1584 = vadd.f32 %v1583, 1.0
    %v1585 = vrcp.pop %v1584
    %v1586 = vmul.f32 %v1584, %v1585
    %v1587 = vsub.f32 1.0, %v1586
    %v1588 = vmul.f32 %v1585, %v1587
    %v1589 = vadd.f32 %v1585, %v1588
    %vm1590 = vweird.f32 %v1584
    %vm1591 = vweird.f32 %v1585
    %vm1592 = vmor %vm1590, %vm1591
    %v1593 = vsel %vm1592, %v1585, %v1589
    %v1594 = vand.u32 2147483647, %v1584
    %vm1595 = vcmp.eq.f32.partialorder %v1594, 8.507059e+37
    %v1596 = vand.u32 %v1584, 2147483648
    %v1597 = vor.u32 1.1754944e-38, %v1596
    %v1598 = vsel %vm1595, %v1597, %v1593
    %v1599 = vmul.f32 1.0, %v1598
    %v1601 = vrot.slane %v1440, 7
    %v1603 = vmul.f32 %v1579, %v1601
    %v1604 = vmul.f32 %v1560, %v1580
    %v1605 = vadd.f32 %v1603, %v1604
    %v1606 = vtanh.pop %v1605
    %v1607 = vmul.f32 %v1599, %v1606
    %v1609 = vrot.slane %v1607, 6
    %1611 = vmatpush.msra.mxu0 %v380
    %1612 = vmatpush.msra.mxu0 %v376
    %1613 = vmatpush.msra.mxu0 %v372
    %1614 = vmatpush.msra.mxu0 %v368
    %1615 = vmatpush.msra.mxu0 %v364
    %1616 = vmatpush.msra.mxu0 %v360
    %1617 = vmatpush.msra.mxu0 %v356
    %1618 = vmatpush.msra.mxu0 %v352
    %1619 = vmatpush.msra.mxu0 %v348
    %1620 = vmatpush.msra.mxu0 %v344
    %1621 = vmatpush.msra.mxu0 %v340
    %1622 = vmatpush.msra.mxu0 %v336
    %1623 = vmatpush.msra.mxu0 %v332
    %1624 = vmatpush.msra.mxu0 %v328
    %1625 = vmatpush.msra.mxu0 %v324
    %1626 = vmatpush.msra.mxu0 %v320
    %1627 = vmatmul.f32.gmra.mxu0 %v1609
    %v1628 = vpop.f32.mrf.mxu0
    %v1629 = vadd.f32 0.0, %v1628
    %1630 = vdwg.mxu0
    %1631 = vmatpush.msra.mxu0 %v381
    %1632 = vmatpush.msra.mxu0 %v377
    %1633 = vmatpush.msra.mxu0 %v373
    %1634 = vmatpush.msra.mxu0 %v369
    %1635 = vmatpush.msra.mxu0 %v365
    %1636 = vmatpush.msra.mxu0 %v361
    %1637 = vmatpush.msra.mxu0 %v357
    %1638 = vmatpush.msra.mxu0 %v353
    %1639 = vmatpush.msra.mxu0 %v349
    %1640 = vmatpush.msra.mxu0 %v345
    %1641 = vmatpush.msra.mxu0 %v341
    %1642 = vmatpush.msra.mxu0 %v337
    %1643 = vmatpush.msra.mxu0 %v333
    %1644 = vmatpush.msra.mxu0 %v329
    %1645 = vmatpush.msra.mxu0 %v325
    %1646 = vmatpush.msra.mxu0 %v321
    %1647 = vmatmul.f32.gmra.mxu0 %v1609
    %v1648 = vpop.f32.mrf.mxu0
    %v1649 = vadd.f32 0.0, %v1648
    %1650 = vdwg.mxu0
    %1651 = vmatpush.msra.mxu0 %v382
    %1652 = vmatpush.msra.mxu0 %v378
    %1653 = vmatpush.msra.mxu0 %v374
    %1654 = vmatpush.msra.mxu0 %v370
    %1655 = vmatpush.msra.mxu0 %v366
    %1656 = vmatpush.msra.mxu0 %v362
    %1657 = vmatpush.msra.mxu0 %v358
    %1658 = vmatpush.msra.mxu0 %v354
    %1659 = vmatpush.msra.mxu0 %v350
    %1660 = vmatpush.msra.mxu0 %v346
    %1661 = vmatpush.msra.mxu0 %v342
    %1662 = vmatpush.msra.mxu0 %v338
    %1663 = vmatpush.msra.mxu0 %v334
    %1664 = vmatpush.msra.mxu0 %v330
    %1665 = vmatpush.msra.mxu0 %v326
    %1666 = vmatpush.msra.mxu0 %v322
    %1667 = vmatmul.f32.gmra.mxu0 %v1609
    %v1668 = vpop.f32.mrf.mxu0
    %v1669 = vadd.f32 0.0, %v1668
    %1670 = vdwg.mxu0
    %1671 = vmatpush.msra.mxu0 %v383
    %1672 = vmatpush.msra.mxu0 %v379
    %1673 = vmatpush.msra.mxu0 %v375
    %1674 = vmatpush.msra.mxu0 %v371
    %1675 = vmatpush.msra.mxu0 %v367
    %1676 = vmatpush.msra.mxu0 %v363
    %1677 = vmatpush.msra.mxu0 %v359
    %1678 = vmatpush.msra.mxu0 %v355
    %1679 = vmatpush.msra.mxu0 %v351
    %1680 = vmatpush.msra.mxu0 %v347
    %1681 = vmatpush.msra.mxu0 %v343
    %1682 = vmatpush.msra.mxu0 %v339
    %1683 = vmatpush.msra.mxu0 %v335
    %1684 = vmatpush.msra.mxu0 %v331
    %1685 = vmatpush.msra.mxu0 %v327
    %1686 = vmatpush.msra.mxu0 %v323
    %1687 = vmatmul.f32.gmra.mxu0 %v1609
    %v1688 = vpop.f32.mrf.mxu0
    %v1689 = vadd.f32 0.0, %v1688
    %1690 = vdwg.mxu0
    %v1695 = vrot.slane %v1629, 1
    %v1696 = vrot.slane %v1649, 1
    %v1697 = vrot.slane %v1669, 1
    %v1698 = vrot.slane %v1689, 1
    %v1703 = vadd.f32 %v412, %v1695
    %v1704 = vadd.f32 %v432, %v1696
    %v1705 = vadd.f32 %v452, %v1697
    %v1706 = vadd.f32 %v472, %v1698
    %v1707 = vxor.u32 %v1703, 2147483648
    %v1708 = vmul.f32 %v1707, 1.442695
    %v1709 = vpow.pop %v1708
    %v1710 = vadd.f32 %v1709, 1.0
    %v1711 = vrcp.pop %v1710
    %v1712 = vmul.f32 %v1710, %v1711
    %v1713 = vsub.f32 1.0, %v1712
    %v1714 = vmul.f32 %v1711, %v1713
    %v1715 = vadd.f32 %v1711, %v1714
    %vm1716 = vweird.f32 %v1710
    %vm1717 = vweird.f32 %v1711
    %vm1718 = vmor %vm1716, %vm1717
    %v1719 = vsel %vm1718, %v1711, %v1715
    %v1720 = vand.u32 2147483647, %v1710
    %vm1721 = vcmp.eq.f32.partialorder %v1720, 8.507059e+37
    %v1722 = vand.u32 %v1710, 2147483648
    %v1723 = vor.u32 1.1754944e-38, %v1722
    %v1724 = vsel %vm1721, %v1723, %v1719
    %v1725 = vmul.f32 1.0, %v1724
    %v1726 = vxor.u32 %v1704, 2147483648
    %v1727 = vmul.f32 %v1726, 1.442695
    %v1728 = vpow.pop %v1727
    %v1729 = vadd.f32 %v1728, 1.0
    %v1730 = vrcp.pop %v1729
    %v1731 = vmul.f32 %v1729, %v1730
    %v1732 = vsub.f32 1.0, %v1731
    %v1733 = vmul.f32 %v1730, %v1732
    %v1734 = vadd.f32 %v1730, %v1733
    %vm1735 = vweird.f32 %v1729
    %vm1736 = vweird.f32 %v1730
    %vm1737 = vmor %vm1735, %vm1736
    %v1738 = vsel %vm1737, %v1730, %v1734
    %v1739 = vand.u32 2147483647, %v1729
    %vm1740 = vcmp.eq.f32.partialorder %v1739, 8.507059e+37
    %v1741 = vand.u32 %v1729, 2147483648
    %v1742 = vor.u32 1.1754944e-38, %v1741
    %v1743 = vsel %vm1740, %v1742, %v1738
    %v1744 = vmul.f32 1.0, %v1743
    %v1745 = vtanh.pop %v1705
    %v1746 = vxor.u32 %v1706, 2147483648
    %v1747 = vmul.f32 %v1746, 1.442695
    %v1748 = vpow.pop %v1747
    %v1749 = vadd.f32 %v1748, 1.0
    %v1750 = vrcp.pop %v1749
    %v1751 = vmul.f32 %v1749, %v1750
    %v1752 = vsub.f32 1.0, %v1751
    %v1753 = vmul.f32 %v1750, %v1752
    %v1754 = vadd.f32 %v1750, %v1753
    %vm1755 = vweird.f32 %v1749
    %vm1756 = vweird.f32 %v1750
    %vm1757 = vmor %vm1755, %vm1756
    %v1758 = vsel %vm1757, %v1750, %v1754
    %v1759 = vand.u32 2147483647, %v1749
    %vm1760 = vcmp.eq.f32.partialorder %v1759, 8.507059e+37
    %v1761 = vand.u32 %v1749, 2147483648
    %v1762 = vor.u32 1.1754944e-38, %v1761
    %v1763 = vsel %vm1760, %v1762, %v1758
    %v1764 = vmul.f32 1.0, %v1763
    %v1766 = vrot.slane %v1605, 7
    %v1768 = vmul.f32 %v1744, %v1766
    %v1769 = vmul.f32 %v1725, %v1745
    %v1770 = vadd.f32 %v1768, %v1769
    %v1771 = vtanh.pop %v1770
    %v1772 = vmul.f32 %v1764, %v1771
    %vm1773 = vcmask 1040384
    %v1774 = vsel %vm1773, %v620, %v782
    %vm1775 = vcmask 1041408
    %v1776 = vsel %vm1775, %v1774, %v947
    %vm1777 = vcmask 1042432
    %v1778 = vsel %vm1777, %v1776, %v1112
    %vm1779 = vcmask 1043456
    %v1780 = vsel %vm1779, %v1778, %v1277
    %vm1781 = vcmask 1044480
    %v1782 = vsel %vm1781, %v1780, %v1442
    %vm1783 = vcmask 1045504
    %v1784 = vsel %vm1783, %v1782, %v1607
    %vm1785 = vcmask 1046528
    %v1786 = vsel %vm1785, %v1784, %v1772
    %v1787 = vxor.u32 %v1786, 2147483648
    %v1788 = vmul.f32 %v1787, 1.442695
    %v1789 = vpow.pop %v1788
    %v1790 = vadd.f32 %v1789, 1.0
    %v1791 = vrcp.pop %v1790
    %v1792 = vmul.f32 %v1790, %v1791
    %v1793 = vsub.f32 1.0, %v1792
    %v1794 = vmul.f32 %v1791, %v1793
    %v1795 = vadd.f32 %v1791, %v1794
    %vm1796 = vweird.f32 %v1790
    %vm1797 = vweird.f32 %v1791
    %vm1798 = vmor %vm1796, %vm1797
    %v1799 = vsel %vm1798, %v1791, %v1795
    %v1800 = vand.u32 2147483647, %v1790
    %vm1801 = vcmp.eq.f32.partialorder %v1800, 8.507059e+37
    %v1802 = vand.u32 %v1790, 2147483648
    %v1803 = vor.u32 1.1754944e-38, %v1802
    %v1804 = vsel %vm1801, %v1803, %v1799
    %v1805 = vmul.f32 1.0, %v1804
    %s1806 = scalar_lea.vmem [#allocation5], 1408
    %v1807 = vld [vmem:[%s1806] sm:$0xff]
    %s1808 = scalar_lea.vmem [#allocation7], 11
    %v1809 = vld [vmem:[%s1808] sm:$0x1]
    %v1811 = vperm.slane %v1809, 0
    %v1814 = vsel %vm107, %v1805, 0
    %1816 = vmatpush.msra.mxu0 0.0
    %1817 = vmatpush.msra.mxu0 0.0
    %1818 = vmatpush.msra.mxu0 0.0
    %1819 = vmatpush.msra.mxu0 0.0
    %1820 = vmatpush.msra.mxu0 0.0
    %1821 = vmatpush.msra.mxu0 0.0
    %1822 = vmatpush.msra.mxu0 0.0
    %1823 = vmatpush.msra.mxu0 0.0
    %1824 = vmatpush.msra.mxu0 0.0
    %1825 = vmatpush.msra.mxu0 0.0
    %1826 = vmatpush.msra.mxu0 0.0
    %1827 = vmatpush.msra.mxu0 0.0
    %1828 = vmatpush.msra.mxu0 0.0
    %1829 = vmatpush.msra.mxu0 0.0
    %1830 = vmatpush.msra.mxu0 0.0
    %1831 = vmatpush.msra.mxu0 %v1807
    %1832 = vmatmul.f32.gmra.mxu0 %v1814
    %v1833 = vpop.f32.mrf.mxu0
    %v1834 = vadd.f32 %v1811, %v1833
    %1835 = vdwg.mxu0
    %v1836 = vxor.u32 %v1834, 2147483648
    %v1837 = vmul.f32 %v1836, 1.442695
    %v1838 = vpow.pop %v1837
    %v1839 = vadd.f32 %v1838, 1.0
    %v1840 = vrcp.pop %v1839
    %v1841 = vmul.f32 %v1839, %v1840
    %v1842 = vsub.f32 1.0, %v1841
    %v1843 = vmul.f32 %v1840, %v1842
    %v1844 = vadd.f32 %v1840, %v1843
    %vm1845 = vweird.f32 %v1839
    %vm1846 = vweird.f32 %v1840
    %vm1847 = vmor %vm1845, %vm1846
    %v1848 = vsel %vm1847, %v1840, %v1844
    %v1849 = vand.u32 2147483647, %v1839
    %vm1850 = vcmp.eq.f32.partialorder %v1849, 8.507059e+37
    %v1851 = vand.u32 %v1839, 2147483648
    %v1852 = vor.u32 1.1754944e-38, %v1851
    %v1853 = vsel %vm1850, %v1852, %v1848
    %v1854 = vmul.f32 1.0, %v1853
    %s1855 = scalar_lea.vmem [#allocation5], 1536
    %v1856 = vld [vmem:[%s1855] sm:$0xff]
    %v1857 = vld [vmem:[%s1855 + $0x8] sm:$0xff]
    %v1858 = vld [vmem:[%s1855 + $0x10] sm:$0xff]
    %v1859 = vld [vmem:[%s1855 + $0x18] sm:$0xff]
    %v1860 = vld [vmem:[%s1855 + $0x20] sm:$0xff]
    %v1861 = vld [vmem:[%s1855 + $0x28] sm:$0xff]
    %v1862 = vld [vmem:[%s1855 + $0x30] sm:$0xff]
    %v1863 = vld [vmem:[%s1855 + $0x38] sm:$0xff]
    %v1864 = vld [vmem:[%s1855 + $0x40] sm:$0xff]
    %v1865 = vld [vmem:[%s1855 + $0x48] sm:$0xff]
    %v1866 = vld [vmem:[%s1855 + $0x50] sm:$0xff]
    %v1867 = vld [vmem:[%s1855 + $0x58] sm:$0xff]
    %v1868 = vld [vmem:[%s1855 + $0x60] sm:$0xff]
    %v1869 = vld [vmem:[%s1855 + $0x68] sm:$0xff]
    %v1870 = vld [vmem:[%s1855 + $0x70] sm:$0xff]
    %v1871 = vld [vmem:[%s1855 + $0x78] sm:$0xff]
    %s1872 = scalar_lea.vmem [#allocation7], 12
    %v1873 = vld [vmem:[%s1872] sm:$0x1]
    %v1875 = vperm.slane %v1873, 0
    %1877 = vmatpush.msra.mxu0 %v1871
    %1878 = vmatpush.msra.mxu0 %v1870
    %1879 = vmatpush.msra.mxu0 %v1869
    %1880 = vmatpush.msra.mxu0 %v1868
    %1881 = vmatpush.msra.mxu0 %v1867
    %1882 = vmatpush.msra.mxu0 %v1866
    %1883 = vmatpush.msra.mxu0 %v1865
    %1884 = vmatpush.msra.mxu0 %v1864
    %1885 = vmatpush.msra.mxu0 %v1863
    %1886 = vmatpush.msra.mxu0 %v1862
    %1887 = vmatpush.msra.mxu0 %v1861
    %1888 = vmatpush.msra.mxu0 %v1860
    %1889 = vmatpush.msra.mxu0 %v1859
    %1890 = vmatpush.msra.mxu0 %v1858
    %1891 = vmatpush.msra.mxu0 %v1857
    %1892 = vmatpush.msra.mxu0 %v1856
    %1893 = vmatmul.f32.gmra.mxu0 %v1854
    %v1894 = vpop.f32.mrf.mxu0
    %v1895 = vadd.f32 %v1875, %v1894
    %1896 = vdwg.mxu0
    %v1897 = vxor.u32 %v1895, 2147483648
    %v1898 = vmul.f32 %v1897, 1.442695
    %v1899 = vpow.pop %v1898
    %v1900 = vadd.f32 %v1899, 1.0
    %v1901 = vrcp.pop %v1900
    %v1902 = vmul.f32 %v1900, %v1901
    %v1903 = vsub.f32 1.0, %v1902
    %v1904 = vmul.f32 %v1901, %v1903
    %v1905 = vadd.f32 %v1901, %v1904
    %vm1906 = vweird.f32 %v1900
    %vm1907 = vweird.f32 %v1901
    %vm1908 = vmor %vm1906, %vm1907
    %v1909 = vsel %vm1908, %v1901, %v1905
    %v1910 = vand.u32 2147483647, %v1900
    %vm1911 = vcmp.eq.f32.partialorder %v1910, 8.507059e+37
    %v1912 = vand.u32 %v1900, 2147483648
    %v1913 = vor.u32 1.1754944e-38, %v1912
    %v1914 = vsel %vm1911, %v1913, %v1909
    %v1915 = vmul.f32 1.0, %v1914
    %s1916 = scalar_lea.vmem [#allocation5], 1664
    %v1917 = vld [vmem:[%s1916] sm:$0xff]
    %v1918 = vld [vmem:[%s1916 + $0x8] sm:$0xff]
    %v1919 = vld [vmem:[%s1916 + $0x10] sm:$0xff]
    %v1920 = vld [vmem:[%s1916 + $0x18] sm:$0xff]
    %v1921 = vld [vmem:[%s1916 + $0x20] sm:$0xff]
    %v1922 = vld [vmem:[%s1916 + $0x28] sm:$0xff]
    %v1923 = vld [vmem:[%s1916 + $0x30] sm:$0xff]
    %v1924 = vld [vmem:[%s1916 + $0x38] sm:$0xff]
    %v1925 = vld [vmem:[%s1916 + $0x40] sm:$0xff]
    %v1926 = vld [vmem:[%s1916 + $0x48] sm:$0xff]
    %v1927 = vld [vmem:[%s1916 + $0x50] sm:$0xff]
    %v1928 = vld [vmem:[%s1916 + $0x58] sm:$0xff]
    %v1929 = vld [vmem:[%s1916 + $0x60] sm:$0xff]
    %v1930 = vld [vmem:[%s1916 + $0x68] sm:$0xff]
    %v1931 = vld [vmem:[%s1916 + $0x70] sm:$0xff]
    %v1932 = vld [vmem:[%s1916 + $0x78] sm:$0xff]
    %s1933 = scalar_lea.vmem [#allocation7], 13
    %v1934 = vld [vmem:[%s1933] sm:$0x1]
    %v1936 = vperm.slane %v1934, 0
    %1938 = vmatpush.msra.mxu0 %v1932
    %1939 = vmatpush.msra.mxu0 %v1931
    %1940 = vmatpush.msra.mxu0 %v1930
    %1941 = vmatpush.msra.mxu0 %v1929
    %1942 = vmatpush.msra.mxu0 %v1928
    %1943 = vmatpush.msra.mxu0 %v1927
    %1944 = vmatpush.msra.mxu0 %v1926
    %1945 = vmatpush.msra.mxu0 %v1925
    %1946 = vmatpush.msra.mxu0 %v1924
    %1947 = vmatpush.msra.mxu0 %v1923
    %1948 = vmatpush.msra.mxu0 %v1922
    %1949 = vmatpush.msra.mxu0 %v1921
    %1950 = vmatpush.msra.mxu0 %v1920
    %1951 = vmatpush.msra.mxu0 %v1919
    %1952 = vmatpush.msra.mxu0 %v1918
    %1953 = vmatpush.msra.mxu0 %v1917
    %1954 = vmatmul.f32.gmra.mxu0 %v1915
    %v1955 = vpop.f32.mrf.mxu0
    %v1956 = vadd.f32 %v1936, %v1955
    %1957 = vdwg.mxu0
    %s1958 = scalar_lea.vmem [#allocation5], 384
    %v1959 = vld [vmem:[%s1958] sm:$0xff]
    %s1960 = scalar_lea.vmem [#allocation7], 3
    %v1961 = vld [vmem:[%s1960] sm:$0x1]
    %v1963 = vperm.slane %v1961, 0
    %v1966 = vsel %vm107, %v254, 0
    %1968 = vmatpush.msra.mxu0 0.0
    %1969 = vmatpush.msra.mxu0 0.0
    %1970 = vmatpush.msra.mxu0 0.0
    %1971 = vmatpush.msra.mxu0 0.0
    %1972 = vmatpush.msra.mxu0 0.0
    %1973 = vmatpush.msra.mxu0 0.0
    %1974 = vmatpush.msra.mxu0 0.0
    %1975 = vmatpush.msra.mxu0 0.0
    %1976 = vmatpush.msra.mxu0 0.0
    %1977 = vmatpush.msra.mxu0 0.0
    %1978 = vmatpush.msra.mxu0 0.0
    %1979 = vmatpush.msra.mxu0 0.0
    %1980 = vmatpush.msra.mxu0 0.0
    %1981 = vmatpush.msra.mxu0 0.0
    %1982 = vmatpush.msra.mxu0 0.0
    %1983 = vmatpush.msra.mxu0 %v1959
    %1984 = vmatmul.f32.gmra.mxu0 %v1966
    %v1985 = vpop.f32.mrf.mxu0
    %v1986 = vadd.f32 %v1963, %v1985
    %1987 = vdwg.mxu0
    %v1988 = vxor.u32 %v1986, 2147483648
    %v1989 = vmul.f32 %v1988, 1.442695
    %v1990 = vpow.pop %v1989
    %v1991 = vadd.f32 %v1990, 1.0
    %v1992 = vrcp.pop %v1991
    %v1993 = vmul.f32 %v1991, %v1992
    %v1994 = vsub.f32 1.0, %v1993
    %v1995 = vmul.f32 %v1992, %v1994
    %v1996 = vadd.f32 %v1992, %v1995
    %vm1997 = vweird.f32 %v1991
    %vm1998 = vweird.f32 %v1992
    %vm1999 = vmor %vm1997, %vm1998
    %v2000 = vsel %vm1999, %v1992, %v1996
    %v2001 = vand.u32 2147483647, %v1991
    %vm2002 = vcmp.eq.f32.partialorder %v2001, 8.507059e+37
    %v2003 = vand.u32 %v1991, 2147483648
    %v2004 = vor.u32 1.1754944e-38, %v2003
    %v2005 = vsel %vm2002, %v2004, %v2000
    %v2006 = vmul.f32 1.0, %v2005
    %s2007 = scalar_lea.vmem [#allocation5], 512
    %v2008 = vld [vmem:[%s2007] sm:$0xff]
    %v2009 = vld [vmem:[%s2007 + $0x8] sm:$0xff]
    %v2010 = vld [vmem:[%s2007 + $0x10] sm:$0xff]
    %v2011 = vld [vmem:[%s2007 + $0x18] sm:$0xff]
    %v2012 = vld [vmem:[%s2007 + $0x20] sm:$0xff]
    %v2013 = vld [vmem:[%s2007 + $0x28] sm:$0xff]
    %v2014 = vld [vmem:[%s2007 + $0x30] sm:$0xff]
    %v2015 = vld [vmem:[%s2007 + $0x38] sm:$0xff]
    %v2016 = vld [vmem:[%s2007 + $0x40] sm:$0xff]
    %v2017 = vld [vmem:[%s2007 + $0x48] sm:$0xff]
    %v2018 = vld [vmem:[%s2007 + $0x50] sm:$0xff]
    %v2019 = vld [vmem:[%s2007 + $0x58] sm:$0xff]
    %v2020 = vld [vmem:[%s2007 + $0x60] sm:$0xff]
    %v2021 = vld [vmem:[%s2007 + $0x68] sm:$0xff]
    %v2022 = vld [vmem:[%s2007 + $0x70] sm:$0xff]
    %v2023 = vld [vmem:[%s2007 + $0x78] sm:$0xff]
    %s2024 = scalar_lea.vmem [#allocation7], 4
    %v2025 = vld [vmem:[%s2024] sm:$0x1]
    %v2027 = vperm.slane %v2025, 0
    %2029 = vmatpush.msra.mxu0 %v2023
    %2030 = vmatpush.msra.mxu0 %v2022
    %2031 = vmatpush.msra.mxu0 %v2021
    %2032 = vmatpush.msra.mxu0 %v2020
    %2033 = vmatpush.msra.mxu0 %v2019
    %2034 = vmatpush.msra.mxu0 %v2018
    %2035 = vmatpush.msra.mxu0 %v2017
    %2036 = vmatpush.msra.mxu0 %v2016
    %2037 = vmatpush.msra.mxu0 %v2015
    %2038 = vmatpush.msra.mxu0 %v2014
    %2039 = vmatpush.msra.mxu0 %v2013
    %2040 = vmatpush.msra.mxu0 %v2012
    %2041 = vmatpush.msra.mxu0 %v2011
    %2042 = vmatpush.msra.mxu0 %v2010
    %2043 = vmatpush.msra.mxu0 %v2009
    %2044 = vmatpush.msra.mxu0 %v2008
    %2045 = vmatmul.f32.gmra.mxu0 %v2006
    %v2046 = vpop.f32.mrf.mxu0
    %v2047 = vadd.f32 %v2027, %v2046
    %2048 = vdwg.mxu0
    %v2049 = vxor.u32 %v2047, 2147483648
    %v2050 = vmul.f32 %v2049, 1.442695
    %v2051 = vpow.pop %v2050
    %v2052 = vadd.f32 %v2051, 1.0
    %v2053 = vrcp.pop %v2052
    %v2054 = vmul.f32 %v2052, %v2053
    %v2055 = vsub.f32 1.0, %v2054
    %v2056 = vmul.f32 %v2053, %v2055
    %v2057 = vadd.f32 %v2053, %v2056
    %vm2058 = vweird.f32 %v2052
    %vm2059 = vweird.f32 %v2053
    %vm2060 = vmor %vm2058, %vm2059
    %v2061 = vsel %vm2060, %v2053, %v2057
    %v2062 = vand.u32 2147483647, %v2052
    %vm2063 = vcmp.eq.f32.partialorder %v2062, 8.507059e+37
    %v2064 = vand.u32 %v2052, 2147483648
    %v2065 = vor.u32 1.1754944e-38, %v2064
    %v2066 = vsel %vm2063, %v2065, %v2061
    %v2067 = vmul.f32 1.0, %v2066
    %s2068 = scalar_lea.vmem [#allocation5], 640
    %v2069 = vld [vmem:[%s2068] sm:$0xff]
    %v2070 = vld [vmem:[%s2068 + $0x8] sm:$0xff]
    %v2071 = vld [vmem:[%s2068 + $0x10] sm:$0xff]
    %v2072 = vld [vmem:[%s2068 + $0x18] sm:$0xff]
    %v2073 = vld [vmem:[%s2068 + $0x20] sm:$0xff]
    %v2074 = vld [vmem:[%s2068 + $0x28] sm:$0xff]
    %v2075 = vld [vmem:[%s2068 + $0x30] sm:$0xff]
    %v2076 = vld [vmem:[%s2068 + $0x38] sm:$0xff]
    %v2077 = vld [vmem:[%s2068 + $0x40] sm:$0xff]
    %v2078 = vld [vmem:[%s2068 + $0x48] sm:$0xff]
    %v2079 = vld [vmem:[%s2068 + $0x50] sm:$0xff]
    %v2080 = vld [vmem:[%s2068 + $0x58] sm:$0xff]
    %v2081 = vld [vmem:[%s2068 + $0x60] sm:$0xff]
    %v2082 = vld [vmem:[%s2068 + $0x68] sm:$0xff]
    %v2083 = vld [vmem:[%s2068 + $0x70] sm:$0xff]
    %v2084 = vld [vmem:[%s2068 + $0x78] sm:$0xff]
    %s2085 = scalar_lea.vmem [#allocation7], 5
    %v2086 = vld [vmem:[%s2085] sm:$0x1]
    %v2088 = vperm.slane %v2086, 0
    %2090 = vmatpush.msra.mxu0 %v2084
    %2091 = vmatpush.msra.mxu0 %v2083
    %2092 = vmatpush.msra.mxu0 %v2082
    %2093 = vmatpush.msra.mxu0 %v2081
    %2094 = vmatpush.msra.mxu0 %v2080
    %2095 = vmatpush.msra.mxu0 %v2079
    %2096 = vmatpush.msra.mxu0 %v2078
    %2097 = vmatpush.msra.mxu0 %v2077
    %2098 = vmatpush.msra.mxu0 %v2076
    %2099 = vmatpush.msra.mxu0 %v2075
    %2100 = vmatpush.msra.mxu0 %v2074
    %2101 = vmatpush.msra.mxu0 %v2073
    %2102 = vmatpush.msra.mxu0 %v2072
    %2103 = vmatpush.msra.mxu0 %v2071
    %2104 = vmatpush.msra.mxu0 %v2070
    %2105 = vmatpush.msra.mxu0 %v2069
    %2106 = vmatmul.f32.gmra.mxu0 %v2067
    %v2107 = vpop.f32.mrf.mxu0
    %v2108 = vadd.f32 %v2088, %v2107
    %2109 = vdwg.mxu0
    %2110 = vxpose.xlu0.b32.start [1/16] %v254, 128
    %2111 = vxpose.xlu0.b32.cont [2/16] 0.0, 128
    %2112 = vxpose.xlu0.b32.cont [3/16] 0.0, 128
    %2113 = vxpose.xlu0.b32.cont [4/16] 0.0, 128
    %2114 = vxpose.xlu0.b32.cont [5/16] 0.0, 128
    %2115 = vxpose.xlu0.b32.cont [6/16] 0.0, 128
    %2116 = vxpose.xlu0.b32.cont [7/16] 0.0, 128
    %2117 = vxpose.xlu0.b32.cont [8/16] 0.0, 128
    %2118 = vxpose.xlu0.b32.cont [9/16] 0.0, 128
    %2119 = vxpose.xlu0.b32.cont [10/16] 0.0, 128
    %2120 = vxpose.xlu0.b32.cont [11/16] 0.0, 128
    %2121 = vxpose.xlu0.b32.cont [12/16] 0.0, 128
    %2122 = vxpose.xlu0.b32.cont [13/16] 0.0, 128
    %2123 = vxpose.xlu0.b32.cont [14/16] 0.0, 128
    %2124 = vxpose.xlu0.b32.cont [15/16] 0.0, 128
    %2125 = vxpose.xlu0.b32.end [16/16] 0.0, 128
    %v2126 = vpop.trf.xlu0
    %v2127 = vpop.trf.xlu0
    %v2128 = vpop.trf.xlu0
    %v2129 = vpop.trf.xlu0
    %v2130 = vpop.trf.xlu0
    %v2131 = vpop.trf.xlu0
    %v2132 = vpop.trf.xlu0
    %v2133 = vpop.trf.xlu0
    %v2134 = vpop.trf.xlu0
    %v2135 = vpop.trf.xlu0
    %v2136 = vpop.trf.xlu0
    %v2137 = vpop.trf.xlu0
    %v2138 = vpop.trf.xlu0
    %v2139 = vpop.trf.xlu0
    %v2140 = vpop.trf.xlu0
    %v2141 = vpop.trf.xlu0
    %s2142 = scalar_lea.vmem [#allocation5], 768
    %v2143 = vld [vmem:[%s2142] sm:$0xff]
    %s2144 = scalar_lea.vmem [#allocation7], 6
    %v2145 = vld [vmem:[%s2144] sm:$0x1]
    %v2147 = vperm.slane %v2145, 0
    %v2150 = vsel %vm107, %v2126, 0
    %2152 = vmatpush.msra.mxu0 0.0
    %2153 = vmatpush.msra.mxu0 0.0
    %2154 = vmatpush.msra.mxu0 0.0
    %2155 = vmatpush.msra.mxu0 0.0
    %2156 = vmatpush.msra.mxu0 0.0
    %2157 = vmatpush.msra.mxu0 0.0
    %2158 = vmatpush.msra.mxu0 0.0
    %2159 = vmatpush.msra.mxu0 0.0
    %2160 = vmatpush.msra.mxu0 0.0
    %2161 = vmatpush.msra.mxu0 0.0
    %2162 = vmatpush.msra.mxu0 0.0
    %2163 = vmatpush.msra.mxu0 0.0
    %2164 = vmatpush.msra.mxu0 0.0
    %2165 = vmatpush.msra.mxu0 0.0
    %2166 = vmatpush.msra.mxu0 0.0
    %2167 = vmatpush.msra.mxu0 %v2143
    %2168 = vmatmul.f32.gmra.mxu0 %v2150
    %v2169 = vpop.f32.mrf.mxu0
    %v2170 = vadd.f32 %v2147, %v2169
    %2171 = vdwg.mxu0
    %v2172 = vxor.u32 %v2170, 2147483648
    %v2173 = vmul.f32 %v2172, 1.442695
    %v2174 = vpow.pop %v2173
    %v2175 = vadd.f32 %v2174, 1.0
    %v2176 = vrcp.pop %v2175
    %v2177 = vmul.f32 %v2175, %v2176
    %v2178 = vsub.f32 1.0, %v2177
    %v2179 = vmul.f32 %v2176, %v2178
    %v2180 = vadd.f32 %v2176, %v2179
    %vm2181 = vweird.f32 %v2175
    %vm2182 = vweird.f32 %v2176
    %vm2183 = vmor %vm2181, %vm2182
    %v2184 = vsel %vm2183, %v2176, %v2180
    %v2185 = vand.u32 2147483647, %v2175
    %vm2186 = vcmp.eq.f32.partialorder %v2185, 8.507059e+37
    %v2187 = vand.u32 %v2175, 2147483648
    %v2188 = vor.u32 1.1754944e-38, %v2187
    %v2189 = vsel %vm2186, %v2188, %v2184
    %v2190 = vmul.f32 1.0, %v2189
    %s2191 = scalar_lea.vmem [#allocation5], 896
    %v2192 = vld [vmem:[%s2191] sm:$0xff]
    %v2193 = vld [vmem:[%s2191 + $0x8] sm:$0xff]
    %v2194 = vld [vmem:[%s2191 + $0x10] sm:$0xff]
    %v2195 = vld [vmem:[%s2191 + $0x18] sm:$0xff]
    %v2196 = vld [vmem:[%s2191 + $0x20] sm:$0xff]
    %v2197 = vld [vmem:[%s2191 + $0x28] sm:$0xff]
    %v2198 = vld [vmem:[%s2191 + $0x30] sm:$0xff]
    %v2199 = vld [vmem:[%s2191 + $0x38] sm:$0xff]
    %v2200 = vld [vmem:[%s2191 + $0x40] sm:$0xff]
    %v2201 = vld [vmem:[%s2191 + $0x48] sm:$0xff]
    %v2202 = vld [vmem:[%s2191 + $0x50] sm:$0xff]
    %v2203 = vld [vmem:[%s2191 + $0x58] sm:$0xff]
    %v2204 = vld [vmem:[%s2191 + $0x60] sm:$0xff]
    %v2205 = vld [vmem:[%s2191 + $0x68] sm:$0xff]
    %v2206 = vld [vmem:[%s2191 + $0x70] sm:$0xff]
    %v2207 = vld [vmem:[%s2191 + $0x78] sm:$0xff]
    %s2208 = scalar_lea.vmem [#allocation7], 7
    %v2209 = vld [vmem:[%s2208] sm:$0x1]
    %v2211 = vperm.slane %v2209, 0
    %2213 = vmatpush.msra.mxu0 %v2207
    %2214 = vmatpush.msra.mxu0 %v2206
    %2215 = vmatpush.msra.mxu0 %v2205
    %2216 = vmatpush.msra.mxu0 %v2204
    %2217 = vmatpush.msra.mxu0 %v2203
    %2218 = vmatpush.msra.mxu0 %v2202
    %2219 = vmatpush.msra.mxu0 %v2201
    %2220 = vmatpush.msra.mxu0 %v2200
    %2221 = vmatpush.msra.mxu0 %v2199
    %2222 = vmatpush.msra.mxu0 %v2198
    %2223 = vmatpush.msra.mxu0 %v2197
    %2224 = vmatpush.msra.mxu0 %v2196
    %2225 = vmatpush.msra.mxu0 %v2195
    %2226 = vmatpush.msra.mxu0 %v2194
    %2227 = vmatpush.msra.mxu0 %v2193
    %2228 = vmatpush.msra.mxu0 %v2192
    %2229 = vmatmul.f32.gmra.mxu0 %v2190
    %v2230 = vpop.f32.mrf.mxu0
    %v2231 = vadd.f32 %v2211, %v2230
    %2232 = vdwg.mxu0
    %v2233 = vxor.u32 %v2231, 2147483648
    %v2234 = vmul.f32 %v2233, 1.442695
    %v2235 = vpow.pop %v2234
    %v2236 = vadd.f32 %v2235, 1.0
    %v2237 = vrcp.pop %v2236
    %v2238 = vmul.f32 %v2236, %v2237
    %v2239 = vsub.f32 1.0, %v2238
    %v2240 = vmul.f32 %v2237, %v2239
    %v2241 = vadd.f32 %v2237, %v2240
    %vm2242 = vweird.f32 %v2236
    %vm2243 = vweird.f32 %v2237
    %vm2244 = vmor %vm2242, %vm2243
    %v2245 = vsel %vm2244, %v2237, %v2241
    %v2246 = vand.u32 2147483647, %v2236
    %vm2247 = vcmp.eq.f32.partialorder %v2246, 8.507059e+37
    %v2248 = vand.u32 %v2236, 2147483648
    %v2249 = vor.u32 1.1754944e-38, %v2248
    %v2250 = vsel %vm2247, %v2249, %v2245
    %v2251 = vmul.f32 1.0, %v2250
    %s2252 = scalar_lea.vmem [#allocation5], 1024
    %v2253 = vld [vmem:[%s2252] sm:$0xff]
    %v2254 = vld [vmem:[%s2252 + $0x8] sm:$0xff]
    %v2255 = vld [vmem:[%s2252 + $0x10] sm:$0xff]
    %v2256 = vld [vmem:[%s2252 + $0x18] sm:$0xff]
    %v2257 = vld [vmem:[%s2252 + $0x20] sm:$0xff]
    %v2258 = vld [vmem:[%s2252 + $0x28] sm:$0xff]
    %v2259 = vld [vmem:[%s2252 + $0x30] sm:$0xff]
    %v2260 = vld [vmem:[%s2252 + $0x38] sm:$0xff]
    %v2261 = vld [vmem:[%s2252 + $0x40] sm:$0xff]
    %v2262 = vld [vmem:[%s2252 + $0x48] sm:$0xff]
    %v2263 = vld [vmem:[%s2252 + $0x50] sm:$0xff]
    %v2264 = vld [vmem:[%s2252 + $0x58] sm:$0xff]
    %v2265 = vld [vmem:[%s2252 + $0x60] sm:$0xff]
    %v2266 = vld [vmem:[%s2252 + $0x68] sm:$0xff]
    %v2267 = vld [vmem:[%s2252 + $0x70] sm:$0xff]
    %v2268 = vld [vmem:[%s2252 + $0x78] sm:$0xff]
    %s2269 = scalar_lea.vmem [#allocation7], 8
    %v2270 = vld [vmem:[%s2269] sm:$0x1]
    %v2272 = vperm.slane %v2270, 0
    %2274 = vmatpush.msra.mxu0 %v2268
    %2275 = vmatpush.msra.mxu0 %v2267
    %2276 = vmatpush.msra.mxu0 %v2266
    %2277 = vmatpush.msra.mxu0 %v2265
    %2278 = vmatpush.msra.mxu0 %v2264
    %2279 = vmatpush.msra.mxu0 %v2263
    %2280 = vmatpush.msra.mxu0 %v2262
    %2281 = vmatpush.msra.mxu0 %v2261
    %2282 = vmatpush.msra.mxu0 %v2260
    %2283 = vmatpush.msra.mxu0 %v2259
    %2284 = vmatpush.msra.mxu0 %v2258
    %2285 = vmatpush.msra.mxu0 %v2257
    %2286 = vmatpush.msra.mxu0 %v2256
    %2287 = vmatpush.msra.mxu0 %v2255
    %2288 = vmatpush.msra.mxu0 %v2254
    %2289 = vmatpush.msra.mxu0 %v2253
    %2290 = vmatmul.f32.gmra.mxu0 %v2251
    %v2291 = vpop.f32.mrf.mxu0
    %v2292 = vadd.f32 %v2272, %v2291
    %2293 = vdwg.mxu0
    %2294 = vxpose.xlu0.b32.start [1/16] %v2292, 128
    %2295 = vxpose.xlu0.b32.cont [2/16] 0.0, 128
    %2296 = vxpose.xlu0.b32.cont [3/16] 0.0, 128
    %2297 = vxpose.xlu0.b32.cont [4/16] 0.0, 128
    %2298 = vxpose.xlu0.b32.cont [5/16] 0.0, 128
    %2299 = vxpose.xlu0.b32.cont [6/16] 0.0, 128
    %2300 = vxpose.xlu0.b32.cont [7/16] 0.0, 128
    %2301 = vxpose.xlu0.b32.cont [8/16] 0.0, 128
    %2302 = vxpose.xlu0.b32.cont [9/16] 0.0, 128
    %2303 = vxpose.xlu0.b32.cont [10/16] 0.0, 128
    %2304 = vxpose.xlu0.b32.cont [11/16] 0.0, 128
    %2305 = vxpose.xlu0.b32.cont [12/16] 0.0, 128
    %2306 = vxpose.xlu0.b32.cont [13/16] 0.0, 128
    %2307 = vxpose.xlu0.b32.cont [14/16] 0.0, 128
    %2308 = vxpose.xlu0.b32.cont [15/16] 0.0, 128
    %2309 = vxpose.xlu0.b32.end [16/16] 0.0, 128
    %v2310 = vpop.trf.xlu0
    %v2311 = vpop.trf.xlu0
    %v2312 = vpop.trf.xlu0
    %v2313 = vpop.trf.xlu0
    %v2314 = vpop.trf.xlu0
    %v2315 = vpop.trf.xlu0
    %v2316 = vpop.trf.xlu0
    %v2317 = vpop.trf.xlu0
    %v2318 = vpop.trf.xlu0
    %v2319 = vpop.trf.xlu0
    %v2320 = vpop.trf.xlu0
    %v2321 = vpop.trf.xlu0
    %v2322 = vpop.trf.xlu0
    %v2323 = vpop.trf.xlu0
    %v2324 = vpop.trf.xlu0
    %v2325 = vpop.trf.xlu0
    %s2326 = scalar_lea.vmem [#allocation5], 1152
    %v2327 = vld [vmem:[%s2326] sm:$0xff]
    %s2328 = scalar_lea.vmem [#allocation7], 9
    %v2329 = vld [vmem:[%s2328] sm:$0x1]
    %v2331 = vperm.slane %v2329, 0
    %v2334 = vsel %vm107, %v2310, 0
    %2336 = vmatpush.msra.mxu0 0.0
    %2337 = vmatpush.msra.mxu0 0.0
    %2338 = vmatpush.msra.mxu0 0.0
    %2339 = vmatpush.msra.mxu0 0.0
    %2340 = vmatpush.msra.mxu0 0.0
    %2341 = vmatpush.msra.mxu0 0.0
    %2342 = vmatpush.msra.mxu0 0.0
    %2343 = vmatpush.msra.mxu0 0.0
    %2344 = vmatpush.msra.mxu0 0.0
    %2345 = vmatpush.msra.mxu0 0.0
    %2346 = vmatpush.msra.mxu0 0.0
    %2347 = vmatpush.msra.mxu0 0.0
    %2348 = vmatpush.msra.mxu0 0.0
    %2349 = vmatpush.msra.mxu0 0.0
    %2350 = vmatpush.msra.mxu0 0.0
    %2351 = vmatpush.msra.mxu0 %v2327
    %2352 = vmatmul.f32.gmra.mxu0 %v2334
    %v2353 = vpop.f32.mrf.mxu0
    %v2354 = vadd.f32 %v2331, %v2353
    %2355 = vdwg.mxu0
    %v2356 = vxor.u32 %v2354, 2147483648
    %v2357 = vmul.f32 %v2356, 1.442695
    %v2358 = vpow.pop %v2357
    %v2359 = vadd.f32 %v2358, 1.0
    %v2360 = vrcp.pop %v2359
    %v2361 = vmul.f32 %v2359, %v2360
    %v2362 = vsub.f32 1.0, %v2361
    %v2363 = vmul.f32 %v2360, %v2362
    %v2364 = vadd.f32 %v2360, %v2363
    %vm2365 = vweird.f32 %v2359
    %vm2366 = vweird.f32 %v2360
    %vm2367 = vmor %vm2365, %vm2366
    %v2368 = vsel %vm2367, %v2360, %v2364
    %v2369 = vand.u32 2147483647, %v2359
    %vm2370 = vcmp.eq.f32.partialorder %v2369, 8.507059e+37
    %v2371 = vand.u32 %v2359, 2147483648
    %v2372 = vor.u32 1.1754944e-38, %v2371
    %v2373 = vsel %vm2370, %v2372, %v2368
    %v2374 = vmul.f32 1.0, %v2373
    %s2375 = scalar_lea.vmem [#allocation5], 1280
    %v2376 = vld [vmem:[%s2375] sm:$0xff]
    %v2377 = vld [vmem:[%s2375 + $0x8] sm:$0xff]
    %v2378 = vld [vmem:[%s2375 + $0x10] sm:$0xff]
    %v2379 = vld [vmem:[%s2375 + $0x18] sm:$0xff]
    %v2380 = vld [vmem:[%s2375 + $0x20] sm:$0xff]
    %v2381 = vld [vmem:[%s2375 + $0x28] sm:$0xff]
    %v2382 = vld [vmem:[%s2375 + $0x30] sm:$0xff]
    %v2383 = vld [vmem:[%s2375 + $0x38] sm:$0xff]
    %v2384 = vld [vmem:[%s2375 + $0x40] sm:$0xff]
    %v2385 = vld [vmem:[%s2375 + $0x48] sm:$0xff]
    %v2386 = vld [vmem:[%s2375 + $0x50] sm:$0xff]
    %v2387 = vld [vmem:[%s2375 + $0x58] sm:$0xff]
    %v2388 = vld [vmem:[%s2375 + $0x60] sm:$0xff]
    %v2389 = vld [vmem:[%s2375 + $0x68] sm:$0xff]
    %v2390 = vld [vmem:[%s2375 + $0x70] sm:$0xff]
    %v2391 = vld [vmem:[%s2375 + $0x78] sm:$0xff]
    %s2392 = scalar_lea.vmem [#allocation7], 10
    %v2393 = vld [vmem:[%s2392] sm:$0x1]
    %v2395 = vperm.slane %v2393, 0
    %2397 = vmatpush.msra.mxu0 %v2391
    %2398 = vmatpush.msra.mxu0 %v2390
    %2399 = vmatpush.msra.mxu0 %v2389
    %2400 = vmatpush.msra.mxu0 %v2388
    %2401 = vmatpush.msra.mxu0 %v2387
    %2402 = vmatpush.msra.mxu0 %v2386
    %2403 = vmatpush.msra.mxu0 %v2385
    %2404 = vmatpush.msra.mxu0 %v2384
    %2405 = vmatpush.msra.mxu0 %v2383
    %2406 = vmatpush.msra.mxu0 %v2382
    %2407 = vmatpush.msra.mxu0 %v2381
    %2408 = vmatpush.msra.mxu0 %v2380
    %2409 = vmatpush.msra.mxu0 %v2379
    %2410 = vmatpush.msra.mxu0 %v2378
    %2411 = vmatpush.msra.mxu0 %v2377
    %2412 = vmatpush.msra.mxu0 %v2376
    %2413 = vmatmul.f32.gmra.mxu0 %v2374
    %v2414 = vpop.f32.mrf.mxu0
    %v2415 = vadd.f32 %v2395, %v2414
    %2416 = vdwg.mxu0
    %v2417 = vmul.f32 %v2108, %v2415
    %v2418 = vmul.f32 %v1956, 1.442695
    %v2419 = vpow.pop %v2418
    %v2420 = vmul.f32 %v99, %v2419
    %v2421 = vadd.f32 %v2417, %v2420
    %2422 = vst [vmem:[#allocation11] sm:$0xff] %v254
    %s2423 = scalar_lea.vmem [#allocation11], 8
    %2424 = vst [vmem:[%s2423] sm:$0xff] %v2421
    %v2425 = vmul.f32 %v254, %v254
    %v2426 = vmul.f32 %v2421, %v2421
    %v2427 = vadd.f32 %v2425, %v2426
    %2428 = vadd.xlane.f32.xlu0 %v2427
    %v2429 = vpop.xlane.xlu0 %2428
    %v2430 = vmul.f32 %v2429, -0.5
    %v2431 = vsub.f32 %v2430, 14.703016
    %2432 = vadd.xlane.f32.xlu0 %v1956
    %v2433 = vpop.xlane.xlu0 %2432
    %v2434 = vlaneseq
    %v2435 = vand.u32 %v2434, 127
    %vm2436 = vcmp.eq.s32.totalorder %v2435, 0
    %vm2437 = vcmp.eq.s32.totalorder %v2435, 1
    %v2438 = vsel %vm2437, %v2433, 0.0
    %v2439 = vsel %vm2436, %v2431, %v2438
    %s2440 = scalar_lea.vmem [#allocation11], 16
    %2441 = vst [vmem:[%s2440] sm:$0xff] %v2439
    // Predicated region
    $region42: #{tpu_custom_call.1} parent=1 // pred_check
      _
    $region43: #{tpu_custom_call.1} parent=1 // pred_check_branch
      %2443 = sbr.rel (0) target = $region45
    $region44: #{tpu_custom_call.1} parent=1 // pred_region
      %2445 = vsyncadd [#allocation4], 0
      %s2446 = sshll.u32 [#allocation11], 4
      %s2447 = int_to_ptr.vmem [resolvable:$true] %s2446
      %s2448 = sshll.u32 %s5, 4
      %s2449 = int_to_ptr.hbm [resolvable:$true] %s2448
      %2454 = dma.vmem_to_hbm [thread:$0]  %s2447, 384, %s2449, [#allocation4], 128, 128, 8
    $region45: #{tpu_custom_call.1} parent=1 // pred_fallthru
      _
    // Predicated region
    $region46: #{tpu_custom_call.1} parent=1 // pred_check
      _
    $region47: #{tpu_custom_call.1} parent=1 // pred_check_branch
      %2456 = sbr.rel (0) target = $region49
    $region48: #{tpu_custom_call.1} parent=1 // pred_region
      %2458 = dma.done [#allocation4], 384
    $region49: #{tpu_custom_call.1} parent=1 // pred_fallthru
      _
    %2459 = vsyncpa [#allocation3], 1
    %2460 = vsyncpa [#allocation6], 1
    %2461 = vsyncpa [#allocation9], 1
    %2462 = vsyncpa [#allocation4], 1

</llo_original>
